<compile_context>
chip_gen: v6e
topology: v6e:2x2x1
jax: 0.10.0
libtpu: 0.0.40
codegen_flags: <defaults>
</compile_context>

<pallas_src>
import functools
import math

import jax
import jax.numpy as jnp
from jax import lax
from jax.experimental import pallas as pl
from jax.experimental.pallas import tpu as pltpu  # noqa: F401  (TPU backend)


# ---------------------------------------------------------------------------
# Model hyper-parameters (small synthetic Longformer)
# ---------------------------------------------------------------------------
VOCAB = 100
HIDDEN = 32
N_HEADS = 4
HEAD_DIM = HIDDEN // N_HEADS
INTERMEDIATE = 64
N_LAYERS = 2
MAX_POS = 64
WINDOW = 4          # local attention window (attend to |i-j| <= WINDOW//2)
PAD_IDX = 1         # roberta/longformer padding token id
LN_EPS = 1e-5

_ATTN_SCALE = 1.0 / math.sqrt(HEAD_DIM)
_GELU_C = math.sqrt(2.0 / math.pi)
_LANE = 128
# vector pack layout: [emb_ln_g, emb_ln_b,
#                      per layer: o_b, ln1_g, ln1_b, fc2_b, ln2_g, ln2_b,
#                      cls_dense_b, cls_out_b(broadcast)]
_NUM_VECS = 2 + 6 * N_LAYERS + 2


# ---------------------------------------------------------------------------
# In-kernel helpers (all f32)
# ---------------------------------------------------------------------------
def _layer_norm(x, g, b):
    mu = jnp.mean(x, axis=-1, keepdims=True)
    var = jnp.mean((x - mu) ** 2, axis=-1, keepdims=True)
    return (x - mu) * lax.rsqrt(var + LN_EPS) * g + b


def _gelu(x):
    # tanh-approx GELU (EUP tanh).  Exact-HF erf form:
    #   0.5 * x * (1 + erf(x / sqrt(2)))
    return 0.5 * x * (1.0 + jnp.tanh(_GELU_C * (x + 0.044715 * x * x * x)))


# ---------------------------------------------------------------------------
# Fused forward kernel (single pallas_call for the whole model)
# ---------------------------------------------------------------------------
def _fused_forward_kernel(
    emb_ref,            # (B*S, H)            f32  summed embeddings (pre-LN)
    mask_ref,           # (B*nH*S, B*nH*S)    f32  block-diagonal additive mask
    cls_sel_ref,        # (8, B*S)            f32  one-hot CLS row selector
    qkv_w_ref,          # (L*3*nH, H, dh)     bf16 (scale folded into Q)
    qkv_b_ref,          # (L*3, B*nH*S, dh)   f32  (pre-broadcast, stacked order)
    o_w_ref,            # (L*nH, dh, H)       bf16
    fc1_w_ref,          # (L, H, I)           bf16
    fc1_b_ref,          # (L, 1, I)           f32
    fc2_w_ref,          # (L, I, H)           bf16
    vecs_ref,           # (_NUM_VECS, H)      f32  all (1,H) vectors packed
    cls_dense_w_ref,    # (H, H)              bf16
    cls_out_w_ref,      # (H, 128)            bf16 (col 0 real, rest zero)
    logits_ref,         # (8, 128)            f32  output (lane-dense)
    *, batch, seq,
):
    n_rows = batch * seq

    def vec(i):                       # (1, H) row from the vector pack
        return vecs_ref[i:i + 1, :]

    # --- embeddings LayerNorm ---
    h = _layer_norm(emb_ref[...], vec(0), vec(1))

    # --- encoder layers (static unroll; everything stays in VMEM/vregs) ---
    # TODO(synk): Longformer uses separate query/key/value_global projections
    #             for globally-attending tokens (CLS); the same Q/K/V weights
    #             are reused here (mask-equivalent attention pattern otherwise).
    for l in range(N_LAYERS):
        vbase = 2 + 6 * l
        wbase = l * 3 * N_HEADS
        x = h                                            # (B*S, H) f32 residual
        xb = x.astype(jnp.bfloat16)

        # Per-head QKV dots on the full activation, stacked along sublanes to
        # (nH*B*S, dh) in (head, batch, seq) order.
        q_parts, k_parts, v_parts = [], [], []
        for hh in range(N_HEADS):
            q_parts.append(jnp.dot(xb, qkv_w_ref[wbase + hh],
                                   preferred_element_type=jnp.float32))
            k_parts.append(jnp.dot(xb, qkv_w_ref[wbase + N_HEADS + hh],
                                   preferred_element_type=jnp.float32))
            v_parts.append(jnp.dot(xb, qkv_w_ref[wbase + 2 * N_HEADS + hh],
                                   preferred_element_type=jnp.float32))
        q = jnp.concatenate(q_parts, axis=0) + qkv_b_ref[l * 3 + 0]   # (nH*B*S, dh)
        k = jnp.concatenate(k_parts, axis=0) + qkv_b_ref[l * 3 + 1]
        v = jnp.concatenate(v_parts, axis=0) + qkv_b_ref[l * 3 + 2]

        # ONE block-diagonal scores dot + ONE ctx dot for all (batch, head).
        s = lax.dot_general(q.astype(jnp.bfloat16), k.astype(jnp.bfloat16),
                            (((1,), (1,)), ((), ())),
                            preferred_element_type=jnp.float32)        # (BD, BD)
        s = s + mask_ref[...]
        s = s - jnp.max(s, axis=-1, keepdims=True)
        p = jnp.exp(s)
        p = p / jnp.sum(p, axis=-1, keepdims=True)        # exact softmax norm
        ctx = jnp.dot(p.astype(jnp.bfloat16), v.astype(jnp.bfloat16),
                      preferred_element_type=jnp.float32)               # (BD, dh)

        # Output projection decomposed per head (sublane-aligned slices only).
        attn = vec(vbase + 0)                                           # o_b
        for hh in range(N_HEADS):
            ctx_h = ctx[hh * n_rows:(hh + 1) * n_rows, :].astype(jnp.bfloat16)
            attn = attn + jnp.dot(ctx_h, o_w_ref[l * N_HEADS + hh],
                                  preferred_element_type=jnp.float32)

        # fused residual + LayerNorm
        h = _layer_norm(attn + x, vec(vbase + 1), vec(vbase + 2))

        # FFN (GELU fused) + residual + LayerNorm
        ff = _gelu(jnp.dot(h.astype(jnp.bfloat16), fc1_w_ref[l],
                           preferred_element_type=jnp.float32) + fc1_b_ref[l])
        ff = (jnp.dot(ff.astype(jnp.bfloat16), fc2_w_ref[l],
                      preferred_element_type=jnp.float32) + vec(vbase + 3))
        h = _layer_norm(ff + h, vec(vbase + 4), vec(vbase + 5))

    # --- classification head on the CLS token (selection matmul -> full-block
    #     lane-dense stores) ---
    pooled = jnp.dot(cls_sel_ref[...], h, preferred_element_type=jnp.float32)   # (8, H)
    pooled = jnp.tanh(jnp.dot(pooled.astype(jnp.bfloat16), cls_dense_w_ref[...],
                              preferred_element_type=jnp.float32)
                      + vec(2 + 6 * N_LAYERS))
    logits = (jnp.dot(pooled.astype(jnp.bfloat16), cls_out_w_ref[...],
                      preferred_element_type=jnp.float32)
              + vec(3 + 6 * N_LAYERS)[:, :1])                                    # (8, 128)
    logits_ref[...] = logits


# ---------------------------------------------------------------------------
# Parameter init (deterministic, synthetic — no checkpoint loading)
# ---------------------------------------------------------------------------
def init_params(key):
    def nrm(key, shape, scale=0.02):
        return scale * jax.random.normal(key, shape, dtype=jnp.float32)

    keys = iter(jax.random.split(key, 256))
    p = {
        "word_emb": nrm(next(keys), (VOCAB, HIDDEN)),
        "pos_emb": nrm(next(keys), (MAX_POS, HIDDEN)),
        "tok_emb": nrm(next(keys), (2, HIDDEN)),
        "emb_ln_g": jnp.ones((HIDDEN,), jnp.float32),
        "emb_ln_b": jnp.zeros((HIDDEN,), jnp.float32),
        "layers": [],
        "cls_dense_w": nrm(next(keys), (HIDDEN, HIDDEN)),
        "cls_dense_b": jnp.zeros((HIDDEN,), jnp.float32),
        "cls_out_w": nrm(next(keys), (HIDDEN, 1)),
        "cls_out_b": jnp.zeros((1,), jnp.float32),
    }
    for _ in range(N_LAYERS):
        p["layers"].append({
            "q_w": nrm(next(keys), (HIDDEN, HIDDEN)),
            "q_b": jnp.zeros((HIDDEN,), jnp.float32),
            "k_w": nrm(next(keys), (HIDDEN, HIDDEN)),
            "k_b": jnp.zeros((HIDDEN,), jnp.float32),
            "v_w": nrm(next(keys), (HIDDEN, HIDDEN)),
            "v_b": jnp.zeros((HIDDEN,), jnp.float32),
            "o_w": nrm(next(keys), (HIDDEN, HIDDEN)),
            "o_b": jnp.zeros((HIDDEN,), jnp.float32),
            "ln1_g": jnp.ones((HIDDEN,), jnp.float32),
            "ln1_b": jnp.zeros((HIDDEN,), jnp.float32),
            "fc1_w": nrm(next(keys), (HIDDEN, INTERMEDIATE)),
            "fc1_b": jnp.zeros((INTERMEDIATE,), jnp.float32),
            "fc2_w": nrm(next(keys), (INTERMEDIATE, HIDDEN)),
            "fc2_b": jnp.zeros((HIDDEN,), jnp.float32),
            "ln2_g": jnp.ones((HIDDEN,), jnp.float32),
            "ln2_b": jnp.zeros((HIDDEN,), jnp.float32),
        })
    return p


def _pack_params(params, n_rows):
    """Stack / consolidate weights into 12 kernel operands (host glue).

    n_rows = B*S (needed to pre-broadcast Q/K/V biases to the stacked layout).
    MXU-operand weights are cast to bf16; additive biases / LN params stay f32.
    The 1/sqrt(head_dim) attention scale is folded into the Q weights & bias.
    """
    qkv_w, qkv_b, o_w = [], [], []
    fc1_w, fc1_b, fc2_w = [], [], []
    vecs = [params["emb_ln_g"], params["emb_ln_b"]]
    for lp in params["layers"]:
        for name, scale in (("q", _ATTN_SCALE), ("k", 1.0), ("v", 1.0)):
            w = ((lp[name + "_w"] * scale)
                 .reshape(HIDDEN, N_HEADS, HEAD_DIM).transpose(1, 0, 2))
            qkv_w.append(w)                                   # (nH, H, dh)
            b = (lp[name + "_b"] * scale).reshape(N_HEADS, 1, HEAD_DIM)
            qkv_b.append(jnp.broadcast_to(b, (N_HEADS, n_rows, HEAD_DIM))
                         .reshape(N_HEADS * n_rows, HEAD_DIM))
        o_w.append(lp["o_w"].reshape(N_HEADS, HEAD_DIM, HIDDEN))
        vecs += [lp["o_b"], lp["ln1_g"], lp["ln1_b"],
                 lp["fc2_b"], lp["ln2_g"], lp["ln2_b"]]
        fc1_w.append(lp["fc1_w"])
        fc1_b.append(lp["fc1_b"].reshape(1, INTERMEDIATE))
        fc2_w.append(lp["fc2_w"])
    vecs += [params["cls_dense_b"],
             jnp.broadcast_to(params["cls_out_b"], (HIDDEN,))]
    cls_out_w = (jnp.zeros((HIDDEN, _LANE), jnp.float32)
                 .at[:, 0].set(params["cls_out_w"][:, 0]))
    return {
        "qkv_w": jnp.concatenate(qkv_w, axis=0).astype(jnp.bfloat16),  # (L*3*nH,H,dh)
        "qkv_b": jnp.stack(qkv_b, axis=0),                             # (L*3,nH*n_rows,dh)
        "o_w": jnp.concatenate(o_w, axis=0).astype(jnp.bfloat16),      # (L*nH,dh,H)
        "fc1_w": jnp.stack(fc1_w).astype(jnp.bfloat16),                # (L,H,I)
        "fc1_b": jnp.stack(fc1_b),                                     # (L,1,I)
        "fc2_w": jnp.stack(fc2_w).astype(jnp.bfloat16),                # (L,I,H)
        "vecs": jnp.stack(vecs),                                       # (_NUM_VECS,H)
        "cls_dense_w": params["cls_dense_w"].astype(jnp.bfloat16),     # (H,H)
        "cls_out_w": cls_out_w.astype(jnp.bfloat16),                   # (H,128)
    }


# ---------------------------------------------------------------------------
# Forward pass: embedding gathers + mask build in JAX glue, everything else in
# a single fused Pallas kernel.
# ---------------------------------------------------------------------------
def custom_lf_forward(params, input_ids, attention_mask):
    B, S = input_ids.shape

    # --- embeddings (gathers are glue) ---
    valid = (input_ids != PAD_IDX).astype(jnp.int32)
    position_ids = jnp.cumsum(valid, axis=1) * valid + PAD_IDX    # roberta-style
    emb = (params["word_emb"][input_ids]
           + params["pos_emb"][position_ids]
           + params["tok_emb"][0][None, None, :])                 # broadcast type-0
    emb = emb.reshape(B * S, HIDDEN).astype(jnp.float32)

    # --- block-diagonal additive mask over (head, batch) blocks:
    #     sliding window + global attention on CLS inside each block,
    #     -1e9 everywhere across blocks (cross terms underflow to 0 in softmax).
    am = attention_mask.astype(jnp.float32)                       # (B, S)
    ii = jnp.arange(S)[:, None]
    jj = jnp.arange(S)[None, :]
    local = jnp.abs(ii - jj) <= (WINDOW // 2)
    glob = (ii == 0) | (jj == 0)
    allowed = ((local | glob)[None, :, :]
               & (am[:, None, :] > 0) & (am[:, :, None] > 0))     # (B, S, S)
    blocks = jnp.tile(allowed, (N_HEADS, 1, 1))                   # (nH*B, S, S)
    nb = N_HEADS * B
    eye = jnp.eye(nb, dtype=bool)
    bd = eye[:, :, None, None] & blocks[:, None, :, :]            # (nb, nb, S, S)
    bd = bd.transpose(0, 2, 1, 3).reshape(nb * S, nb * S)
    add_mask = jnp.where(bd, 0.0, -1e9).astype(jnp.float32)       # (B*nH*S, B*nH*S)

    # CLS-row selector padded to 8 sublanes: pooled = sel @ h (full-block store;
    # extra rows select nothing and are sliced off below).
    pool_rows = max(8, ((B + 7) // 8) * 8)
    cls_sel = jax.nn.one_hot(jnp.arange(pool_rows) * S, B * S, dtype=jnp.float32)

    packed = _pack_params(params, B * S)

    kernel = functools.partial(_fused_forward_kernel, batch=B, seq=S)
    logits_pad = pl.pallas_call(
        kernel,
        out_shape=jax.ShapeDtypeStruct((pool_rows, _LANE), jnp.float32),
    )(
        emb, add_mask, cls_sel,
        packed["qkv_w"], packed["qkv_b"], packed["o_w"],
        packed["fc1_w"], packed["fc1_b"], packed["fc2_w"],
        packed["vecs"], packed["cls_dense_w"], packed["cls_out_w"],
    )
    return logits_pad[:B, :1]


# ---------------------------------------------------------------------------
if __name__ == "__main__":
    key = jax.random.PRNGKey(0)
    pkey, dkey = jax.random.split(key)

    params = init_params(pkey)

    B, S = 2, 8
    input_ids = jax.random.randint(dkey, (B, S), 2, VOCAB, dtype=jnp.int32)
    # last two tokens of second example are padding
    input_ids = input_ids.at[1, -2:].set(PAD_IDX)
    attention_mask = (input_ids != PAD_IDX).astype(jnp.int32)

    fwd = jax.jit(custom_lf_forward)
    logits = fwd(params, input_ids, attention_mask)
    logits = jax.block_until_ready(logits)
    assert logits.shape == (B, 1) and logits.dtype == jnp.float32
    print("KERNEL_OK")
</pallas_src>

<mosaic_0001>
module attributes {stable_mosaic.version = 11 : i64} {
  func.func @_fused_forward_kernel(%arg0: memref<16x32xf32, #tpu.memory_space<vmem>>, %arg1: memref<64x64xf32, #tpu.memory_space<vmem>>, %arg2: memref<8x16xf32, #tpu.memory_space<vmem>>, %arg3: memref<24x32x8xbf16, #tpu.memory_space<vmem>>, %arg4: memref<6x64x8xf32, #tpu.memory_space<vmem>>, %arg5: memref<8x8x32xbf16, #tpu.memory_space<vmem>>, %arg6: memref<2x32x64xbf16, #tpu.memory_space<vmem>>, %arg7: memref<2x1x64xf32, #tpu.memory_space<vmem>>, %arg8: memref<2x64x32xbf16, #tpu.memory_space<vmem>>, %arg9: memref<16x32xf32, #tpu.memory_space<vmem>>, %arg10: memref<32x32xbf16, #tpu.memory_space<vmem>>, %arg11: memref<32x128xbf16, #tpu.memory_space<vmem>>, %arg12: memref<8x128xf32, #tpu.memory_space<vmem>>) attributes {dimension_semantics = [], scalar_prefetch = 0 : i64, scratch_operands = 0 : i64, tpu.core_type = #tpu.core_type<tc>} {
    %c0 = arith.constant 0 : index
    %c0_0 = arith.constant 0 : index
    %0 = vector.load %arg0[%c0, %c0_0] : memref<16x32xf32, #tpu.memory_space<vmem>>, vector<16x32xf32>
    %c0_1 = arith.constant 0 : index
    %c0_2 = arith.constant 0 : index
    %1 = vector.load %arg9[%c0_1, %c0_2] : memref<16x32xf32, #tpu.memory_space<vmem>>, vector<1x32xf32>
    %c1 = arith.constant 1 : index
    %c0_3 = arith.constant 0 : index
    %2 = vector.load %arg9[%c1, %c0_3] : memref<16x32xf32, #tpu.memory_space<vmem>>, vector<1x32xf32>
    %cst = arith.constant dense<0.000000e+00> : vector<16xf32>
    %3 = vector.multi_reduction <add>, %0, %cst [1] : vector<16x32xf32> to vector<16xf32>
    %4 = vector.shape_cast %3 : vector<16xf32> to vector<16x1xf32>
    %cst_4 = arith.constant 3.200000e+01 : f32
    %5 = vector.broadcast %cst_4 : f32 to vector<16x1xf32>
    %6 = arith.divf %4, %5 : vector<16x1xf32>
    %7 = vector.broadcast %6 : vector<16x1xf32> to vector<16x32xf32>
    %8 = arith.subf %0, %7 : vector<16x32xf32>
    %9 = arith.mulf %8, %8 : vector<16x32xf32>
    %cst_5 = arith.constant dense<0.000000e+00> : vector<16xf32>
    %10 = vector.multi_reduction <add>, %9, %cst_5 [1] : vector<16x32xf32> to vector<16xf32>
    %11 = vector.shape_cast %10 : vector<16xf32> to vector<16x1xf32>
    %cst_6 = arith.constant 3.200000e+01 : f32
    %12 = vector.broadcast %cst_6 : f32 to vector<16x1xf32>
    %13 = arith.divf %11, %12 : vector<16x1xf32>
    %14 = vector.broadcast %6 : vector<16x1xf32> to vector<16x32xf32>
    %15 = arith.subf %0, %14 : vector<16x32xf32>
    %cst_7 = arith.constant 9.99999974E-6 : f32
    %16 = vector.broadcast %cst_7 : f32 to vector<16x1xf32>
    %17 = arith.addf %13, %16 : vector<16x1xf32>
    %18 = math.rsqrt %17 : vector<16x1xf32>
    %19 = vector.broadcast %18 : vector<16x1xf32> to vector<16x32xf32>
    %20 = arith.mulf %15, %19 : vector<16x32xf32>
    %21 = vector.broadcast %1 : vector<1x32xf32> to vector<16x32xf32>
    %22 = arith.mulf %20, %21 : vector<16x32xf32>
    %23 = vector.broadcast %2 : vector<1x32xf32> to vector<16x32xf32>
    %24 = arith.addf %22, %23 : vector<16x32xf32>
    %25 = arith.truncf %24 : vector<16x32xf32> to vector<16x32xbf16>
    %c0_8 = arith.constant 0 : index
    %c0_9 = arith.constant 0 : index
    %c0_10 = arith.constant 0 : index
    %26 = vector.load %arg3[%c0_8, %c0_9, %c0_10] : memref<24x32x8xbf16, #tpu.memory_space<vmem>>, vector<1x32x8xbf16>
    %27 = vector.shape_cast %26 : vector<1x32x8xbf16> to vector<32x8xbf16>
    %cst_11 = arith.constant dense<0.000000e+00> : vector<16x8xf32>
    %28 = tpu.matmul %25, %27, %cst_11 {dimension_numbers = #tpu.dot_dimension_numbers<[1], [0], [0], [1], [0, 0, 1, 1], [], []>} : vector<16x32xbf16>, vector<32x8xbf16>, vector<16x8xf32> -> vector<16x8xf32>
    %c4 = arith.constant 4 : index
    %c0_12 = arith.constant 0 : index
    %c0_13 = arith.constant 0 : index
    %29 = vector.load %arg3[%c4, %c0_12, %c0_13] : memref<24x32x8xbf16, #tpu.memory_space<vmem>>, vector<1x32x8xbf16>
    %30 = vector.shape_cast %29 : vector<1x32x8xbf16> to vector<32x8xbf16>
    %cst_14 = arith.constant dense<0.000000e+00> : vector<16x8xf32>
    %31 = tpu.matmul %25, %30, %cst_14 {dimension_numbers = #tpu.dot_dimension_numbers<[1], [0], [0], [1], [0, 0, 1, 1], [], []>} : vector<16x32xbf16>, vector<32x8xbf16>, vector<16x8xf32> -> vector<16x8xf32>
    %c8 = arith.constant 8 : index
    %c0_15 = arith.constant 0 : index
    %c0_16 = arith.constant 0 : index
    %32 = vector.load %arg3[%c8, %c0_15, %c0_16] : memref<24x32x8xbf16, #tpu.memory_space<vmem>>, vector<1x32x8xbf16>
    %33 = vector.shape_cast %32 : vector<1x32x8xbf16> to vector<32x8xbf16>
    %cst_17 = arith.constant dense<0.000000e+00> : vector<16x8xf32>
    %34 = tpu.matmul %25, %33, %cst_17 {dimension_numbers = #tpu.dot_dimension_numbers<[1], [0], [0], [1], [0, 0, 1, 1], [], []>} : vector<16x32xbf16>, vector<32x8xbf16>, vector<16x8xf32> -> vector<16x8xf32>
    %c1_18 = arith.constant 1 : index
    %c0_19 = arith.constant 0 : index
    %c0_20 = arith.constant 0 : index
    %35 = vector.load %arg3[%c1_18, %c0_19, %c0_20] : memref<24x32x8xbf16, #tpu.memory_space<vmem>>, vector<1x32x8xbf16>
    %36 = vector.shape_cast %35 : vector<1x32x8xbf16> to vector<32x8xbf16>
    %cst_21 = arith.constant dense<0.000000e+00> : vector<16x8xf32>
    %37 = tpu.matmul %25, %36, %cst_21 {dimension_numbers = #tpu.dot_dimension_numbers<[1], [0], [0], [1], [0, 0, 1, 1], [], []>} : vector<16x32xbf16>, vector<32x8xbf16>, vector<16x8xf32> -> vector<16x8xf32>
    %c5 = arith.constant 5 : index
    %c0_22 = arith.constant 0 : index
    %c0_23 = arith.constant 0 : index
    %38 = vector.load %arg3[%c5, %c0_22, %c0_23] : memref<24x32x8xbf16, #tpu.memory_space<vmem>>, vector<1x32x8xbf16>
    %39 = vector.shape_cast %38 : vector<1x32x8xbf16> to vector<32x8xbf16>
    %cst_24 = arith.constant dense<0.000000e+00> : vector<16x8xf32>
    %40 = tpu.matmul %25, %39, %cst_24 {dimension_numbers = #tpu.dot_dimension_numbers<[1], [0], [0], [1], [0, 0, 1, 1], [], []>} : vector<16x32xbf16>, vector<32x8xbf16>, vector<16x8xf32> -> vector<16x8xf32>
    %c9 = arith.constant 9 : index
    %c0_25 = arith.constant 0 : index
    %c0_26 = arith.constant 0 : index
    %41 = vector.load %arg3[%c9, %c0_25, %c0_26] : memref<24x32x8xbf16, #tpu.memory_space<vmem>>, vector<1x32x8xbf16>
    %42 = vector.shape_cast %41 : vector<1x32x8xbf16> to vector<32x8xbf16>
    %cst_27 = arith.constant dense<0.000000e+00> : vector<16x8xf32>
    %43 = tpu.matmul %25, %42, %cst_27 {dimension_numbers = #tpu.dot_dimension_numbers<[1], [0], [0], [1], [0, 0, 1, 1], [], []>} : vector<16x32xbf16>, vector<32x8xbf16>, vector<16x8xf32> -> vector<16x8xf32>
    %c2 = arith.constant 2 : index
    %c0_28 = arith.constant 0 : index
    %c0_29 = arith.constant 0 : index
    %44 = vector.load %arg3[%c2, %c0_28, %c0_29] : memref<24x32x8xbf16, #tpu.memory_space<vmem>>, vector<1x32x8xbf16>
    %45 = vector.shape_cast %44 : vector<1x32x8xbf16> to vector<32x8xbf16>
    %cst_30 = arith.constant dense<0.000000e+00> : vector<16x8xf32>
    %46 = tpu.matmul %25, %45, %cst_30 {dimension_numbers = #tpu.dot_dimension_numbers<[1], [0], [0], [1], [0, 0, 1, 1], [], []>} : vector<16x32xbf16>, vector<32x8xbf16>, vector<16x8xf32> -> vector<16x8xf32>
    %c6 = arith.constant 6 : index
    %c0_31 = arith.constant 0 : index
    %c0_32 = arith.constant 0 : index
    %47 = vector.load %arg3[%c6, %c0_31, %c0_32] : memref<24x32x8xbf16, #tpu.memory_space<vmem>>, vector<1x32x8xbf16>
    %48 = vector.shape_cast %47 : vector<1x32x8xbf16> to vector<32x8xbf16>
    %cst_33 = arith.constant dense<0.000000e+00> : vector<16x8xf32>
    %49 = tpu.matmul %25, %48, %cst_33 {dimension_numbers = #tpu.dot_dimension_numbers<[1], [0], [0], [1], [0, 0, 1, 1], [], []>} : vector<16x32xbf16>, vector<32x8xbf16>, vector<16x8xf32> -> vector<16x8xf32>
    %c10 = arith.constant 10 : index
    %c0_34 = arith.constant 0 : index
    %c0_35 = arith.constant 0 : index
    %50 = vector.load %arg3[%c10, %c0_34, %c0_35] : memref<24x32x8xbf16, #tpu.memory_space<vmem>>, vector<1x32x8xbf16>
    %51 = vector.shape_cast %50 : vector<1x32x8xbf16> to vector<32x8xbf16>
    %cst_36 = arith.constant dense<0.000000e+00> : vector<16x8xf32>
    %52 = tpu.matmul %25, %51, %cst_36 {dimension_numbers = #tpu.dot_dimension_numbers<[1], [0], [0], [1], [0, 0, 1, 1], [], []>} : vector<16x32xbf16>, vector<32x8xbf16>, vector<16x8xf32> -> vector<16x8xf32>
    %c3 = arith.constant 3 : index
    %c0_37 = arith.constant 0 : index
    %c0_38 = arith.constant 0 : index
    %53 = vector.load %arg3[%c3, %c0_37, %c0_38] : memref<24x32x8xbf16, #tpu.memory_space<vmem>>, vector<1x32x8xbf16>
    %54 = vector.shape_cast %53 : vector<1x32x8xbf16> to vector<32x8xbf16>
    %cst_39 = arith.constant dense<0.000000e+00> : vector<16x8xf32>
    %55 = tpu.matmul %25, %54, %cst_39 {dimension_numbers = #tpu.dot_dimension_numbers<[1], [0], [0], [1], [0, 0, 1, 1], [], []>} : vector<16x32xbf16>, vector<32x8xbf16>, vector<16x8xf32> -> vector<16x8xf32>
    %c7 = arith.constant 7 : index
    %c0_40 = arith.constant 0 : index
    %c0_41 = arith.constant 0 : index
    %56 = vector.load %arg3[%c7, %c0_40, %c0_41] : memref<24x32x8xbf16, #tpu.memory_space<vmem>>, vector<1x32x8xbf16>
    %57 = vector.shape_cast %56 : vector<1x32x8xbf16> to vector<32x8xbf16>
    %cst_42 = arith.constant dense<0.000000e+00> : vector<16x8xf32>
    %58 = tpu.matmul %25, %57, %cst_42 {dimension_numbers = #tpu.dot_dimension_numbers<[1], [0], [0], [1], [0, 0, 1, 1], [], []>} : vector<16x32xbf16>, vector<32x8xbf16>, vector<16x8xf32> -> vector<16x8xf32>
    %c11 = arith.constant 11 : index
    %c0_43 = arith.constant 0 : index
    %c0_44 = arith.constant 0 : index
    %59 = vector.load %arg3[%c11, %c0_43, %c0_44] : memref<24x32x8xbf16, #tpu.memory_space<vmem>>, vector<1x32x8xbf16>
    %60 = vector.shape_cast %59 : vector<1x32x8xbf16> to vector<32x8xbf16>
    %cst_45 = arith.constant dense<0.000000e+00> : vector<16x8xf32>
    %61 = tpu.matmul %25, %60, %cst_45 {dimension_numbers = #tpu.dot_dimension_numbers<[1], [0], [0], [1], [0, 0, 1, 1], [], []>} : vector<16x32xbf16>, vector<32x8xbf16>, vector<16x8xf32> -> vector<16x8xf32>
    %62 = tpu.concatenate %28, %37, %46, %55 in 0 : vector<16x8xf32>, vector<16x8xf32>, vector<16x8xf32>, vector<16x8xf32> -> vector<64x8xf32>
    %c0_46 = arith.constant 0 : index
    %c0_47 = arith.constant 0 : index
    %c0_48 = arith.constant 0 : index
    %63 = vector.load %arg4[%c0_46, %c0_47, %c0_48] : memref<6x64x8xf32, #tpu.memory_space<vmem>>, vector<1x64x8xf32>
    %64 = vector.shape_cast %63 : vector<1x64x8xf32> to vector<64x8xf32>
    %65 = arith.addf %62, %64 : vector<64x8xf32>
    %66 = tpu.concatenate %31, %40, %49, %58 in 0 : vector<16x8xf32>, vector<16x8xf32>, vector<16x8xf32>, vector<16x8xf32> -> vector<64x8xf32>
    %c1_49 = arith.constant 1 : index
    %c0_50 = arith.constant 0 : index
    %c0_51 = arith.constant 0 : index
    %67 = vector.load %arg4[%c1_49, %c0_50, %c0_51] : memref<6x64x8xf32, #tpu.memory_space<vmem>>, vector<1x64x8xf32>
    %68 = vector.shape_cast %67 : vector<1x64x8xf32> to vector<64x8xf32>
    %69 = arith.addf %66, %68 : vector<64x8xf32>
    %70 = tpu.concatenate %34, %43, %52, %61 in 0 : vector<16x8xf32>, vector<16x8xf32>, vector<16x8xf32>, vector<16x8xf32> -> vector<64x8xf32>
    %c2_52 = arith.constant 2 : index
    %c0_53 = arith.constant 0 : index
    %c0_54 = arith.constant 0 : index
    %71 = vector.load %arg4[%c2_52, %c0_53, %c0_54] : memref<6x64x8xf32, #tpu.memory_space<vmem>>, vector<1x64x8xf32>
    %72 = vector.shape_cast %71 : vector<1x64x8xf32> to vector<64x8xf32>
    %73 = arith.addf %70, %72 : vector<64x8xf32>
    %74 = arith.truncf %65 : vector<64x8xf32> to vector<64x8xbf16>
    %75 = arith.truncf %69 : vector<64x8xf32> to vector<64x8xbf16>
    %cst_55 = arith.constant dense<0.000000e+00> : vector<64x64xf32>
    %76 = tpu.matmul %74, %75, %cst_55 {dimension_numbers = #tpu.dot_dimension_numbers<[1], [1], [0], [0], [0, 0, 1, 0], [], []>} : vector<64x8xbf16>, vector<64x8xbf16>, vector<64x64xf32> -> vector<64x64xf32>
    %c0_56 = arith.constant 0 : index
    %c0_57 = arith.constant 0 : index
    %77 = vector.load %arg1[%c0_56, %c0_57] : memref<64x64xf32, #tpu.memory_space<vmem>>, vector<64x64xf32>
    %78 = arith.addf %76, %77 : vector<64x64xf32>
    %cst_58 = arith.constant dense<0xFF800000> : vector<64xf32>
    %79 = vector.multi_reduction <maximumf>, %78, %cst_58 [1] : vector<64x64xf32> to vector<64xf32>
    %80 = vector.shape_cast %79 : vector<64xf32> to vector<64x1xf32>
    %81 = vector.broadcast %80 : vector<64x1xf32> to vector<64x64xf32>
    %82 = arith.subf %78, %81 : vector<64x64xf32>
    %83 = math.exp %82 : vector<64x64xf32>
    %cst_59 = arith.constant dense<0.000000e+00> : vector<64xf32>
    %84 = vector.multi_reduction <add>, %83, %cst_59 [1] : vector<64x64xf32> to vector<64xf32>
    %85 = vector.shape_cast %84 : vector<64xf32> to vector<64x1xf32>
    %86 = vector.broadcast %85 : vector<64x1xf32> to vector<64x64xf32>
    %87 = arith.divf %83, %86 : vector<64x64xf32>
    %88 = arith.truncf %87 : vector<64x64xf32> to vector<64x64xbf16>
    %89 = arith.truncf %73 : vector<64x8xf32> to vector<64x8xbf16>
    %cst_60 = arith.constant dense<0.000000e+00> : vector<64x8xf32>
    %90 = tpu.matmul %88, %89, %cst_60 {dimension_numbers = #tpu.dot_dimension_numbers<[1], [0], [0], [1], [0, 0, 1, 1], [], []>} : vector<64x64xbf16>, vector<64x8xbf16>, vector<64x8xf32> -> vector<64x8xf32>
    %c2_61 = arith.constant 2 : index
    %c0_62 = arith.constant 0 : index
    %91 = vector.load %arg9[%c2_61, %c0_62] : memref<16x32xf32, #tpu.memory_space<vmem>>, vector<1x32xf32>
    %92 = vector.extract_strided_slice %90 {offsets = [0, 0], sizes = [16, 8], strides = [1, 1]} : vector<64x8xf32> to vector<16x8xf32>
    %93 = arith.truncf %92 : vector<16x8xf32> to vector<16x8xbf16>
    %c0_63 = arith.constant 0 : index
    %c0_64 = arith.constant 0 : index
    %c0_65 = arith.constant 0 : index
    %94 = vector.load %arg5[%c0_63, %c0_64, %c0_65] : memref<8x8x32xbf16, #tpu.memory_space<vmem>>, vector<1x8x32xbf16>
    %95 = vector.shape_cast %94 : vector<1x8x32xbf16> to vector<8x32xbf16>
    %cst_66 = arith.constant dense<0.000000e+00> : vector<16x32xf32>
    %96 = tpu.matmul %93, %95, %cst_66 {dimension_numbers = #tpu.dot_dimension_numbers<[1], [0], [0], [1], [0, 0, 1, 1], [], []>} : vector<16x8xbf16>, vector<8x32xbf16>, vector<16x32xf32> -> vector<16x32xf32>
    %97 = vector.broadcast %91 : vector<1x32xf32> to vector<16x32xf32>
    %98 = arith.addf %97, %96 : vector<16x32xf32>
    %99 = vector.extract_strided_slice %90 {offsets = [16, 0], sizes = [16, 8], strides = [1, 1]} : vector<64x8xf32> to vector<16x8xf32>
    %100 = arith.truncf %99 : vector<16x8xf32> to vector<16x8xbf16>
    %c1_67 = arith.constant 1 : index
    %c0_68 = arith.constant 0 : index
    %c0_69 = arith.constant 0 : index
    %101 = vector.load %arg5[%c1_67, %c0_68, %c0_69] : memref<8x8x32xbf16, #tpu.memory_space<vmem>>, vector<1x8x32xbf16>
    %102 = vector.shape_cast %101 : vector<1x8x32xbf16> to vector<8x32xbf16>
    %cst_70 = arith.constant dense<0.000000e+00> : vector<16x32xf32>
    %103 = tpu.matmul %100, %102, %cst_70 {dimension_numbers = #tpu.dot_dimension_numbers<[1], [0], [0], [1], [0, 0, 1, 1], [], []>} : vector<16x8xbf16>, vector<8x32xbf16>, vector<16x32xf32> -> vector<16x32xf32>
    %104 = arith.addf %98, %103 : vector<16x32xf32>
    %105 = vector.extract_strided_slice %90 {offsets = [32, 0], sizes = [16, 8], strides = [1, 1]} : vector<64x8xf32> to vector<16x8xf32>
    %106 = arith.truncf %105 : vector<16x8xf32> to vector<16x8xbf16>
    %c2_71 = arith.constant 2 : index
    %c0_72 = arith.constant 0 : index
    %c0_73 = arith.constant 0 : index
    %107 = vector.load %arg5[%c2_71, %c0_72, %c0_73] : memref<8x8x32xbf16, #tpu.memory_space<vmem>>, vector<1x8x32xbf16>
    %108 = vector.shape_cast %107 : vector<1x8x32xbf16> to vector<8x32xbf16>
    %cst_74 = arith.constant dense<0.000000e+00> : vector<16x32xf32>
    %109 = tpu.matmul %106, %108, %cst_74 {dimension_numbers = #tpu.dot_dimension_numbers<[1], [0], [0], [1], [0, 0, 1, 1], [], []>} : vector<16x8xbf16>, vector<8x32xbf16>, vector<16x32xf32> -> vector<16x32xf32>
    %110 = arith.addf %104, %109 : vector<16x32xf32>
    %111 = vector.extract_strided_slice %90 {offsets = [48, 0], sizes = [16, 8], strides = [1, 1]} : vector<64x8xf32> to vector<16x8xf32>
    %112 = arith.truncf %111 : vector<16x8xf32> to vector<16x8xbf16>
    %c3_75 = arith.constant 3 : index
    %c0_76 = arith.constant 0 : index
    %c0_77 = arith.constant 0 : index
    %113 = vector.load %arg5[%c3_75, %c0_76, %c0_77] : memref<8x8x32xbf16, #tpu.memory_space<vmem>>, vector<1x8x32xbf16>
    %114 = vector.shape_cast %113 : vector<1x8x32xbf16> to vector<8x32xbf16>
    %cst_78 = arith.constant dense<0.000000e+00> : vector<16x32xf32>
    %115 = tpu.matmul %112, %114, %cst_78 {dimension_numbers = #tpu.dot_dimension_numbers<[1], [0], [0], [1], [0, 0, 1, 1], [], []>} : vector<16x8xbf16>, vector<8x32xbf16>, vector<16x32xf32> -> vector<16x32xf32>
    %116 = arith.addf %110, %115 : vector<16x32xf32>
    %117 = arith.addf %116, %24 : vector<16x32xf32>
    %c3_79 = arith.constant 3 : index
    %c0_80 = arith.constant 0 : index
    %118 = vector.load %arg9[%c3_79, %c0_80] : memref<16x32xf32, #tpu.memory_space<vmem>>, vector<1x32xf32>
    %c4_81 = arith.constant 4 : index
    %c0_82 = arith.constant 0 : index
    %119 = vector.load %arg9[%c4_81, %c0_82] : memref<16x32xf32, #tpu.memory_space<vmem>>, vector<1x32xf32>
    %cst_83 = arith.constant dense<0.000000e+00> : vector<16xf32>
    %120 = vector.multi_reduction <add>, %117, %cst_83 [1] : vector<16x32xf32> to vector<16xf32>
    %121 = vector.shape_cast %120 : vector<16xf32> to vector<16x1xf32>
    %cst_84 = arith.constant 3.200000e+01 : f32
    %122 = vector.broadcast %cst_84 : f32 to vector<16x1xf32>
    %123 = arith.divf %121, %122 : vector<16x1xf32>
    %124 = vector.broadcast %123 : vector<16x1xf32> to vector<16x32xf32>
    %125 = arith.subf %117, %124 : vector<16x32xf32>
    %126 = arith.mulf %125, %125 : vector<16x32xf32>
    %cst_85 = arith.constant dense<0.000000e+00> : vector<16xf32>
    %127 = vector.multi_reduction <add>, %126, %cst_85 [1] : vector<16x32xf32> to vector<16xf32>
    %128 = vector.shape_cast %127 : vector<16xf32> to vector<16x1xf32>
    %cst_86 = arith.constant 3.200000e+01 : f32
    %129 = vector.broadcast %cst_86 : f32 to vector<16x1xf32>
    %130 = arith.divf %128, %129 : vector<16x1xf32>
    %131 = vector.broadcast %123 : vector<16x1xf32> to vector<16x32xf32>
    %132 = arith.subf %117, %131 : vector<16x32xf32>
    %cst_87 = arith.constant 9.99999974E-6 : f32
    %133 = vector.broadcast %cst_87 : f32 to vector<16x1xf32>
    %134 = arith.addf %130, %133 : vector<16x1xf32>
    %135 = math.rsqrt %134 : vector<16x1xf32>
    %136 = vector.broadcast %135 : vector<16x1xf32> to vector<16x32xf32>
    %137 = arith.mulf %132, %136 : vector<16x32xf32>
    %138 = vector.broadcast %118 : vector<1x32xf32> to vector<16x32xf32>
    %139 = arith.mulf %137, %138 : vector<16x32xf32>
    %140 = vector.broadcast %119 : vector<1x32xf32> to vector<16x32xf32>
    %141 = arith.addf %139, %140 : vector<16x32xf32>
    %142 = arith.truncf %141 : vector<16x32xf32> to vector<16x32xbf16>
    %c0_88 = arith.constant 0 : index
    %c0_89 = arith.constant 0 : index
    %c0_90 = arith.constant 0 : index
    %143 = vector.load %arg6[%c0_88, %c0_89, %c0_90] : memref<2x32x64xbf16, #tpu.memory_space<vmem>>, vector<1x32x64xbf16>
    %144 = vector.shape_cast %143 : vector<1x32x64xbf16> to vector<32x64xbf16>
    %cst_91 = arith.constant dense<0.000000e+00> : vector<16x64xf32>
    %145 = tpu.matmul %142, %144, %cst_91 {dimension_numbers = #tpu.dot_dimension_numbers<[1], [0], [0], [1], [0, 0, 1, 1], [], []>} : vector<16x32xbf16>, vector<32x64xbf16>, vector<16x64xf32> -> vector<16x64xf32>
    %c0_92 = arith.constant 0 : index
    %c0_93 = arith.constant 0 : index
    %c0_94 = arith.constant 0 : index
    %146 = vector.load %arg7[%c0_92, %c0_93, %c0_94] : memref<2x1x64xf32, #tpu.memory_space<vmem>>, vector<1x1x64xf32>
    %147 = vector.shape_cast %146 : vector<1x1x64xf32> to vector<1x64xf32>
    %148 = vector.broadcast %147 : vector<1x64xf32> to vector<16x64xf32>
    %149 = arith.addf %145, %148 : vector<16x64xf32>
    %cst_95 = arith.constant 5.000000e-01 : f32
    %150 = vector.broadcast %cst_95 : f32 to vector<16x64xf32>
    %151 = arith.mulf %150, %149 : vector<16x64xf32>
    %cst_96 = arith.constant 4.471500e-02 : f32
    %152 = vector.broadcast %cst_96 : f32 to vector<16x64xf32>
    %153 = arith.mulf %152, %149 : vector<16x64xf32>
    %154 = arith.mulf %153, %149 : vector<16x64xf32>
    %155 = arith.mulf %154, %149 : vector<16x64xf32>
    %156 = arith.addf %149, %155 : vector<16x64xf32>
    %cst_97 = arith.constant 0.797884583 : f32
    %157 = vector.broadcast %cst_97 : f32 to vector<16x64xf32>
    %158 = arith.mulf %157, %156 : vector<16x64xf32>
    %159 = math.tanh %158 : vector<16x64xf32>
    %cst_98 = arith.constant 1.000000e+00 : f32
    %160 = vector.broadcast %cst_98 : f32 to vector<16x64xf32>
    %161 = arith.addf %160, %159 : vector<16x64xf32>
    %162 = arith.mulf %151, %161 : vector<16x64xf32>
    %163 = arith.truncf %162 : vector<16x64xf32> to vector<16x64xbf16>
    %c0_99 = arith.constant 0 : index
    %c0_100 = arith.constant 0 : index
    %c0_101 = arith.constant 0 : index
    %164 = vector.load %arg8[%c0_99, %c0_100, %c0_101] : memref<2x64x32xbf16, #tpu.memory_space<vmem>>, vector<1x64x32xbf16>
    %165 = vector.shape_cast %164 : vector<1x64x32xbf16> to vector<64x32xbf16>
    %cst_102 = arith.constant dense<0.000000e+00> : vector<16x32xf32>
    %166 = tpu.matmul %163, %165, %cst_102 {dimension_numbers = #tpu.dot_dimension_numbers<[1], [0], [0], [1], [0, 0, 1, 1], [], []>} : vector<16x64xbf16>, vector<64x32xbf16>, vector<16x32xf32> -> vector<16x32xf32>
    %c5_103 = arith.constant 5 : index
    %c0_104 = arith.constant 0 : index
    %167 = vector.load %arg9[%c5_103, %c0_104] : memref<16x32xf32, #tpu.memory_space<vmem>>, vector<1x32xf32>
    %168 = vector.broadcast %167 : vector<1x32xf32> to vector<16x32xf32>
    %169 = arith.addf %166, %168 : vector<16x32xf32>
    %170 = arith.addf %169, %141 : vector<16x32xf32>
    %c6_105 = arith.constant 6 : index
    %c0_106 = arith.constant 0 : index
    %171 = vector.load %arg9[%c6_105, %c0_106] : memref<16x32xf32, #tpu.memory_space<vmem>>, vector<1x32xf32>
    %c7_107 = arith.constant 7 : index
    %c0_108 = arith.constant 0 : index
    %172 = vector.load %arg9[%c7_107, %c0_108] : memref<16x32xf32, #tpu.memory_space<vmem>>, vector<1x32xf32>
    %cst_109 = arith.constant dense<0.000000e+00> : vector<16xf32>
    %173 = vector.multi_reduction <add>, %170, %cst_109 [1] : vector<16x32xf32> to vector<16xf32>
    %174 = vector.shape_cast %173 : vector<16xf32> to vector<16x1xf32>
    %cst_110 = arith.constant 3.200000e+01 : f32
    %175 = vector.broadcast %cst_110 : f32 to vector<16x1xf32>
    %176 = arith.divf %174, %175 : vector<16x1xf32>
    %177 = vector.broadcast %176 : vector<16x1xf32> to vector<16x32xf32>
    %178 = arith.subf %170, %177 : vector<16x32xf32>
    %179 = arith.mulf %178, %178 : vector<16x32xf32>
    %cst_111 = arith.constant dense<0.000000e+00> : vector<16xf32>
    %180 = vector.multi_reduction <add>, %179, %cst_111 [1] : vector<16x32xf32> to vector<16xf32>
    %181 = vector.shape_cast %180 : vector<16xf32> to vector<16x1xf32>
    %cst_112 = arith.constant 3.200000e+01 : f32
    %182 = vector.broadcast %cst_112 : f32 to vector<16x1xf32>
    %183 = arith.divf %181, %182 : vector<16x1xf32>
    %184 = vector.broadcast %176 : vector<16x1xf32> to vector<16x32xf32>
    %185 = arith.subf %170, %184 : vector<16x32xf32>
    %cst_113 = arith.constant 9.99999974E-6 : f32
    %186 = vector.broadcast %cst_113 : f32 to vector<16x1xf32>
    %187 = arith.addf %183, %186 : vector<16x1xf32>
    %188 = math.rsqrt %187 : vector<16x1xf32>
    %189 = vector.broadcast %188 : vector<16x1xf32> to vector<16x32xf32>
    %190 = arith.mulf %185, %189 : vector<16x32xf32>
    %191 = vector.broadcast %171 : vector<1x32xf32> to vector<16x32xf32>
    %192 = arith.mulf %190, %191 : vector<16x32xf32>
    %193 = vector.broadcast %172 : vector<1x32xf32> to vector<16x32xf32>
    %194 = arith.addf %192, %193 : vector<16x32xf32>
    %195 = arith.truncf %194 : vector<16x32xf32> to vector<16x32xbf16>
    %c12 = arith.constant 12 : index
    %c0_114 = arith.constant 0 : index
    %c0_115 = arith.constant 0 : index
    %196 = vector.load %arg3[%c12, %c0_114, %c0_115] : memref<24x32x8xbf16, #tpu.memory_space<vmem>>, vector<1x32x8xbf16>
    %197 = vector.shape_cast %196 : vector<1x32x8xbf16> to vector<32x8xbf16>
    %cst_116 = arith.constant dense<0.000000e+00> : vector<16x8xf32>
    %198 = tpu.matmul %195, %197, %cst_116 {dimension_numbers = #tpu.dot_dimension_numbers<[1], [0], [0], [1], [0, 0, 1, 1], [], []>} : vector<16x32xbf16>, vector<32x8xbf16>, vector<16x8xf32> -> vector<16x8xf32>
    %c16 = arith.constant 16 : index
    %c0_117 = arith.constant 0 : index
    %c0_118 = arith.constant 0 : index
    %199 = vector.load %arg3[%c16, %c0_117, %c0_118] : memref<24x32x8xbf16, #tpu.memory_space<vmem>>, vector<1x32x8xbf16>
    %200 = vector.shape_cast %199 : vector<1x32x8xbf16> to vector<32x8xbf16>
    %cst_119 = arith.constant dense<0.000000e+00> : vector<16x8xf32>
    %201 = tpu.matmul %195, %200, %cst_119 {dimension_numbers = #tpu.dot_dimension_numbers<[1], [0], [0], [1], [0, 0, 1, 1], [], []>} : vector<16x32xbf16>, vector<32x8xbf16>, vector<16x8xf32> -> vector<16x8xf32>
    %c20 = arith.constant 20 : index
    %c0_120 = arith.constant 0 : index
    %c0_121 = arith.constant 0 : index
    %202 = vector.load %arg3[%c20, %c0_120, %c0_121] : memref<24x32x8xbf16, #tpu.memory_space<vmem>>, vector<1x32x8xbf16>
    %203 = vector.shape_cast %202 : vector<1x32x8xbf16> to vector<32x8xbf16>
    %cst_122 = arith.constant dense<0.000000e+00> : vector<16x8xf32>
    %204 = tpu.matmul %195, %203, %cst_122 {dimension_numbers = #tpu.dot_dimension_numbers<[1], [0], [0], [1], [0, 0, 1, 1], [], []>} : vector<16x32xbf16>, vector<32x8xbf16>, vector<16x8xf32> -> vector<16x8xf32>
    %c13 = arith.constant 13 : index
    %c0_123 = arith.constant 0 : index
    %c0_124 = arith.constant 0 : index
    %205 = vector.load %arg3[%c13, %c0_123, %c0_124] : memref<24x32x8xbf16, #tpu.memory_space<vmem>>, vector<1x32x8xbf16>
    %206 = vector.shape_cast %205 : vector<1x32x8xbf16> to vector<32x8xbf16>
    %cst_125 = arith.constant dense<0.000000e+00> : vector<16x8xf32>
    %207 = tpu.matmul %195, %206, %cst_125 {dimension_numbers = #tpu.dot_dimension_numbers<[1], [0], [0], [1], [0, 0, 1, 1], [], []>} : vector<16x32xbf16>, vector<32x8xbf16>, vector<16x8xf32> -> vector<16x8xf32>
    %c17 = arith.constant 17 : index
    %c0_126 = arith.constant 0 : index
    %c0_127 = arith.constant 0 : index
    %208 = vector.load %arg3[%c17, %c0_126, %c0_127] : memref<24x32x8xbf16, #tpu.memory_space<vmem>>, vector<1x32x8xbf16>
    %209 = vector.shape_cast %208 : vector<1x32x8xbf16> to vector<32x8xbf16>
    %cst_128 = arith.constant dense<0.000000e+00> : vector<16x8xf32>
    %210 = tpu.matmul %195, %209, %cst_128 {dimension_numbers = #tpu.dot_dimension_numbers<[1], [0], [0], [1], [0, 0, 1, 1], [], []>} : vector<16x32xbf16>, vector<32x8xbf16>, vector<16x8xf32> -> vector<16x8xf32>
    %c21 = arith.constant 21 : index
    %c0_129 = arith.constant 0 : index
    %c0_130 = arith.constant 0 : index
    %211 = vector.load %arg3[%c21, %c0_129, %c0_130] : memref<24x32x8xbf16, #tpu.memory_space<vmem>>, vector<1x32x8xbf16>
    %212 = vector.shape_cast %211 : vector<1x32x8xbf16> to vector<32x8xbf16>
    %cst_131 = arith.constant dense<0.000000e+00> : vector<16x8xf32>
    %213 = tpu.matmul %195, %212, %cst_131 {dimension_numbers = #tpu.dot_dimension_numbers<[1], [0], [0], [1], [0, 0, 1, 1], [], []>} : vector<16x32xbf16>, vector<32x8xbf16>, vector<16x8xf32> -> vector<16x8xf32>
    %c14 = arith.constant 14 : index
    %c0_132 = arith.constant 0 : index
    %c0_133 = arith.constant 0 : index
    %214 = vector.load %arg3[%c14, %c0_132, %c0_133] : memref<24x32x8xbf16, #tpu.memory_space<vmem>>, vector<1x32x8xbf16>
    %215 = vector.shape_cast %214 : vector<1x32x8xbf16> to vector<32x8xbf16>
    %cst_134 = arith.constant dense<0.000000e+00> : vector<16x8xf32>
    %216 = tpu.matmul %195, %215, %cst_134 {dimension_numbers = #tpu.dot_dimension_numbers<[1], [0], [0], [1], [0, 0, 1, 1], [], []>} : vector<16x32xbf16>, vector<32x8xbf16>, vector<16x8xf32> -> vector<16x8xf32>
    %c18 = arith.constant 18 : index
    %c0_135 = arith.constant 0 : index
    %c0_136 = arith.constant 0 : index
    %217 = vector.load %arg3[%c18, %c0_135, %c0_136] : memref<24x32x8xbf16, #tpu.memory_space<vmem>>, vector<1x32x8xbf16>
    %218 = vector.shape_cast %217 : vector<1x32x8xbf16> to vector<32x8xbf16>
    %cst_137 = arith.constant dense<0.000000e+00> : vector<16x8xf32>
    %219 = tpu.matmul %195, %218, %cst_137 {dimension_numbers = #tpu.dot_dimension_numbers<[1], [0], [0], [1], [0, 0, 1, 1], [], []>} : vector<16x32xbf16>, vector<32x8xbf16>, vector<16x8xf32> -> vector<16x8xf32>
    %c22 = arith.constant 22 : index
    %c0_138 = arith.constant 0 : index
    %c0_139 = arith.constant 0 : index
    %220 = vector.load %arg3[%c22, %c0_138, %c0_139] : memref<24x32x8xbf16, #tpu.memory_space<vmem>>, vector<1x32x8xbf16>
    %221 = vector.shape_cast %220 : vector<1x32x8xbf16> to vector<32x8xbf16>
    %cst_140 = arith.constant dense<0.000000e+00> : vector<16x8xf32>
    %222 = tpu.matmul %195, %221, %cst_140 {dimension_numbers = #tpu.dot_dimension_numbers<[1], [0], [0], [1], [0, 0, 1, 1], [], []>} : vector<16x32xbf16>, vector<32x8xbf16>, vector<16x8xf32> -> vector<16x8xf32>
    %c15 = arith.constant 15 : index
    %c0_141 = arith.constant 0 : index
    %c0_142 = arith.constant 0 : index
    %223 = vector.load %arg3[%c15, %c0_141, %c0_142] : memref<24x32x8xbf16, #tpu.memory_space<vmem>>, vector<1x32x8xbf16>
    %224 = vector.shape_cast %223 : vector<1x32x8xbf16> to vector<32x8xbf16>
    %cst_143 = arith.constant dense<0.000000e+00> : vector<16x8xf32>
    %225 = tpu.matmul %195, %224, %cst_143 {dimension_numbers = #tpu.dot_dimension_numbers<[1], [0], [0], [1], [0, 0, 1, 1], [], []>} : vector<16x32xbf16>, vector<32x8xbf16>, vector<16x8xf32> -> vector<16x8xf32>
    %c19 = arith.constant 19 : index
    %c0_144 = arith.constant 0 : index
    %c0_145 = arith.constant 0 : index
    %226 = vector.load %arg3[%c19, %c0_144, %c0_145] : memref<24x32x8xbf16, #tpu.memory_space<vmem>>, vector<1x32x8xbf16>
    %227 = vector.shape_cast %226 : vector<1x32x8xbf16> to vector<32x8xbf16>
    %cst_146 = arith.constant dense<0.000000e+00> : vector<16x8xf32>
    %228 = tpu.matmul %195, %227, %cst_146 {dimension_numbers = #tpu.dot_dimension_numbers<[1], [0], [0], [1], [0, 0, 1, 1], [], []>} : vector<16x32xbf16>, vector<32x8xbf16>, vector<16x8xf32> -> vector<16x8xf32>
    %c23 = arith.constant 23 : index
    %c0_147 = arith.constant 0 : index
    %c0_148 = arith.constant 0 : index
    %229 = vector.load %arg3[%c23, %c0_147, %c0_148] : memref<24x32x8xbf16, #tpu.memory_space<vmem>>, vector<1x32x8xbf16>
    %230 = vector.shape_cast %229 : vector<1x32x8xbf16> to vector<32x8xbf16>
    %cst_149 = arith.constant dense<0.000000e+00> : vector<16x8xf32>
    %231 = tpu.matmul %195, %230, %cst_149 {dimension_numbers = #tpu.dot_dimension_numbers<[1], [0], [0], [1], [0, 0, 1, 1], [], []>} : vector<16x32xbf16>, vector<32x8xbf16>, vector<16x8xf32> -> vector<16x8xf32>
    %232 = tpu.concatenate %198, %207, %216, %225 in 0 : vector<16x8xf32>, vector<16x8xf32>, vector<16x8xf32>, vector<16x8xf32> -> vector<64x8xf32>
    %c3_150 = arith.constant 3 : index
    %c0_151 = arith.constant 0 : index
    %c0_152 = arith.constant 0 : index
    %233 = vector.load %arg4[%c3_150, %c0_151, %c0_152] : memref<6x64x8xf32, #tpu.memory_space<vmem>>, vector<1x64x8xf32>
    %234 = vector.shape_cast %233 : vector<1x64x8xf32> to vector<64x8xf32>
    %235 = arith.addf %232, %234 : vector<64x8xf32>
    %236 = tpu.concatenate %201, %210, %219, %228 in 0 : vector<16x8xf32>, vector<16x8xf32>, vector<16x8xf32>, vector<16x8xf32> -> vector<64x8xf32>
    %c4_153 = arith.constant 4 : index
    %c0_154 = arith.constant 0 : index
    %c0_155 = arith.constant 0 : index
    %237 = vector.load %arg4[%c4_153, %c0_154, %c0_155] : memref<6x64x8xf32, #tpu.memory_space<vmem>>, vector<1x64x8xf32>
    %238 = vector.shape_cast %237 : vector<1x64x8xf32> to vector<64x8xf32>
    %239 = arith.addf %236, %238 : vector<64x8xf32>
    %240 = tpu.concatenate %204, %213, %222, %231 in 0 : vector<16x8xf32>, vector<16x8xf32>, vector<16x8xf32>, vector<16x8xf32> -> vector<64x8xf32>
    %c5_156 = arith.constant 5 : index
    %c0_157 = arith.constant 0 : index
    %c0_158 = arith.constant 0 : index
    %241 = vector.load %arg4[%c5_156, %c0_157, %c0_158] : memref<6x64x8xf32, #tpu.memory_space<vmem>>, vector<1x64x8xf32>
    %242 = vector.shape_cast %241 : vector<1x64x8xf32> to vector<64x8xf32>
    %243 = arith.addf %240, %242 : vector<64x8xf32>
    %244 = arith.truncf %235 : vector<64x8xf32> to vector<64x8xbf16>
    %245 = arith.truncf %239 : vector<64x8xf32> to vector<64x8xbf16>
    %cst_159 = arith.constant dense<0.000000e+00> : vector<64x64xf32>
    %246 = tpu.matmul %244, %245, %cst_159 {dimension_numbers = #tpu.dot_dimension_numbers<[1], [1], [0], [0], [0, 0, 1, 0], [], []>} : vector<64x8xbf16>, vector<64x8xbf16>, vector<64x64xf32> -> vector<64x64xf32>
    %c0_160 = arith.constant 0 : index
    %c0_161 = arith.constant 0 : index
    %247 = vector.load %arg1[%c0_160, %c0_161] : memref<64x64xf32, #tpu.memory_space<vmem>>, vector<64x64xf32>
    %248 = arith.addf %246, %247 : vector<64x64xf32>
    %cst_162 = arith.constant dense<0xFF800000> : vector<64xf32>
    %249 = vector.multi_reduction <maximumf>, %248, %cst_162 [1] : vector<64x64xf32> to vector<64xf32>
    %250 = vector.shape_cast %249 : vector<64xf32> to vector<64x1xf32>
    %251 = vector.broadcast %250 : vector<64x1xf32> to vector<64x64xf32>
    %252 = arith.subf %248, %251 : vector<64x64xf32>
    %253 = math.exp %252 : vector<64x64xf32>
    %cst_163 = arith.constant dense<0.000000e+00> : vector<64xf32>
    %254 = vector.multi_reduction <add>, %253, %cst_163 [1] : vector<64x64xf32> to vector<64xf32>
    %255 = vector.shape_cast %254 : vector<64xf32> to vector<64x1xf32>
    %256 = vector.broadcast %255 : vector<64x1xf32> to vector<64x64xf32>
    %257 = arith.divf %253, %256 : vector<64x64xf32>
    %258 = arith.truncf %257 : vector<64x64xf32> to vector<64x64xbf16>
    %259 = arith.truncf %243 : vector<64x8xf32> to vector<64x8xbf16>
    %cst_164 = arith.constant dense<0.000000e+00> : vector<64x8xf32>
    %260 = tpu.matmul %258, %259, %cst_164 {dimension_numbers = #tpu.dot_dimension_numbers<[1], [0], [0], [1], [0, 0, 1, 1], [], []>} : vector<64x64xbf16>, vector<64x8xbf16>, vector<64x8xf32> -> vector<64x8xf32>
    %c8_165 = arith.constant 8 : index
    %c0_166 = arith.constant 0 : index
    %261 = vector.load %arg9[%c8_165, %c0_166] : memref<16x32xf32, #tpu.memory_space<vmem>>, vector<1x32xf32>
    %262 = vector.extract_strided_slice %260 {offsets = [0, 0], sizes = [16, 8], strides = [1, 1]} : vector<64x8xf32> to vector<16x8xf32>
    %263 = arith.truncf %262 : vector<16x8xf32> to vector<16x8xbf16>
    %c4_167 = arith.constant 4 : index
    %c0_168 = arith.constant 0 : index
    %c0_169 = arith.constant 0 : index
    %264 = vector.load %arg5[%c4_167, %c0_168, %c0_169] : memref<8x8x32xbf16, #tpu.memory_space<vmem>>, vector<1x8x32xbf16>
    %265 = vector.shape_cast %264 : vector<1x8x32xbf16> to vector<8x32xbf16>
    %cst_170 = arith.constant dense<0.000000e+00> : vector<16x32xf32>
    %266 = tpu.matmul %263, %265, %cst_170 {dimension_numbers = #tpu.dot_dimension_numbers<[1], [0], [0], [1], [0, 0, 1, 1], [], []>} : vector<16x8xbf16>, vector<8x32xbf16>, vector<16x32xf32> -> vector<16x32xf32>
    %267 = vector.broadcast %261 : vector<1x32xf32> to vector<16x32xf32>
    %268 = arith.addf %267, %266 : vector<16x32xf32>
    %269 = vector.extract_strided_slice %260 {offsets = [16, 0], sizes = [16, 8], strides = [1, 1]} : vector<64x8xf32> to vector<16x8xf32>
    %270 = arith.truncf %269 : vector<16x8xf32> to vector<16x8xbf16>
    %c5_171 = arith.constant 5 : index
    %c0_172 = arith.constant 0 : index
    %c0_173 = arith.constant 0 : index
    %271 = vector.load %arg5[%c5_171, %c0_172, %c0_173] : memref<8x8x32xbf16, #tpu.memory_space<vmem>>, vector<1x8x32xbf16>
    %272 = vector.shape_cast %271 : vector<1x8x32xbf16> to vector<8x32xbf16>
    %cst_174 = arith.constant dense<0.000000e+00> : vector<16x32xf32>
    %273 = tpu.matmul %270, %272, %cst_174 {dimension_numbers = #tpu.dot_dimension_numbers<[1], [0], [0], [1], [0, 0, 1, 1], [], []>} : vector<16x8xbf16>, vector<8x32xbf16>, vector<16x32xf32> -> vector<16x32xf32>
    %274 = arith.addf %268, %273 : vector<16x32xf32>
    %275 = vector.extract_strided_slice %260 {offsets = [32, 0], sizes = [16, 8], strides = [1, 1]} : vector<64x8xf32> to vector<16x8xf32>
    %276 = arith.truncf %275 : vector<16x8xf32> to vector<16x8xbf16>
    %c6_175 = arith.constant 6 : index
    %c0_176 = arith.constant 0 : index
    %c0_177 = arith.constant 0 : index
    %277 = vector.load %arg5[%c6_175, %c0_176, %c0_177] : memref<8x8x32xbf16, #tpu.memory_space<vmem>>, vector<1x8x32xbf16>
    %278 = vector.shape_cast %277 : vector<1x8x32xbf16> to vector<8x32xbf16>
    %cst_178 = arith.constant dense<0.000000e+00> : vector<16x32xf32>
    %279 = tpu.matmul %276, %278, %cst_178 {dimension_numbers = #tpu.dot_dimension_numbers<[1], [0], [0], [1], [0, 0, 1, 1], [], []>} : vector<16x8xbf16>, vector<8x32xbf16>, vector<16x32xf32> -> vector<16x32xf32>
    %280 = arith.addf %274, %279 : vector<16x32xf32>
    %281 = vector.extract_strided_slice %260 {offsets = [48, 0], sizes = [16, 8], strides = [1, 1]} : vector<64x8xf32> to vector<16x8xf32>
    %282 = arith.truncf %281 : vector<16x8xf32> to vector<16x8xbf16>
    %c7_179 = arith.constant 7 : index
    %c0_180 = arith.constant 0 : index
    %c0_181 = arith.constant 0 : index
    %283 = vector.load %arg5[%c7_179, %c0_180, %c0_181] : memref<8x8x32xbf16, #tpu.memory_space<vmem>>, vector<1x8x32xbf16>
    %284 = vector.shape_cast %283 : vector<1x8x32xbf16> to vector<8x32xbf16>
    %cst_182 = arith.constant dense<0.000000e+00> : vector<16x32xf32>
    %285 = tpu.matmul %282, %284, %cst_182 {dimension_numbers = #tpu.dot_dimension_numbers<[1], [0], [0], [1], [0, 0, 1, 1], [], []>} : vector<16x8xbf16>, vector<8x32xbf16>, vector<16x32xf32> -> vector<16x32xf32>
    %286 = arith.addf %280, %285 : vector<16x32xf32>
    %287 = arith.addf %286, %194 : vector<16x32xf32>
    %c9_183 = arith.constant 9 : index
    %c0_184 = arith.constant 0 : index
    %288 = vector.load %arg9[%c9_183, %c0_184] : memref<16x32xf32, #tpu.memory_space<vmem>>, vector<1x32xf32>
    %c10_185 = arith.constant 10 : index
    %c0_186 = arith.constant 0 : index
    %289 = vector.load %arg9[%c10_185, %c0_186] : memref<16x32xf32, #tpu.memory_space<vmem>>, vector<1x32xf32>
    %cst_187 = arith.constant dense<0.000000e+00> : vector<16xf32>
    %290 = vector.multi_reduction <add>, %287, %cst_187 [1] : vector<16x32xf32> to vector<16xf32>
    %291 = vector.shape_cast %290 : vector<16xf32> to vector<16x1xf32>
    %cst_188 = arith.constant 3.200000e+01 : f32
    %292 = vector.broadcast %cst_188 : f32 to vector<16x1xf32>
    %293 = arith.divf %291, %292 : vector<16x1xf32>
    %294 = vector.broadcast %293 : vector<16x1xf32> to vector<16x32xf32>
    %295 = arith.subf %287, %294 : vector<16x32xf32>
    %296 = arith.mulf %295, %295 : vector<16x32xf32>
    %cst_189 = arith.constant dense<0.000000e+00> : vector<16xf32>
    %297 = vector.multi_reduction <add>, %296, %cst_189 [1] : vector<16x32xf32> to vector<16xf32>
    %298 = vector.shape_cast %297 : vector<16xf32> to vector<16x1xf32>
    %cst_190 = arith.constant 3.200000e+01 : f32
    %299 = vector.broadcast %cst_190 : f32 to vector<16x1xf32>
    %300 = arith.divf %298, %299 : vector<16x1xf32>
    %301 = vector.broadcast %293 : vector<16x1xf32> to vector<16x32xf32>
    %302 = arith.subf %287, %301 : vector<16x32xf32>
    %cst_191 = arith.constant 9.99999974E-6 : f32
    %303 = vector.broadcast %cst_191 : f32 to vector<16x1xf32>
    %304 = arith.addf %300, %303 : vector<16x1xf32>
    %305 = math.rsqrt %304 : vector<16x1xf32>
    %306 = vector.broadcast %305 : vector<16x1xf32> to vector<16x32xf32>
    %307 = arith.mulf %302, %306 : vector<16x32xf32>
    %308 = vector.broadcast %288 : vector<1x32xf32> to vector<16x32xf32>
    %309 = arith.mulf %307, %308 : vector<16x32xf32>
    %310 = vector.broadcast %289 : vector<1x32xf32> to vector<16x32xf32>
    %311 = arith.addf %309, %310 : vector<16x32xf32>
    %312 = arith.truncf %311 : vector<16x32xf32> to vector<16x32xbf16>
    %c1_192 = arith.constant 1 : index
    %c0_193 = arith.constant 0 : index
    %c0_194 = arith.constant 0 : index
    %313 = vector.load %arg6[%c1_192, %c0_193, %c0_194] : memref<2x32x64xbf16, #tpu.memory_space<vmem>>, vector<1x32x64xbf16>
    %314 = vector.shape_cast %313 : vector<1x32x64xbf16> to vector<32x64xbf16>
    %cst_195 = arith.constant dense<0.000000e+00> : vector<16x64xf32>
    %315 = tpu.matmul %312, %314, %cst_195 {dimension_numbers = #tpu.dot_dimension_numbers<[1], [0], [0], [1], [0, 0, 1, 1], [], []>} : vector<16x32xbf16>, vector<32x64xbf16>, vector<16x64xf32> -> vector<16x64xf32>
    %c1_196 = arith.constant 1 : index
    %c0_197 = arith.constant 0 : index
    %c0_198 = arith.constant 0 : index
    %316 = vector.load %arg7[%c1_196, %c0_197, %c0_198] : memref<2x1x64xf32, #tpu.memory_space<vmem>>, vector<1x1x64xf32>
    %317 = vector.shape_cast %316 : vector<1x1x64xf32> to vector<1x64xf32>
    %318 = vector.broadcast %317 : vector<1x64xf32> to vector<16x64xf32>
    %319 = arith.addf %315, %318 : vector<16x64xf32>
    %cst_199 = arith.constant 5.000000e-01 : f32
    %320 = vector.broadcast %cst_199 : f32 to vector<16x64xf32>
    %321 = arith.mulf %320, %319 : vector<16x64xf32>
    %cst_200 = arith.constant 4.471500e-02 : f32
    %322 = vector.broadcast %cst_200 : f32 to vector<16x64xf32>
    %323 = arith.mulf %322, %319 : vector<16x64xf32>
    %324 = arith.mulf %323, %319 : vector<16x64xf32>
    %325 = arith.mulf %324, %319 : vector<16x64xf32>
    %326 = arith.addf %319, %325 : vector<16x64xf32>
    %cst_201 = arith.constant 0.797884583 : f32
    %327 = vector.broadcast %cst_201 : f32 to vector<16x64xf32>
    %328 = arith.mulf %327, %326 : vector<16x64xf32>
    %329 = math.tanh %328 : vector<16x64xf32>
    %cst_202 = arith.constant 1.000000e+00 : f32
    %330 = vector.broadcast %cst_202 : f32 to vector<16x64xf32>
    %331 = arith.addf %330, %329 : vector<16x64xf32>
    %332 = arith.mulf %321, %331 : vector<16x64xf32>
    %333 = arith.truncf %332 : vector<16x64xf32> to vector<16x64xbf16>
    %c1_203 = arith.constant 1 : index
    %c0_204 = arith.constant 0 : index
    %c0_205 = arith.constant 0 : index
    %334 = vector.load %arg8[%c1_203, %c0_204, %c0_205] : memref<2x64x32xbf16, #tpu.memory_space<vmem>>, vector<1x64x32xbf16>
    %335 = vector.shape_cast %334 : vector<1x64x32xbf16> to vector<64x32xbf16>
    %cst_206 = arith.constant dense<0.000000e+00> : vector<16x32xf32>
    %336 = tpu.matmul %333, %335, %cst_206 {dimension_numbers = #tpu.dot_dimension_numbers<[1], [0], [0], [1], [0, 0, 1, 1], [], []>} : vector<16x64xbf16>, vector<64x32xbf16>, vector<16x32xf32> -> vector<16x32xf32>
    %c11_207 = arith.constant 11 : index
    %c0_208 = arith.constant 0 : index
    %337 = vector.load %arg9[%c11_207, %c0_208] : memref<16x32xf32, #tpu.memory_space<vmem>>, vector<1x32xf32>
    %338 = vector.broadcast %337 : vector<1x32xf32> to vector<16x32xf32>
    %339 = arith.addf %336, %338 : vector<16x32xf32>
    %340 = arith.addf %339, %311 : vector<16x32xf32>
    %c12_209 = arith.constant 12 : index
    %c0_210 = arith.constant 0 : index
    %341 = vector.load %arg9[%c12_209, %c0_210] : memref<16x32xf32, #tpu.memory_space<vmem>>, vector<1x32xf32>
    %c13_211 = arith.constant 13 : index
    %c0_212 = arith.constant 0 : index
    %342 = vector.load %arg9[%c13_211, %c0_212] : memref<16x32xf32, #tpu.memory_space<vmem>>, vector<1x32xf32>
    %cst_213 = arith.constant dense<0.000000e+00> : vector<16xf32>
    %343 = vector.multi_reduction <add>, %340, %cst_213 [1] : vector<16x32xf32> to vector<16xf32>
    %344 = vector.shape_cast %343 : vector<16xf32> to vector<16x1xf32>
    %cst_214 = arith.constant 3.200000e+01 : f32
    %345 = vector.broadcast %cst_214 : f32 to vector<16x1xf32>
    %346 = arith.divf %344, %345 : vector<16x1xf32>
    %347 = vector.broadcast %346 : vector<16x1xf32> to vector<16x32xf32>
    %348 = arith.subf %340, %347 : vector<16x32xf32>
    %349 = arith.mulf %348, %348 : vector<16x32xf32>
    %cst_215 = arith.constant dense<0.000000e+00> : vector<16xf32>
    %350 = vector.multi_reduction <add>, %349, %cst_215 [1] : vector<16x32xf32> to vector<16xf32>
    %351 = vector.shape_cast %350 : vector<16xf32> to vector<16x1xf32>
    %cst_216 = arith.constant 3.200000e+01 : f32
    %352 = vector.broadcast %cst_216 : f32 to vector<16x1xf32>
    %353 = arith.divf %351, %352 : vector<16x1xf32>
    %354 = vector.broadcast %346 : vector<16x1xf32> to vector<16x32xf32>
    %355 = arith.subf %340, %354 : vector<16x32xf32>
    %cst_217 = arith.constant 9.99999974E-6 : f32
    %356 = vector.broadcast %cst_217 : f32 to vector<16x1xf32>
    %357 = arith.addf %353, %356 : vector<16x1xf32>
    %358 = math.rsqrt %357 : vector<16x1xf32>
    %359 = vector.broadcast %358 : vector<16x1xf32> to vector<16x32xf32>
    %360 = arith.mulf %355, %359 : vector<16x32xf32>
    %361 = vector.broadcast %341 : vector<1x32xf32> to vector<16x32xf32>
    %362 = arith.mulf %360, %361 : vector<16x32xf32>
    %363 = vector.broadcast %342 : vector<1x32xf32> to vector<16x32xf32>
    %364 = arith.addf %362, %363 : vector<16x32xf32>
    %c0_218 = arith.constant 0 : index
    %c0_219 = arith.constant 0 : index
    %365 = vector.load %arg2[%c0_218, %c0_219] : memref<8x16xf32, #tpu.memory_space<vmem>>, vector<8x16xf32>
    %cst_220 = arith.constant dense<0.000000e+00> : vector<8x32xf32>
    %366 = tpu.matmul %365, %364, %cst_220 {dimension_numbers = #tpu.dot_dimension_numbers<[1], [0], [0], [1], [0, 0, 1, 1], [], []>} : vector<8x16xf32>, vector<16x32xf32>, vector<8x32xf32> -> vector<8x32xf32>
    %367 = arith.truncf %366 : vector<8x32xf32> to vector<8x32xbf16>
    %c0_221 = arith.constant 0 : index
    %c0_222 = arith.constant 0 : index
    %368 = vector.load %arg10[%c0_221, %c0_222] : memref<32x32xbf16, #tpu.memory_space<vmem>>, vector<32x32xbf16>
    %cst_223 = arith.constant dense<0.000000e+00> : vector<8x32xf32>
    %369 = tpu.matmul %367, %368, %cst_223 {dimension_numbers = #tpu.dot_dimension_numbers<[1], [0], [0], [1], [0, 0, 1, 1], [], []>} : vector<8x32xbf16>, vector<32x32xbf16>, vector<8x32xf32> -> vector<8x32xf32>
    %c14_224 = arith.constant 14 : index
    %c0_225 = arith.constant 0 : index
    %370 = vector.load %arg9[%c14_224, %c0_225] : memref<16x32xf32, #tpu.memory_space<vmem>>, vector<1x32xf32>
    %371 = vector.broadcast %370 : vector<1x32xf32> to vector<8x32xf32>
    %372 = arith.addf %369, %371 : vector<8x32xf32>
    %373 = math.tanh %372 : vector<8x32xf32>
    %374 = arith.truncf %373 : vector<8x32xf32> to vector<8x32xbf16>
    %c0_226 = arith.constant 0 : index
    %c0_227 = arith.constant 0 : index
    %375 = vector.load %arg11[%c0_226, %c0_227] : memref<32x128xbf16, #tpu.memory_space<vmem>>, vector<32x128xbf16>
    %cst_228 = arith.constant dense<0.000000e+00> : vector<8x128xf32>
    %376 = tpu.matmul %374, %375, %cst_228 {dimension_numbers = #tpu.dot_dimension_numbers<[1], [0], [0], [1], [0, 0, 1, 1], [], []>} : vector<8x32xbf16>, vector<32x128xbf16>, vector<8x128xf32> -> vector<8x128xf32>
    %c15_229 = arith.constant 15 : index
    %c0_230 = arith.constant 0 : index
    %377 = vector.load %arg9[%c15_229, %c0_230] : memref<16x32xf32, #tpu.memory_space<vmem>>, vector<1x32xf32>
    %378 = vector.extract_strided_slice %377 {offsets = [0, 0], sizes = [1, 1], strides = [1, 1]} : vector<1x32xf32> to vector<1x1xf32>
    %379 = vector.broadcast %378 : vector<1x1xf32> to vector<8x128xf32>
    %380 = arith.addf %376, %379 : vector<8x128xf32>
    %c0_231 = arith.constant 0 : index
    %c0_232 = arith.constant 0 : index
    %381 = vector.load %arg12[%c0_231, %c0_232] : memref<8x128xf32, #tpu.memory_space<vmem>>, vector<8x128xf32>
    tpu.vector_store %arg12[%c0_231, %c0_232], %380 {strides = array<i32>} : memref<8x128xf32, #tpu.memory_space<vmem>>, vector<8x128xf32>,
    return
  }
}

</mosaic_0001>

<llo_original>
// kernel: custom_lf_forward.1
$region0: #{custom_lf_forward.1}
  #allocation0 [shape = 'u32[]', space=smem, size = 0x4, offset = 0x4, fixed_abs, tag = 'smem constant byte address 0x4 - core index']
  #allocation1 [shape = 'u32[144,128]{1,0:T(1,128)}', space=vmem, size = 0x12000, scoped, tag = 'internal scratch']
  %s0 = inlined_call_operand.vmem [shape: f32[16,32], index: 0, kind: input, shape index: {}]
  %s1 = inlined_call_operand.vmem [shape: f32[64,64], index: 1, kind: input, shape index: {}]
  %s2 = inlined_call_operand.vmem [shape: f32[8,16], index: 2, kind: input, shape index: {}]
  %s3 = inlined_call_operand.vmem [shape: bf16[24,32,8], index: 3, kind: input, shape index: {}]
  %s4 = inlined_call_operand.vmem [shape: f32[6,64,8], index: 4, kind: input, shape index: {}]
  %s5 = inlined_call_operand.vmem [shape: bf16[8,8,32], index: 5, kind: input, shape index: {}]
  %s6 = inlined_call_operand.vmem [shape: bf16[2,32,64], index: 6, kind: input, shape index: {}]
  %s7 = inlined_call_operand.vmem [shape: f32[2,1,64], index: 7, kind: input, shape index: {}]
  %s8 = inlined_call_operand.vmem [shape: bf16[2,64,32], index: 8, kind: input, shape index: {}]
  %s9 = inlined_call_operand.vmem [shape: f32[16,32], index: 9, kind: input, shape index: {}]
  %s10 = inlined_call_operand.vmem [shape: bf16[32,32], index: 10, kind: input, shape index: {}]
  %s11 = inlined_call_operand.vmem [shape: bf16[32,128], index: 11, kind: input, shape index: {}]
  %s12 = inlined_call_operand.vmem [shape: f32[8,128], index: 12, kind: output, shape index: {}]
  %s13 = sld [smem:[#allocation0]]
  $region58: #{custom_lf_forward.1} parent=0
    _
  %s15 = ssub.s32 1, %s13
  %s16 = scalar_select 0, %s15, %s13
  // Predicated region
  $region2: #{custom_lf_forward.1} parent=0 // pred_check
    _
  $region3: #{custom_lf_forward.1} parent=0 // pred_check_branch
    %18 = sbr.rel (0) target = $region5
  $region4: #{custom_lf_forward.1} parent=0 // pred_region
    _
  $region5: #{custom_lf_forward.1} parent=0 // pred_fallthru
    _
  // Predicated region
  $region6: #{custom_lf_forward.1} parent=0 // pred_check
    _
  $region7: #{custom_lf_forward.1} parent=0 // pred_check_branch
    %20 = sbr.rel (0) target = $region9
  $region8: #{custom_lf_forward.1} parent=0 // pred_region
    _
  $region9: #{custom_lf_forward.1} parent=0 // pred_fallthru
    _
  // Predicated region
  $region10: #{custom_lf_forward.1} parent=0 // pred_check
    _
  $region11: #{custom_lf_forward.1} parent=0 // pred_check_branch
    %22 = sbr.rel (0) target = $region13
  $region12: #{custom_lf_forward.1} parent=0 // pred_region
    _
  $region13: #{custom_lf_forward.1} parent=0 // pred_fallthru
    _
  // Predicated region
  $region14: #{custom_lf_forward.1} parent=0 // pred_check
    _
  $region15: #{custom_lf_forward.1} parent=0 // pred_check_branch
    %24 = sbr.rel (0) target = $region17
  $region16: #{custom_lf_forward.1} parent=0 // pred_region
    _
  $region17: #{custom_lf_forward.1} parent=0 // pred_fallthru
    _
  // Predicated region
  $region18: #{custom_lf_forward.1} parent=0 // pred_check
    _
  $region19: #{custom_lf_forward.1} parent=0 // pred_check_branch
    %26 = sbr.rel (0) target = $region21
  $region20: #{custom_lf_forward.1} parent=0 // pred_region
    _
  $region21: #{custom_lf_forward.1} parent=0 // pred_fallthru
    _
  // Predicated region
  $region22: #{custom_lf_forward.1} parent=0 // pred_check
    _
  $region23: #{custom_lf_forward.1} parent=0 // pred_check_branch
    %28 = sbr.rel (0) target = $region25
  $region24: #{custom_lf_forward.1} parent=0 // pred_region
    _
  $region25: #{custom_lf_forward.1} parent=0 // pred_fallthru
    _
  // Predicated region
  $region26: #{custom_lf_forward.1} parent=0 // pred_check
    _
  $region27: #{custom_lf_forward.1} parent=0 // pred_check_branch
    %30 = sbr.rel (0) target = $region29
  $region28: #{custom_lf_forward.1} parent=0 // pred_region
    _
  $region29: #{custom_lf_forward.1} parent=0 // pred_fallthru
    _
  // Predicated region
  $region30: #{custom_lf_forward.1} parent=0 // pred_check
    _
  $region31: #{custom_lf_forward.1} parent=0 // pred_check_branch
    %32 = sbr.rel (0) target = $region33
  $region32: #{custom_lf_forward.1} parent=0 // pred_region
    _
  $region33: #{custom_lf_forward.1} parent=0 // pred_fallthru
    _
  // Predicated region
  $region34: #{custom_lf_forward.1} parent=0 // pred_check
    _
  $region35: #{custom_lf_forward.1} parent=0 // pred_check_branch
    %34 = sbr.rel (0) target = $region37
  $region36: #{custom_lf_forward.1} parent=0 // pred_region
    _
  $region37: #{custom_lf_forward.1} parent=0 // pred_fallthru
    _
  // Predicated region
  $region38: #{custom_lf_forward.1} parent=0 // pred_check
    _
  $region39: #{custom_lf_forward.1} parent=0 // pred_check_branch
    %36 = sbr.rel (0) target = $region41
  $region40: #{custom_lf_forward.1} parent=0 // pred_region
    _
  $region41: #{custom_lf_forward.1} parent=0 // pred_fallthru
    _
  // Predicated region
  $region42: #{custom_lf_forward.1} parent=0 // pred_check
    _
  $region43: #{custom_lf_forward.1} parent=0 // pred_check_branch
    %38 = sbr.rel (0) target = $region45
  $region44: #{custom_lf_forward.1} parent=0 // pred_region
    _
  $region45: #{custom_lf_forward.1} parent=0 // pred_fallthru
    _
  // Predicated region
  $region46: #{custom_lf_forward.1} parent=0 // pred_check
    _
  $region47: #{custom_lf_forward.1} parent=0 // pred_check_branch
    %40 = sbr.rel (0) target = $region49
  $region48: #{custom_lf_forward.1} parent=0 // pred_region
    _
  $region49: #{custom_lf_forward.1} parent=0 // pred_fallthru
    _
  %v42 = vld [vmem:[%s0] sm:$0xff]
  %v43 = vld [vmem:[%s0 + $0x8] sm:$0xff]
  %v44 = vld [vmem:[%s9] sm:$0x1]
  %v45 = vld [vmem:[%s9 + $0x1] sm:$0x1]
  %vm46 = vcmask 261120
  %v47 = vsel %vm46, %v42, 0.0
  %48 = vadd.xlane.f32.xlu0 %v47
  %v49 = vpop.xlane.xlu0 %48
  %v50 = vsel %vm46, %v43, 0.0
  %51 = vadd.xlane.f32.xlu0 %v50
  %v52 = vpop.xlane.xlu0 %51
  %v53 = vrcp.pop 32.0
  %v54 = vmul.f32 %v49, %v53
  %v55 = vmul.f32 %v52, %v53
  %v56 = vsub.f32 %v42, %v54
  %v57 = vsub.f32 %v43, %v55
  %v58 = vmul.f32 %v56, %v56
  %v59 = vmul.f32 %v57, %v57
  %v60 = vsel %vm46, %v58, 0.0
  %61 = vadd.xlane.f32.xlu0 %v60
  %v62 = vpop.xlane.xlu0 %61
  %v63 = vsel %vm46, %v59, 0.0
  %64 = vadd.xlane.f32.xlu0 %v63
  %v65 = vpop.xlane.xlu0 %64
  %v66 = vmul.f32 %v62, %v53
  %v67 = vmul.f32 %v65, %v53
  %v68 = vadd.f32 %v66, 1e-05
  %v69 = vadd.f32 %v67, 1e-05
  %v70 = vrsqrt.pop %v68
  %v71 = vrsqrt.pop %v69
  %v72 = vmul.f32 %v56, %v70
  %v73 = vmul.f32 %v57, %v71
  %v74 = vlaneseq
  %v75 = vshrl.u32 %v74, 7
  %v76 = vsub.s32 0, %v75
  %v77 = vrot.slane %v44, %v76
  %v78 = vmul.f32 %v72, %v77
  %v79 = vmul.f32 %v73, %v77
  %v80 = vlaneseq
  %v81 = vshrl.u32 %v80, 7
  %v82 = vsub.s32 0, %v81
  %v83 = vrot.slane %v45, %v82
  %v84 = vadd.f32 %v78, %v83
  %v85 = vadd.f32 %v79, %v83
  %v86 = vpack.c.bf16 %v85, %v84
  %v87 = vld [vmem:[%s3] sm:$0xf]
  %v88 = vld [vmem:[%s3 + $0x4] sm:$0xf]
  %v89 = vld [vmem:[%s3 + $0x8] sm:$0xf]
  %v90 = vld [vmem:[%s3 + $0xc] sm:$0xf]
  %v95 = vunpack.c.l.b16 %v87
  %v96 = vunpack.c.l.b16 %v88
  %v97 = vunpack.c.l.b16 %v89
  %v98 = vunpack.c.l.b16 %v90
  %v99 = vpack.c.b16 %v96, %v95
  %v100 = vpack.c.b16 %v98, %v97
  %v104 = vsel %vm46, %v86, 0
  %106 = vmatprep.subr.bf16.mxu0 0
  %107 = vmatpush1.bf16.msra.mxu0 0
  %108 = vmatprep.subr.bf16.mxu0 0
  %109 = vmatpush1.bf16.msra.mxu0 0
  %110 = vmatprep.subr.bf16.mxu0 0
  %111 = vmatpush1.bf16.msra.mxu0 0
  %112 = vmatprep.subr.bf16.mxu0 0
  %113 = vmatpush1.bf16.msra.mxu0 0
  %114 = vmatprep.subr.bf16.mxu0 0
  %115 = vmatpush1.bf16.msra.mxu0 0
  %116 = vmatprep.subr.bf16.mxu0 0
  %117 = vmatpush1.bf16.msra.mxu0 0
  %118 = vmatprep.subr.bf16.mxu0 0
  %119 = vmatpush1.bf16.msra.mxu0 %v100
  %120 = vmatprep.subr.bf16.mxu0 0
  %121 = vmatpush1.bf16.msra.mxu0 %v99
  %122 = vmatprep.subr.bf16.mxu0 0
  %123 = vmatpush2.bf16.msra.mxu0 0
  %124 = vmatprep.subr.bf16.mxu0 0
  %125 = vmatpush2.bf16.msra.mxu0 0
  %126 = vmatprep.subr.bf16.mxu0 0
  %127 = vmatpush2.bf16.msra.mxu0 0
  %128 = vmatprep.subr.bf16.mxu0 0
  %129 = vmatpush2.bf16.msra.mxu0 0
  %130 = vmatprep.subr.bf16.mxu0 0
  %131 = vmatpush2.bf16.msra.mxu0 0
  %132 = vmatprep.subr.bf16.mxu0 0
  %133 = vmatpush2.bf16.msra.mxu0 0
  %134 = vmatprep.subr.bf16.mxu0 0
  %135 = vmatpush2.bf16.msra.mxu0 0
  %136 = vmatprep.subr.bf16.mxu0 0
  %137 = vmatpush2.bf16.msra.mxu0 0
  %138 = vmatprep.mubr.bf16.mxu0 0
  %139 = vmatmul.mubr.bf16.gmra.mxu0 %v104
  %v140 = vpop.f32.mrf.mxu0
  %v141 = vadd.f32 0.0, %v140
  %v142 = vpop.f32.mrf.mxu0
  %v143 = vpop.f32.mrf.mxu0
  %v144 = vadd.f32 0.0, %v143
  %v145 = vpop.f32.mrf.mxu0
  %146 = vdwg.mxu0
  %s147 = scalar_lea.vmem %s3, 64
  %v148 = vld [vmem:[%s147] sm:$0xf]
  %v149 = vld [vmem:[%s147 + $0x4] sm:$0xf]
  %v150 = vld [vmem:[%s147 + $0x8] sm:$0xf]
  %v151 = vld [vmem:[%s147 + $0xc] sm:$0xf]
  %v156 = vunpack.c.l.b16 %v148
  %v157 = vunpack.c.l.b16 %v149
  %v158 = vunpack.c.l.b16 %v150
  %v159 = vunpack.c.l.b16 %v151
  %v160 = vpack.c.b16 %v157, %v156
  %v161 = vpack.c.b16 %v159, %v158
  %164 = vmatprep.subr.bf16.mxu0 0
  %165 = vmatpush1.bf16.msra.mxu0 0
  %166 = vmatprep.subr.bf16.mxu0 0
  %167 = vmatpush1.bf16.msra.mxu0 0
  %168 = vmatprep.subr.bf16.mxu0 0
  %169 = vmatpush1.bf16.msra.mxu0 0
  %170 = vmatprep.subr.bf16.mxu0 0
  %171 = vmatpush1.bf16.msra.mxu0 0
  %172 = vmatprep.subr.bf16.mxu0 0
  %173 = vmatpush1.bf16.msra.mxu0 0
  %174 = vmatprep.subr.bf16.mxu0 0
  %175 = vmatpush1.bf16.msra.mxu0 0
  %176 = vmatprep.subr.bf16.mxu0 0
  %177 = vmatpush1.bf16.msra.mxu0 %v161
  %178 = vmatprep.subr.bf16.mxu0 0
  %179 = vmatpush1.bf16.msra.mxu0 %v160
  %180 = vmatprep.subr.bf16.mxu0 0
  %181 = vmatpush2.bf16.msra.mxu0 0
  %182 = vmatprep.subr.bf16.mxu0 0
  %183 = vmatpush2.bf16.msra.mxu0 0
  %184 = vmatprep.subr.bf16.mxu0 0
  %185 = vmatpush2.bf16.msra.mxu0 0
  %186 = vmatprep.subr.bf16.mxu0 0
  %187 = vmatpush2.bf16.msra.mxu0 0
  %188 = vmatprep.subr.bf16.mxu0 0
  %189 = vmatpush2.bf16.msra.mxu0 0
  %190 = vmatprep.subr.bf16.mxu0 0
  %191 = vmatpush2.bf16.msra.mxu0 0
  %192 = vmatprep.subr.bf16.mxu0 0
  %193 = vmatpush2.bf16.msra.mxu0 0
  %194 = vmatprep.subr.bf16.mxu0 0
  %195 = vmatpush2.bf16.msra.mxu0 0
  %196 = vmatprep.mubr.bf16.mxu0 0
  %197 = vmatmul.mubr.bf16.gmra.mxu0 %v104
  %v198 = vpop.f32.mrf.mxu0
  %v199 = vadd.f32 0.0, %v198
  %v200 = vpop.f32.mrf.mxu0
  %v201 = vpop.f32.mrf.mxu0
  %v202 = vadd.f32 0.0, %v201
  %v203 = vpop.f32.mrf.mxu0
  %204 = vdwg.mxu0
  %s205 = scalar_lea.vmem %s3, 128
  %v206 = vld [vmem:[%s205] sm:$0xf]
  %v207 = vld [vmem:[%s205 + $0x4] sm:$0xf]
  %v208 = vld [vmem:[%s205 + $0x8] sm:$0xf]
  %v209 = vld [vmem:[%s205 + $0xc] sm:$0xf]
  %v214 = vunpack.c.l.b16 %v206
  %v215 = vunpack.c.l.b16 %v207
  %v216 = vunpack.c.l.b16 %v208
  %v217 = vunpack.c.l.b16 %v209
  %v218 = vpack.c.b16 %v215, %v214
  %v219 = vpack.c.b16 %v217, %v216
  %222 = vmatprep.subr.bf16.mxu0 0
  %223 = vmatpush1.bf16.msra.mxu0 0
  %224 = vmatprep.subr.bf16.mxu0 0
  %225 = vmatpush1.bf16.msra.mxu0 0
  %226 = vmatprep.subr.bf16.mxu0 0
  %227 = vmatpush1.bf16.msra.mxu0 0
  %228 = vmatprep.subr.bf16.mxu0 0
  %229 = vmatpush1.bf16.msra.mxu0 0
  %230 = vmatprep.subr.bf16.mxu0 0
  %231 = vmatpush1.bf16.msra.mxu0 0
  %232 = vmatprep.subr.bf16.mxu0 0
  %233 = vmatpush1.bf16.msra.mxu0 0
  %234 = vmatprep.subr.bf16.mxu0 0
  %235 = vmatpush1.bf16.msra.mxu0 %v219
  %236 = vmatprep.subr.bf16.mxu0 0
  %237 = vmatpush1.bf16.msra.mxu0 %v218
  %238 = vmatprep.subr.bf16.mxu0 0
  %239 = vmatpush2.bf16.msra.mxu0 0
  %240 = vmatprep.subr.bf16.mxu0 0
  %241 = vmatpush2.bf16.msra.mxu0 0
  %242 = vmatprep.subr.bf16.mxu0 0
  %243 = vmatpush2.bf16.msra.mxu0 0
  %244 = vmatprep.subr.bf16.mxu0 0
  %245 = vmatpush2.bf16.msra.mxu0 0
  %246 = vmatprep.subr.bf16.mxu0 0
  %247 = vmatpush2.bf16.msra.mxu0 0
  %248 = vmatprep.subr.bf16.mxu0 0
  %249 = vmatpush2.bf16.msra.mxu0 0
  %250 = vmatprep.subr.bf16.mxu0 0
  %251 = vmatpush2.bf16.msra.mxu0 0
  %252 = vmatprep.subr.bf16.mxu0 0
  %253 = vmatpush2.bf16.msra.mxu0 0
  %254 = vmatprep.mubr.bf16.mxu0 0
  %255 = vmatmul.mubr.bf16.gmra.mxu0 %v104
  %v256 = vpop.f32.mrf.mxu0
  %v257 = vadd.f32 0.0, %v256
  %v258 = vpop.f32.mrf.mxu0
  %v259 = vpop.f32.mrf.mxu0
  %v260 = vadd.f32 0.0, %v259
  %v261 = vpop.f32.mrf.mxu0
  %262 = vdwg.mxu0
  %s263 = scalar_lea.vmem %s3, 16
  %v264 = vld [vmem:[%s263] sm:$0xf]
  %v265 = vld [vmem:[%s263 + $0x4] sm:$0xf]
  %v266 = vld [vmem:[%s263 + $0x8] sm:$0xf]
  %v267 = vld [vmem:[%s263 + $0xc] sm:$0xf]
  %v272 = vunpack.c.l.b16 %v264
  %v273 = vunpack.c.l.b16 %v265
  %v274 = vunpack.c.l.b16 %v266
  %v275 = vunpack.c.l.b16 %v267
  %v276 = vpack.c.b16 %v273, %v272
  %v277 = vpack.c.b16 %v275, %v274
  %280 = vmatprep.subr.bf16.mxu0 0
  %281 = vmatpush1.bf16.msra.mxu0 0
  %282 = vmatprep.subr.bf16.mxu0 0
  %283 = vmatpush1.bf16.msra.mxu0 0
  %284 = vmatprep.subr.bf16.mxu0 0
  %285 = vmatpush1.bf16.msra.mxu0 0
  %286 = vmatprep.subr.bf16.mxu0 0
  %287 = vmatpush1.bf16.msra.mxu0 0
  %288 = vmatprep.subr.bf16.mxu0 0
  %289 = vmatpush1.bf16.msra.mxu0 0
  %290 = vmatprep.subr.bf16.mxu0 0
  %291 = vmatpush1.bf16.msra.mxu0 0
  %292 = vmatprep.subr.bf16.mxu0 0
  %293 = vmatpush1.bf16.msra.mxu0 %v277
  %294 = vmatprep.subr.bf16.mxu0 0
  %295 = vmatpush1.bf16.msra.mxu0 %v276
  %296 = vmatprep.subr.bf16.mxu0 0
  %297 = vmatpush2.bf16.msra.mxu0 0
  %298 = vmatprep.subr.bf16.mxu0 0
  %299 = vmatpush2.bf16.msra.mxu0 0
  %300 = vmatprep.subr.bf16.mxu0 0
  %301 = vmatpush2.bf16.msra.mxu0 0
  %302 = vmatprep.subr.bf16.mxu0 0
  %303 = vmatpush2.bf16.msra.mxu0 0
  %304 = vmatprep.subr.bf16.mxu0 0
  %305 = vmatpush2.bf16.msra.mxu0 0
  %306 = vmatprep.subr.bf16.mxu0 0
  %307 = vmatpush2.bf16.msra.mxu0 0
  %308 = vmatprep.subr.bf16.mxu0 0
  %309 = vmatpush2.bf16.msra.mxu0 0
  %310 = vmatprep.subr.bf16.mxu0 0
  %311 = vmatpush2.bf16.msra.mxu0 0
  %312 = vmatprep.mubr.bf16.mxu0 0
  %313 = vmatmul.mubr.bf16.gmra.mxu0 %v104
  %v314 = vpop.f32.mrf.mxu0
  %v315 = vadd.f32 0.0, %v314
  %v316 = vpop.f32.mrf.mxu0
  %v317 = vpop.f32.mrf.mxu0
  %v318 = vadd.f32 0.0, %v317
  %v319 = vpop.f32.mrf.mxu0
  %320 = vdwg.mxu0
  %s321 = scalar_lea.vmem %s3, 80
  %v322 = vld [vmem:[%s321] sm:$0xf]
  %v323 = vld [vmem:[%s321 + $0x4] sm:$0xf]
  %v324 = vld [vmem:[%s321 + $0x8] sm:$0xf]
  %v325 = vld [vmem:[%s321 + $0xc] sm:$0xf]
  %v330 = vunpack.c.l.b16 %v322
  %v331 = vunpack.c.l.b16 %v323
  %v332 = vunpack.c.l.b16 %v324
  %v333 = vunpack.c.l.b16 %v325
  %v334 = vpack.c.b16 %v331, %v330
  %v335 = vpack.c.b16 %v333, %v332
  %338 = vmatprep.subr.bf16.mxu0 0
  %339 = vmatpush1.bf16.msra.mxu0 0
  %340 = vmatprep.subr.bf16.mxu0 0
  %341 = vmatpush1.bf16.msra.mxu0 0
  %342 = vmatprep.subr.bf16.mxu0 0
  %343 = vmatpush1.bf16.msra.mxu0 0
  %344 = vmatprep.subr.bf16.mxu0 0
  %345 = vmatpush1.bf16.msra.mxu0 0
  %346 = vmatprep.subr.bf16.mxu0 0
  %347 = vmatpush1.bf16.msra.mxu0 0
  %348 = vmatprep.subr.bf16.mxu0 0
  %349 = vmatpush1.bf16.msra.mxu0 0
  %350 = vmatprep.subr.bf16.mxu0 0
  %351 = vmatpush1.bf16.msra.mxu0 %v335
  %352 = vmatprep.subr.bf16.mxu0 0
  %353 = vmatpush1.bf16.msra.mxu0 %v334
  %354 = vmatprep.subr.bf16.mxu0 0
  %355 = vmatpush2.bf16.msra.mxu0 0
  %356 = vmatprep.subr.bf16.mxu0 0
  %357 = vmatpush2.bf16.msra.mxu0 0
  %358 = vmatprep.subr.bf16.mxu0 0
  %359 = vmatpush2.bf16.msra.mxu0 0
  %360 = vmatprep.subr.bf16.mxu0 0
  %361 = vmatpush2.bf16.msra.mxu0 0
  %362 = vmatprep.subr.bf16.mxu0 0
  %363 = vmatpush2.bf16.msra.mxu0 0
  %364 = vmatprep.subr.bf16.mxu0 0
  %365 = vmatpush2.bf16.msra.mxu0 0
  %366 = vmatprep.subr.bf16.mxu0 0
  %367 = vmatpush2.bf16.msra.mxu0 0
  %368 = vmatprep.subr.bf16.mxu0 0
  %369 = vmatpush2.bf16.msra.mxu0 0
  %370 = vmatprep.mubr.bf16.mxu0 0
  %371 = vmatmul.mubr.bf16.gmra.mxu0 %v104
  %v372 = vpop.f32.mrf.mxu0
  %v373 = vadd.f32 0.0, %v372
  %v374 = vpop.f32.mrf.mxu0
  %v375 = vpop.f32.mrf.mxu0
  %v376 = vadd.f32 0.0, %v375
  %v377 = vpop.f32.mrf.mxu0
  %378 = vdwg.mxu0
  %s379 = scalar_lea.vmem %s3, 144
  %v380 = vld [vmem:[%s379] sm:$0xf]
  %v381 = vld [vmem:[%s379 + $0x4] sm:$0xf]
  %v382 = vld [vmem:[%s379 + $0x8] sm:$0xf]
  %v383 = vld [vmem:[%s379 + $0xc] sm:$0xf]
  %v388 = vunpack.c.l.b16 %v380
  %v389 = vunpack.c.l.b16 %v381
  %v390 = vunpack.c.l.b16 %v382
  %v391 = vunpack.c.l.b16 %v383
  %v392 = vpack.c.b16 %v389, %v388
  %v393 = vpack.c.b16 %v391, %v390
  %396 = vmatprep.subr.bf16.mxu0 0
  %397 = vmatpush1.bf16.msra.mxu0 0
  %398 = vmatprep.subr.bf16.mxu0 0
  %399 = vmatpush1.bf16.msra.mxu0 0
  %400 = vmatprep.subr.bf16.mxu0 0
  %401 = vmatpush1.bf16.msra.mxu0 0
  %402 = vmatprep.subr.bf16.mxu0 0
  %403 = vmatpush1.bf16.msra.mxu0 0
  %404 = vmatprep.subr.bf16.mxu0 0
  %405 = vmatpush1.bf16.msra.mxu0 0
  %406 = vmatprep.subr.bf16.mxu0 0
  %407 = vmatpush1.bf16.msra.mxu0 0
  %408 = vmatprep.subr.bf16.mxu0 0
  %409 = vmatpush1.bf16.msra.mxu0 %v393
  %410 = vmatprep.subr.bf16.mxu0 0
  %411 = vmatpush1.bf16.msra.mxu0 %v392
  %412 = vmatprep.subr.bf16.mxu0 0
  %413 = vmatpush2.bf16.msra.mxu0 0
  %414 = vmatprep.subr.bf16.mxu0 0
  %415 = vmatpush2.bf16.msra.mxu0 0
  %416 = vmatprep.subr.bf16.mxu0 0
  %417 = vmatpush2.bf16.msra.mxu0 0
  %418 = vmatprep.subr.bf16.mxu0 0
  %419 = vmatpush2.bf16.msra.mxu0 0
  %420 = vmatprep.subr.bf16.mxu0 0
  %421 = vmatpush2.bf16.msra.mxu0 0
  %422 = vmatprep.subr.bf16.mxu0 0
  %423 = vmatpush2.bf16.msra.mxu0 0
  %424 = vmatprep.subr.bf16.mxu0 0
  %425 = vmatpush2.bf16.msra.mxu0 0
  %426 = vmatprep.subr.bf16.mxu0 0
  %427 = vmatpush2.bf16.msra.mxu0 0
  %428 = vmatprep.mubr.bf16.mxu0 0
  %429 = vmatmul.mubr.bf16.gmra.mxu0 %v104
  %v430 = vpop.f32.mrf.mxu0
  %v431 = vadd.f32 0.0, %v430
  %v432 = vpop.f32.mrf.mxu0
  %v433 = vpop.f32.mrf.mxu0
  %v434 = vadd.f32 0.0, %v433
  %v435 = vpop.f32.mrf.mxu0
  %436 = vdwg.mxu0
  %s437 = scalar_lea.vmem %s3, 32
  %v438 = vld [vmem:[%s437] sm:$0xf]
  %v439 = vld [vmem:[%s437 + $0x4] sm:$0xf]
  %v440 = vld [vmem:[%s437 + $0x8] sm:$0xf]
  %v441 = vld [vmem:[%s437 + $0xc] sm:$0xf]
  %v446 = vunpack.c.l.b16 %v438
  %v447 = vunpack.c.l.b16 %v439
  %v448 = vunpack.c.l.b16 %v440
  %v449 = vunpack.c.l.b16 %v441
  %v450 = vpack.c.b16 %v447, %v446
  %v451 = vpack.c.b16 %v449, %v448
  %454 = vmatprep.subr.bf16.mxu0 0
  %455 = vmatpush1.bf16.msra.mxu0 0
  %456 = vmatprep.subr.bf16.mxu0 0
  %457 = vmatpush1.bf16.msra.mxu0 0
  %458 = vmatprep.subr.bf16.mxu0 0
  %459 = vmatpush1.bf16.msra.mxu0 0
  %460 = vmatprep.subr.bf16.mxu0 0
  %461 = vmatpush1.bf16.msra.mxu0 0
  %462 = vmatprep.subr.bf16.mxu0 0
  %463 = vmatpush1.bf16.msra.mxu0 0
  %464 = vmatprep.subr.bf16.mxu0 0
  %465 = vmatpush1.bf16.msra.mxu0 0
  %466 = vmatprep.subr.bf16.mxu0 0
  %467 = vmatpush1.bf16.msra.mxu0 %v451
  %468 = vmatprep.subr.bf16.mxu0 0
  %469 = vmatpush1.bf16.msra.mxu0 %v450
  %470 = vmatprep.subr.bf16.mxu0 0
  %471 = vmatpush2.bf16.msra.mxu0 0
  %472 = vmatprep.subr.bf16.mxu0 0
  %473 = vmatpush2.bf16.msra.mxu0 0
  %474 = vmatprep.subr.bf16.mxu0 0
  %475 = vmatpush2.bf16.msra.mxu0 0
  %476 = vmatprep.subr.bf16.mxu0 0
  %477 = vmatpush2.bf16.msra.mxu0 0
  %478 = vmatprep.subr.bf16.mxu0 0
  %479 = vmatpush2.bf16.msra.mxu0 0
  %480 = vmatprep.subr.bf16.mxu0 0
  %481 = vmatpush2.bf16.msra.mxu0 0
  %482 = vmatprep.subr.bf16.mxu0 0
  %483 = vmatpush2.bf16.msra.mxu0 0
  %484 = vmatprep.subr.bf16.mxu0 0
  %485 = vmatpush2.bf16.msra.mxu0 0
  %486 = vmatprep.mubr.bf16.mxu0 0
  %487 = vmatmul.mubr.bf16.gmra.mxu0 %v104
  %v488 = vpop.f32.mrf.mxu0
  %v489 = vadd.f32 0.0, %v488
  %v490 = vpop.f32.mrf.mxu0
  %v491 = vpop.f32.mrf.mxu0
  %v492 = vadd.f32 0.0, %v491
  %v493 = vpop.f32.mrf.mxu0
  %494 = vdwg.mxu0
  %s495 = scalar_lea.vmem %s3, 96
  %v496 = vld [vmem:[%s495] sm:$0xf]
  %v497 = vld [vmem:[%s495 + $0x4] sm:$0xf]
  %v498 = vld [vmem:[%s495 + $0x8] sm:$0xf]
  %v499 = vld [vmem:[%s495 + $0xc] sm:$0xf]
  %v504 = vunpack.c.l.b16 %v496
  %v505 = vunpack.c.l.b16 %v497
  %v506 = vunpack.c.l.b16 %v498
  %v507 = vunpack.c.l.b16 %v499
  %v508 = vpack.c.b16 %v505, %v504
  %v509 = vpack.c.b16 %v507, %v506
  %512 = vmatprep.subr.bf16.mxu0 0
  %513 = vmatpush1.bf16.msra.mxu0 0
  %514 = vmatprep.subr.bf16.mxu0 0
  %515 = vmatpush1.bf16.msra.mxu0 0
  %516 = vmatprep.subr.bf16.mxu0 0
  %517 = vmatpush1.bf16.msra.mxu0 0
  %518 = vmatprep.subr.bf16.mxu0 0
  %519 = vmatpush1.bf16.msra.mxu0 0
  %520 = vmatprep.subr.bf16.mxu0 0
  %521 = vmatpush1.bf16.msra.mxu0 0
  %522 = vmatprep.subr.bf16.mxu0 0
  %523 = vmatpush1.bf16.msra.mxu0 0
  %524 = vmatprep.subr.bf16.mxu0 0
  %525 = vmatpush1.bf16.msra.mxu0 %v509
  %526 = vmatprep.subr.bf16.mxu0 0
  %527 = vmatpush1.bf16.msra.mxu0 %v508
  %528 = vmatprep.subr.bf16.mxu0 0
  %529 = vmatpush2.bf16.msra.mxu0 0
  %530 = vmatprep.subr.bf16.mxu0 0
  %531 = vmatpush2.bf16.msra.mxu0 0
  %532 = vmatprep.subr.bf16.mxu0 0
  %533 = vmatpush2.bf16.msra.mxu0 0
  %534 = vmatprep.subr.bf16.mxu0 0
  %535 = vmatpush2.bf16.msra.mxu0 0
  %536 = vmatprep.subr.bf16.mxu0 0
  %537 = vmatpush2.bf16.msra.mxu0 0
  %538 = vmatprep.subr.bf16.mxu0 0
  %539 = vmatpush2.bf16.msra.mxu0 0
  %540 = vmatprep.subr.bf16.mxu0 0
  %541 = vmatpush2.bf16.msra.mxu0 0
  %542 = vmatprep.subr.bf16.mxu0 0
  %543 = vmatpush2.bf16.msra.mxu0 0
  %544 = vmatprep.mubr.bf16.mxu0 0
  %545 = vmatmul.mubr.bf16.gmra.mxu0 %v104
  %v546 = vpop.f32.mrf.mxu0
  %v547 = vadd.f32 0.0, %v546
  %v548 = vpop.f32.mrf.mxu0
  %v549 = vpop.f32.mrf.mxu0
  %v550 = vadd.f32 0.0, %v549
  %v551 = vpop.f32.mrf.mxu0
  %552 = vdwg.mxu0
  %s553 = scalar_lea.vmem %s3, 160
  %v554 = vld [vmem:[%s553] sm:$0xf]
  %v555 = vld [vmem:[%s553 + $0x4] sm:$0xf]
  %v556 = vld [vmem:[%s553 + $0x8] sm:$0xf]
  %v557 = vld [vmem:[%s553 + $0xc] sm:$0xf]
  %v562 = vunpack.c.l.b16 %v554
  %v563 = vunpack.c.l.b16 %v555
  %v564 = vunpack.c.l.b16 %v556
  %v565 = vunpack.c.l.b16 %v557
  %v566 = vpack.c.b16 %v563, %v562
  %v567 = vpack.c.b16 %v565, %v564
  %570 = vmatprep.subr.bf16.mxu0 0
  %571 = vmatpush1.bf16.msra.mxu0 0
  %572 = vmatprep.subr.bf16.mxu0 0
  %573 = vmatpush1.bf16.msra.mxu0 0
  %574 = vmatprep.subr.bf16.mxu0 0
  %575 = vmatpush1.bf16.msra.mxu0 0
  %576 = vmatprep.subr.bf16.mxu0 0
  %577 = vmatpush1.bf16.msra.mxu0 0
  %578 = vmatprep.subr.bf16.mxu0 0
  %579 = vmatpush1.bf16.msra.mxu0 0
  %580 = vmatprep.subr.bf16.mxu0 0
  %581 = vmatpush1.bf16.msra.mxu0 0
  %582 = vmatprep.subr.bf16.mxu0 0
  %583 = vmatpush1.bf16.msra.mxu0 %v567
  %584 = vmatprep.subr.bf16.mxu0 0
  %585 = vmatpush1.bf16.msra.mxu0 %v566
  %586 = vmatprep.subr.bf16.mxu0 0
  %587 = vmatpush2.bf16.msra.mxu0 0
  %588 = vmatprep.subr.bf16.mxu0 0
  %589 = vmatpush2.bf16.msra.mxu0 0
  %590 = vmatprep.subr.bf16.mxu0 0
  %591 = vmatpush2.bf16.msra.mxu0 0
  %592 = vmatprep.subr.bf16.mxu0 0
  %593 = vmatpush2.bf16.msra.mxu0 0
  %594 = vmatprep.subr.bf16.mxu0 0
  %595 = vmatpush2.bf16.msra.mxu0 0
  %596 = vmatprep.subr.bf16.mxu0 0
  %597 = vmatpush2.bf16.msra.mxu0 0
  %598 = vmatprep.subr.bf16.mxu0 0
  %599 = vmatpush2.bf16.msra.mxu0 0
  %600 = vmatprep.subr.bf16.mxu0 0
  %601 = vmatpush2.bf16.msra.mxu0 0
  %602 = vmatprep.mubr.bf16.mxu0 0
  %603 = vmatmul.mubr.bf16.gmra.mxu0 %v104
  %v604 = vpop.f32.mrf.mxu0
  %v605 = vadd.f32 0.0, %v604
  %v606 = vpop.f32.mrf.mxu0
  %v607 = vpop.f32.mrf.mxu0
  %v608 = vadd.f32 0.0, %v607
  %v609 = vpop.f32.mrf.mxu0
  %610 = vdwg.mxu0
  %s611 = scalar_lea.vmem %s3, 48
  %v612 = vld [vmem:[%s611] sm:$0xf]
  %v613 = vld [vmem:[%s611 + $0x4] sm:$0xf]
  %v614 = vld [vmem:[%s611 + $0x8] sm:$0xf]
  %v615 = vld [vmem:[%s611 + $0xc] sm:$0xf]
  %v620 = vunpack.c.l.b16 %v612
  %v621 = vunpack.c.l.b16 %v613
  %v622 = vunpack.c.l.b16 %v614
  %v623 = vunpack.c.l.b16 %v615
  %v624 = vpack.c.b16 %v621, %v620
  %v625 = vpack.c.b16 %v623, %v622
  %628 = vmatprep.subr.bf16.mxu0 0
  %629 = vmatpush1.bf16.msra.mxu0 0
  %630 = vmatprep.subr.bf16.mxu0 0
  %631 = vmatpush1.bf16.msra.mxu0 0
  %632 = vmatprep.subr.bf16.mxu0 0
  %633 = vmatpush1.bf16.msra.mxu0 0
  %634 = vmatprep.subr.bf16.mxu0 0
  %635 = vmatpush1.bf16.msra.mxu0 0
  %636 = vmatprep.subr.bf16.mxu0 0
  %637 = vmatpush1.bf16.msra.mxu0 0
  %638 = vmatprep.subr.bf16.mxu0 0
  %639 = vmatpush1.bf16.msra.mxu0 0
  %640 = vmatprep.subr.bf16.mxu0 0
  %641 = vmatpush1.bf16.msra.mxu0 %v625
  %642 = vmatprep.subr.bf16.mxu0 0
  %643 = vmatpush1.bf16.msra.mxu0 %v624
  %644 = vmatprep.subr.bf16.mxu0 0
  %645 = vmatpush2.bf16.msra.mxu0 0
  %646 = vmatprep.subr.bf16.mxu0 0
  %647 = vmatpush2.bf16.msra.mxu0 0
  %648 = vmatprep.subr.bf16.mxu0 0
  %649 = vmatpush2.bf16.msra.mxu0 0
  %650 = vmatprep.subr.bf16.mxu0 0
  %651 = vmatpush2.bf16.msra.mxu0 0
  %652 = vmatprep.subr.bf16.mxu0 0
  %653 = vmatpush2.bf16.msra.mxu0 0
  %654 = vmatprep.subr.bf16.mxu0 0
  %655 = vmatpush2.bf16.msra.mxu0 0
  %656 = vmatprep.subr.bf16.mxu0 0
  %657 = vmatpush2.bf16.msra.mxu0 0
  %658 = vmatprep.subr.bf16.mxu0 0
  %659 = vmatpush2.bf16.msra.mxu0 0
  %660 = vmatprep.mubr.bf16.mxu0 0
  %661 = vmatmul.mubr.bf16.gmra.mxu0 %v104
  %v662 = vpop.f32.mrf.mxu0
  %v663 = vadd.f32 0.0, %v662
  %v664 = vpop.f32.mrf.mxu0
  %v665 = vpop.f32.mrf.mxu0
  %v666 = vadd.f32 0.0, %v665
  %v667 = vpop.f32.mrf.mxu0
  %668 = vdwg.mxu0
  %s669 = scalar_lea.vmem %s3, 112
  %v670 = vld [vmem:[%s669] sm:$0xf]
  %v671 = vld [vmem:[%s669 + $0x4] sm:$0xf]
  %v672 = vld [vmem:[%s669 + $0x8] sm:$0xf]
  %v673 = vld [vmem:[%s669 + $0xc] sm:$0xf]
  %v678 = vunpack.c.l.b16 %v670
  %v679 = vunpack.c.l.b16 %v671
  %v680 = vunpack.c.l.b16 %v672
  %v681 = vunpack.c.l.b16 %v673
  %v682 = vpack.c.b16 %v679, %v678
  %v683 = vpack.c.b16 %v681, %v680
  %686 = vmatprep.subr.bf16.mxu0 0
  %687 = vmatpush1.bf16.msra.mxu0 0
  %688 = vmatprep.subr.bf16.mxu0 0
  %689 = vmatpush1.bf16.msra.mxu0 0
  %690 = vmatprep.subr.bf16.mxu0 0
  %691 = vmatpush1.bf16.msra.mxu0 0
  %692 = vmatprep.subr.bf16.mxu0 0
  %693 = vmatpush1.bf16.msra.mxu0 0
  %694 = vmatprep.subr.bf16.mxu0 0
  %695 = vmatpush1.bf16.msra.mxu0 0
  %696 = vmatprep.subr.bf16.mxu0 0
  %697 = vmatpush1.bf16.msra.mxu0 0
  %698 = vmatprep.subr.bf16.mxu0 0
  %699 = vmatpush1.bf16.msra.mxu0 %v683
  %700 = vmatprep.subr.bf16.mxu0 0
  %701 = vmatpush1.bf16.msra.mxu0 %v682
  %702 = vmatprep.subr.bf16.mxu0 0
  %703 = vmatpush2.bf16.msra.mxu0 0
  %704 = vmatprep.subr.bf16.mxu0 0
  %705 = vmatpush2.bf16.msra.mxu0 0
  %706 = vmatprep.subr.bf16.mxu0 0
  %707 = vmatpush2.bf16.msra.mxu0 0
  %708 = vmatprep.subr.bf16.mxu0 0
  %709 = vmatpush2.bf16.msra.mxu0 0
  %710 = vmatprep.subr.bf16.mxu0 0
  %711 = vmatpush2.bf16.msra.mxu0 0
  %712 = vmatprep.subr.bf16.mxu0 0
  %713 = vmatpush2.bf16.msra.mxu0 0
  %714 = vmatprep.subr.bf16.mxu0 0
  %715 = vmatpush2.bf16.msra.mxu0 0
  %716 = vmatprep.subr.bf16.mxu0 0
  %717 = vmatpush2.bf16.msra.mxu0 0
  %718 = vmatprep.mubr.bf16.mxu0 0
  %719 = vmatmul.mubr.bf16.gmra.mxu0 %v104
  %v720 = vpop.f32.mrf.mxu0
  %v721 = vadd.f32 0.0, %v720
  %v722 = vpop.f32.mrf.mxu0
  %v723 = vpop.f32.mrf.mxu0
  %v724 = vadd.f32 0.0, %v723
  %v725 = vpop.f32.mrf.mxu0
  %726 = vdwg.mxu0
  %s727 = scalar_lea.vmem %s3, 176
  %v728 = vld [vmem:[%s727] sm:$0xf]
  %v729 = vld [vmem:[%s727 + $0x4] sm:$0xf]
  %v730 = vld [vmem:[%s727 + $0x8] sm:$0xf]
  %v731 = vld [vmem:[%s727 + $0xc] sm:$0xf]
  %v736 = vunpack.c.l.b16 %v728
  %v737 = vunpack.c.l.b16 %v729
  %v738 = vunpack.c.l.b16 %v730
  %v739 = vunpack.c.l.b16 %v731
  %v740 = vpack.c.b16 %v737, %v736
  %v741 = vpack.c.b16 %v739, %v738
  %744 = vmatprep.subr.bf16.mxu0 0
  %745 = vmatpush1.bf16.msra.mxu0 0
  %746 = vmatprep.subr.bf16.mxu0 0
  %747 = vmatpush1.bf16.msra.mxu0 0
  %748 = vmatprep.subr.bf16.mxu0 0
  %749 = vmatpush1.bf16.msra.mxu0 0
  %750 = vmatprep.subr.bf16.mxu0 0
  %751 = vmatpush1.bf16.msra.mxu0 0
  %752 = vmatprep.subr.bf16.mxu0 0
  %753 = vmatpush1.bf16.msra.mxu0 0
  %754 = vmatprep.subr.bf16.mxu0 0
  %755 = vmatpush1.bf16.msra.mxu0 0
  %756 = vmatprep.subr.bf16.mxu0 0
  %757 = vmatpush1.bf16.msra.mxu0 %v741
  %758 = vmatprep.subr.bf16.mxu0 0
  %759 = vmatpush1.bf16.msra.mxu0 %v740
  %760 = vmatprep.subr.bf16.mxu0 0
  %761 = vmatpush2.bf16.msra.mxu0 0
  %762 = vmatprep.subr.bf16.mxu0 0
  %763 = vmatpush2.bf16.msra.mxu0 0
  %764 = vmatprep.subr.bf16.mxu0 0
  %765 = vmatpush2.bf16.msra.mxu0 0
  %766 = vmatprep.subr.bf16.mxu0 0
  %767 = vmatpush2.bf16.msra.mxu0 0
  %768 = vmatprep.subr.bf16.mxu0 0
  %769 = vmatpush2.bf16.msra.mxu0 0
  %770 = vmatprep.subr.bf16.mxu0 0
  %771 = vmatpush2.bf16.msra.mxu0 0
  %772 = vmatprep.subr.bf16.mxu0 0
  %773 = vmatpush2.bf16.msra.mxu0 0
  %774 = vmatprep.subr.bf16.mxu0 0
  %775 = vmatpush2.bf16.msra.mxu0 0
  %776 = vmatprep.mubr.bf16.mxu0 0
  %777 = vmatmul.mubr.bf16.gmra.mxu0 %v104
  %v778 = vpop.f32.mrf.mxu0
  %v779 = vadd.f32 0.0, %v778
  %v780 = vpop.f32.mrf.mxu0
  %v781 = vpop.f32.mrf.mxu0
  %v782 = vadd.f32 0.0, %v781
  %v783 = vpop.f32.mrf.mxu0
  %784 = vdwg.mxu0
  %v785 = vld [vmem:[%s4] sm:$0xff]
  %v786 = vld [vmem:[%s4 + $0x8] sm:$0xff]
  %v787 = vld [vmem:[%s4 + $0x10] sm:$0xff]
  %v788 = vld [vmem:[%s4 + $0x18] sm:$0xff]
  %v789 = vld [vmem:[%s4 + $0x20] sm:$0xff]
  %v790 = vld [vmem:[%s4 + $0x28] sm:$0xff]
  %v791 = vld [vmem:[%s4 + $0x30] sm:$0xff]
  %v792 = vld [vmem:[%s4 + $0x38] sm:$0xff]
  %v793 = vadd.f32 %v141, %v785
  %v794 = vadd.f32 %v144, %v786
  %v795 = vadd.f32 %v315, %v787
  %v796 = vadd.f32 %v318, %v788
  %v797 = vadd.f32 %v489, %v789
  %v798 = vadd.f32 %v492, %v790
  %v799 = vadd.f32 %v663, %v791
  %v800 = vadd.f32 %v666, %v792
  %s801 = scalar_lea.vmem %s4, 64
  %v802 = vld [vmem:[%s801] sm:$0xff]
  %v803 = vld [vmem:[%s801 + $0x8] sm:$0xff]
  %v804 = vld [vmem:[%s801 + $0x10] sm:$0xff]
  %v805 = vld [vmem:[%s801 + $0x18] sm:$0xff]
  %v806 = vld [vmem:[%s801 + $0x20] sm:$0xff]
  %v807 = vld [vmem:[%s801 + $0x28] sm:$0xff]
  %v808 = vld [vmem:[%s801 + $0x30] sm:$0xff]
  %v809 = vld [vmem:[%s801 + $0x38] sm:$0xff]
  %v810 = vadd.f32 %v199, %v802
  %v811 = vadd.f32 %v202, %v803
  %v812 = vadd.f32 %v373, %v804
  %v813 = vadd.f32 %v376, %v805
  %v814 = vadd.f32 %v547, %v806
  %v815 = vadd.f32 %v550, %v807
  %v816 = vadd.f32 %v721, %v808
  %v817 = vadd.f32 %v724, %v809
  %s818 = scalar_lea.vmem %s4, 128
  %v819 = vld [vmem:[%s818] sm:$0xff]
  %v820 = vld [vmem:[%s818 + $0x8] sm:$0xff]
  %v821 = vld [vmem:[%s818 + $0x10] sm:$0xff]
  %v822 = vld [vmem:[%s818 + $0x18] sm:$0xff]
  %v823 = vld [vmem:[%s818 + $0x20] sm:$0xff]
  %v824 = vld [vmem:[%s818 + $0x28] sm:$0xff]
  %v825 = vld [vmem:[%s818 + $0x30] sm:$0xff]
  %v826 = vld [vmem:[%s818 + $0x38] sm:$0xff]
  %v827 = vadd.f32 %v257, %v819
  %v828 = vadd.f32 %v260, %v820
  %v829 = vadd.f32 %v431, %v821
  %v830 = vadd.f32 %v434, %v822
  %v831 = vadd.f32 %v605, %v823
  %v832 = vadd.f32 %v608, %v824
  %v833 = vadd.f32 %v779, %v825
  %v834 = vadd.f32 %v782, %v826
  %v835 = vpack.c.bf16 %v794, %v793
  %v836 = vpack.c.bf16 %v796, %v795
  %v837 = vpack.c.bf16 %v798, %v797
  %v838 = vpack.c.bf16 %v800, %v799
  %v839 = vpack.c.bf16 %v811, %v810
  %v840 = vpack.c.bf16 %v813, %v812
  %v841 = vpack.c.bf16 %v815, %v814
  %v842 = vpack.c.bf16 %v817, %v816
  %v843 = vld [vmem:[%s1] sm:$0xff]
  %v844 = vld [vmem:[%s1 + $0x8] sm:$0xff]
  %v845 = vld [vmem:[%s1 + $0x10] sm:$0xff]
  %v846 = vld [vmem:[%s1 + $0x18] sm:$0xff]
  %v847 = vld [vmem:[%s1 + $0x20] sm:$0xff]
  %v848 = vld [vmem:[%s1 + $0x28] sm:$0xff]
  %v849 = vld [vmem:[%s1 + $0x30] sm:$0xff]
  %v850 = vld [vmem:[%s1 + $0x38] sm:$0xff]
  %vm851 = vcmask 64512
  %v853 = vsel %vm851, %v835, 0
  %v856 = vsel %vm851, %v836, 0
  %v859 = vsel %vm851, %v837, 0
  %v862 = vsel %vm851, %v838, 0
  %v865 = vsel %vm851, %v839, 0
  %v868 = vsel %vm851, %v840, 0
  %v871 = vsel %vm851, %v841, 0
  %v874 = vsel %vm851, %v842, 0
  %876 = vmatprep.subr.bf16.mxu0 0
  %877 = vmatpush1.bf16.xpose.msra.mxu0 0
  %878 = vmatprep.subr.bf16.mxu0 0
  %879 = vmatpush1.bf16.xpose.msra.mxu0 0
  %880 = vmatprep.subr.bf16.mxu0 0
  %881 = vmatpush1.bf16.xpose.msra.mxu0 0
  %882 = vmatprep.subr.bf16.mxu0 0
  %883 = vmatpush1.bf16.xpose.msra.mxu0 0
  %884 = vmatprep.subr.bf16.mxu0 0
  %885 = vmatpush1.bf16.xpose.msra.mxu0 %v874
  %886 = vmatprep.subr.bf16.mxu0 0
  %887 = vmatpush1.bf16.xpose.msra.mxu0 %v871
  %888 = vmatprep.subr.bf16.mxu0 0
  %889 = vmatpush1.bf16.xpose.msra.mxu0 %v868
  %890 = vmatprep.subr.bf16.mxu0 0
  %891 = vmatpush1.bf16.xpose.msra.mxu0 %v865
  %892 = vmatprep.subr.bf16.mxu0 0
  %893 = vmatpush2.bf16.xpose.msra.mxu0 0
  %894 = vmatprep.subr.bf16.mxu0 0
  %895 = vmatpush2.bf16.xpose.msra.mxu0 0
  %896 = vmatprep.subr.bf16.mxu0 0
  %897 = vmatpush2.bf16.xpose.msra.mxu0 0
  %898 = vmatprep.subr.bf16.mxu0 0
  %899 = vmatpush2.bf16.xpose.msra.mxu0 0
  %900 = vmatprep.subr.bf16.mxu0 0
  %901 = vmatpush2.bf16.xpose.msra.mxu0 0
  %902 = vmatprep.subr.bf16.mxu0 0
  %903 = vmatpush2.bf16.xpose.msra.mxu0 0
  %904 = vmatprep.subr.bf16.mxu0 0
  %905 = vmatpush2.bf16.xpose.msra.mxu0 0
  %906 = vmatprep.subr.bf16.mxu0 0
  %907 = vmatpush2.bf16.xpose.msra.mxu0 0
  %908 = vmatprep.mubr.bf16.mxu0 0
  %909 = vmatmul.mubr.bf16.gmra.mxu0 %v853
  %v910 = vpop.f32.mrf.mxu0
  %v911 = vadd.f32 %v843, %v910
  %v912 = vpop.f32.mrf.mxu0
  %v913 = vpop.f32.mrf.mxu0
  %v914 = vadd.f32 %v844, %v913
  %v915 = vpop.f32.mrf.mxu0
  %916 = vmatprep.mubr.bf16.mxu0 0
  %917 = vmatmul.mubr.bf16.gmra.mxu0 %v856
  %v918 = vpop.f32.mrf.mxu0
  %v919 = vadd.f32 %v845, %v918
  %v920 = vpop.f32.mrf.mxu0
  %v921 = vpop.f32.mrf.mxu0
  %v922 = vadd.f32 %v846, %v921
  %v923 = vpop.f32.mrf.mxu0
  %924 = vmatprep.mubr.bf16.mxu0 0
  %925 = vmatmul.mubr.bf16.gmra.mxu0 %v859
  %v926 = vpop.f32.mrf.mxu0
  %v927 = vadd.f32 %v847, %v926
  %v928 = vpop.f32.mrf.mxu0
  %v929 = vpop.f32.mrf.mxu0
  %v930 = vadd.f32 %v848, %v929
  %v931 = vpop.f32.mrf.mxu0
  %932 = vmatprep.mubr.bf16.mxu0 0
  %933 = vmatmul.mubr.bf16.gmra.mxu0 %v862
  %v934 = vpop.f32.mrf.mxu0
  %v935 = vadd.f32 %v849, %v934
  %v936 = vpop.f32.mrf.mxu0
  %v937 = vpop.f32.mrf.mxu0
  %v938 = vadd.f32 %v850, %v937
  %v939 = vpop.f32.mrf.mxu0
  %940 = vdwg.mxu0
  %vm941 = vcmask 523264
  %v942 = vsel %vm941, %v911, -inf
  %943 = vmax.xlane.f32.xlu0 %v942
  %v944 = vpop.xlane.xlu0 %943
  %v945 = vsel %vm941, %v914, -inf
  %946 = vmax.xlane.f32.xlu0 %v945
  %v947 = vpop.xlane.xlu0 %946
  %v948 = vsel %vm941, %v919, -inf
  %949 = vmax.xlane.f32.xlu0 %v948
  %v950 = vpop.xlane.xlu0 %949
  %v951 = vsel %vm941, %v922, -inf
  %952 = vmax.xlane.f32.xlu0 %v951
  %v953 = vpop.xlane.xlu0 %952
  %v954 = vsel %vm941, %v927, -inf
  %955 = vmax.xlane.f32.xlu0 %v954
  %v956 = vpop.xlane.xlu0 %955
  %v957 = vsel %vm941, %v930, -inf
  %958 = vmax.xlane.f32.xlu0 %v957
  %v959 = vpop.xlane.xlu0 %958
  %v960 = vsel %vm941, %v935, -inf
  %961 = vmax.xlane.f32.xlu0 %v960
  %v962 = vpop.xlane.xlu0 %961
  %v963 = vsel %vm941, %v938, -inf
  %964 = vmax.xlane.f32.xlu0 %v963
  %v965 = vpop.xlane.xlu0 %964
  %v966 = vsub.f32 %v911, %v944
  %v967 = vsub.f32 %v914, %v947
  %v968 = vsub.f32 %v919, %v950
  %v969 = vsub.f32 %v922, %v953
  %v970 = vsub.f32 %v927, %v956
  %v971 = vsub.f32 %v930, %v959
  %v972 = vsub.f32 %v935, %v962
  %v973 = vsub.f32 %v938, %v965
  %v974 = vmul.f32 %v966, 1.442695
  %v975 = vpow.pop %v974
  %v976 = vmul.f32 %v967, 1.442695
  %v977 = vpow.pop %v976
  %v978 = vmul.f32 %v968, 1.442695
  %v979 = vpow.pop %v978
  %v980 = vmul.f32 %v969, 1.442695
  %v981 = vpow.pop %v980
  %v982 = vmul.f32 %v970, 1.442695
  %v983 = vpow.pop %v982
  %v984 = vmul.f32 %v971, 1.442695
  %v985 = vpow.pop %v984
  %v986 = vmul.f32 %v972, 1.442695
  %v987 = vpow.pop %v986
  %v988 = vmul.f32 %v973, 1.442695
  %v989 = vpow.pop %v988
  %v990 = vsel %vm941, %v975, 0.0
  %991 = vadd.xlane.f32.xlu0 %v990
  %v992 = vpop.xlane.xlu0 %991
  %v993 = vsel %vm941, %v977, 0.0
  %994 = vadd.xlane.f32.xlu0 %v993
  %v995 = vpop.xlane.xlu0 %994
  %v996 = vsel %vm941, %v979, 0.0
  %997 = vadd.xlane.f32.xlu0 %v996
  %v998 = vpop.xlane.xlu0 %997
  %v999 = vsel %vm941, %v981, 0.0
  %1000 = vadd.xlane.f32.xlu0 %v999
  %v1001 = vpop.xlane.xlu0 %1000
  %v1002 = vsel %vm941, %v983, 0.0
  %1003 = vadd.xlane.f32.xlu0 %v1002
  %v1004 = vpop.xlane.xlu0 %1003
  %v1005 = vsel %vm941, %v985, 0.0
  %1006 = vadd.xlane.f32.xlu0 %v1005
  %v1007 = vpop.xlane.xlu0 %1006
  %v1008 = vsel %vm941, %v987, 0.0
  %1009 = vadd.xlane.f32.xlu0 %v1008
  %v1010 = vpop.xlane.xlu0 %1009
  %v1011 = vsel %vm941, %v989, 0.0
  %1012 = vadd.xlane.f32.xlu0 %v1011
  %v1013 = vpop.xlane.xlu0 %1012
  %v1014 = vrcp.pop %v992
  %v1015 = vmul.f32 %v975, %v1014
  %v1016 = vrcp.pop %v995
  %v1017 = vmul.f32 %v977, %v1016
  %v1018 = vrcp.pop %v998
  %v1019 = vmul.f32 %v979, %v1018
  %v1020 = vrcp.pop %v1001
  %v1021 = vmul.f32 %v981, %v1020
  %v1022 = vrcp.pop %v1004
  %v1023 = vmul.f32 %v983, %v1022
  %v1024 = vrcp.pop %v1007
  %v1025 = vmul.f32 %v985, %v1024
  %v1026 = vrcp.pop %v1010
  %v1027 = vmul.f32 %v987, %v1026
  %v1028 = vrcp.pop %v1013
  %v1029 = vmul.f32 %v989, %v1028
  %v1030 = vpack.c.bf16 %v1017, %v1015
  %v1031 = vpack.c.bf16 %v1021, %v1019
  %v1032 = vpack.c.bf16 %v1025, %v1023
  %v1033 = vpack.c.bf16 %v1029, %v1027
  %v1034 = vpack.c.bf16 %v828, %v827
  %v1035 = vpack.c.bf16 %v830, %v829
  %v1036 = vpack.c.bf16 %v832, %v831
  %v1037 = vpack.c.bf16 %v834, %v833
  %v1039 = vsel %vm941, %v1030, 0
  %v1042 = vsel %vm941, %v1031, 0
  %v1045 = vsel %vm941, %v1032, 0
  %v1048 = vsel %vm941, %v1033, 0
  %1050 = vmatprep.subr.bf16.mxu0 0
  %1051 = vmatpush1.bf16.msra.mxu0 0
  %1052 = vmatprep.subr.bf16.mxu0 0
  %1053 = vmatpush1.bf16.msra.mxu0 0
  %1054 = vmatprep.subr.bf16.mxu0 0
  %1055 = vmatpush1.bf16.msra.mxu0 0
  %1056 = vmatprep.subr.bf16.mxu0 0
  %1057 = vmatpush1.bf16.msra.mxu0 0
  %1058 = vmatprep.subr.bf16.mxu0 0
  %1059 = vmatpush1.bf16.msra.mxu0 %v1037
  %1060 = vmatprep.subr.bf16.mxu0 0
  %1061 = vmatpush1.bf16.msra.mxu0 %v1036
  %1062 = vmatprep.subr.bf16.mxu0 0
  %1063 = vmatpush1.bf16.msra.mxu0 %v1035
  %1064 = vmatprep.subr.bf16.mxu0 0
  %1065 = vmatpush1.bf16.msra.mxu0 %v1034
  %1066 = vmatprep.subr.bf16.mxu0 0
  %1067 = vmatpush2.bf16.msra.mxu0 0
  %1068 = vmatprep.subr.bf16.mxu0 0
  %1069 = vmatpush2.bf16.msra.mxu0 0
  %1070 = vmatprep.subr.bf16.mxu0 0
  %1071 = vmatpush2.bf16.msra.mxu0 0
  %1072 = vmatprep.subr.bf16.mxu0 0
  %1073 = vmatpush2.bf16.msra.mxu0 0
  %1074 = vmatprep.subr.bf16.mxu0 0
  %1075 = vmatpush2.bf16.msra.mxu0 0
  %1076 = vmatprep.subr.bf16.mxu0 0
  %1077 = vmatpush2.bf16.msra.mxu0 0
  %1078 = vmatprep.subr.bf16.mxu0 0
  %1079 = vmatpush2.bf16.msra.mxu0 0
  %1080 = vmatprep.subr.bf16.mxu0 0
  %1081 = vmatpush2.bf16.msra.mxu0 0
  %1082 = vmatprep.mubr.bf16.mxu0 0
  %1083 = vmatmul.mubr.bf16.gmra.mxu0 %v1039
  %v1084 = vpop.f32.mrf.mxu0
  %v1085 = vadd.f32 0.0, %v1084
  %v1086 = vpop.f32.mrf.mxu0
  %v1087 = vpop.f32.mrf.mxu0
  %v1088 = vadd.f32 0.0, %v1087
  %v1089 = vpop.f32.mrf.mxu0
  %1090 = vmatprep.mubr.bf16.mxu0 0
  %1091 = vmatmul.mubr.bf16.gmra.mxu0 %v1042
  %v1092 = vpop.f32.mrf.mxu0
  %v1093 = vadd.f32 0.0, %v1092
  %v1094 = vpop.f32.mrf.mxu0
  %v1095 = vpop.f32.mrf.mxu0
  %v1096 = vadd.f32 0.0, %v1095
  %v1097 = vpop.f32.mrf.mxu0
  %1098 = vmatprep.mubr.bf16.mxu0 0
  %1099 = vmatmul.mubr.bf16.gmra.mxu0 %v1045
  %v1100 = vpop.f32.mrf.mxu0
  %v1101 = vadd.f32 0.0, %v1100
  %v1102 = vpop.f32.mrf.mxu0
  %v1103 = vpop.f32.mrf.mxu0
  %v1104 = vadd.f32 0.0, %v1103
  %v1105 = vpop.f32.mrf.mxu0
  %1106 = vmatprep.mubr.bf16.mxu0 0
  %1107 = vmatmul.mubr.bf16.gmra.mxu0 %v1048
  %v1108 = vpop.f32.mrf.mxu0
  %v1109 = vadd.f32 0.0, %v1108
  %v1110 = vpop.f32.mrf.mxu0
  %v1111 = vpop.f32.mrf.mxu0
  %v1112 = vadd.f32 0.0, %v1111
  %v1113 = vpop.f32.mrf.mxu0
  %1114 = vdwg.mxu0
  %v1115 = vld [vmem:[%s9 + $0x2] sm:$0x1]
  %v1116 = vpack.c.bf16 %v1088, %v1085
  %v1117 = vld [vmem:[%s5] sm:$0xf]
  %v1119 = vsel %vm851, %v1116, 0
  %vm1121 = vcmask 1043456
  %v1123 = vsel %vm1121, %v1117, 0
  %1125 = vmatprep.subr.bf16.mxu0 0
  %1126 = vmatpush1.bf16.msra.mxu0 0
  %1127 = vmatprep.subr.bf16.mxu0 0
  %1128 = vmatpush1.bf16.msra.mxu0 0
  %1129 = vmatprep.subr.bf16.mxu0 0
  %1130 = vmatpush1.bf16.msra.mxu0 0
  %1131 = vmatprep.subr.bf16.mxu0 0
  %1132 = vmatpush1.bf16.msra.mxu0 0
  %1133 = vmatprep.subr.bf16.mxu0 0
  %1134 = vmatpush1.bf16.msra.mxu0 0
  %1135 = vmatprep.subr.bf16.mxu0 0
  %1136 = vmatpush1.bf16.msra.mxu0 0
  %1137 = vmatprep.subr.bf16.mxu0 0
  %1138 = vmatpush1.bf16.msra.mxu0 0
  %1139 = vmatprep.subr.bf16.mxu0 0
  %1140 = vmatpush1.bf16.msra.mxu0 %v1123
  %1141 = vmatprep.subr.bf16.mxu0 0
  %1142 = vmatpush2.bf16.msra.mxu0 0
  %1143 = vmatprep.subr.bf16.mxu0 0
  %1144 = vmatpush2.bf16.msra.mxu0 0
  %1145 = vmatprep.subr.bf16.mxu0 0
  %1146 = vmatpush2.bf16.msra.mxu0 0
  %1147 = vmatprep.subr.bf16.mxu0 0
  %1148 = vmatpush2.bf16.msra.mxu0 0
  %1149 = vmatprep.subr.bf16.mxu0 0
  %1150 = vmatpush2.bf16.msra.mxu0 0
  %1151 = vmatprep.subr.bf16.mxu0 0
  %1152 = vmatpush2.bf16.msra.mxu0 0
  %1153 = vmatprep.subr.bf16.mxu0 0
  %1154 = vmatpush2.bf16.msra.mxu0 0
  %1155 = vmatprep.subr.bf16.mxu0 0
  %1156 = vmatpush2.bf16.msra.mxu0 0
  %1157 = vmatprep.mubr.bf16.mxu0 0
  %1158 = vmatmul.mubr.bf16.gmra.mxu0 %v1119
  %v1159 = vpop.f32.mrf.mxu0
  %v1160 = vadd.f32 0.0, %v1159
  %v1161 = vpop.f32.mrf.mxu0
  %v1162 = vpop.f32.mrf.mxu0
  %v1163 = vadd.f32 0.0, %v1162
  %v1164 = vpop.f32.mrf.mxu0
  %1165 = vdwg.mxu0
  %v1166 = vlaneseq
  %v1167 = vshrl.u32 %v1166, 7
  %v1168 = vsub.s32 0, %v1167
  %v1169 = vrot.slane %v1115, %v1168
  %v1170 = vadd.f32 %v1169, %v1160
  %v1171 = vadd.f32 %v1169, %v1163
  %v1172 = vpack.c.bf16 %v1096, %v1093
  %s1173 = scalar_lea.vmem %s5, 4
  %v1174 = vld [vmem:[%s1173] sm:$0xf]
  %v1176 = vsel %vm851, %v1172, 0
  %v1179 = vsel %vm1121, %v1174, 0
  %1181 = vmatprep.subr.bf16.mxu0 0
  %1182 = vmatpush1.bf16.msra.mxu0 0
  %1183 = vmatprep.subr.bf16.mxu0 0
  %1184 = vmatpush1.bf16.msra.mxu0 0
  %1185 = vmatprep.subr.bf16.mxu0 0
  %1186 = vmatpush1.bf16.msra.mxu0 0
  %1187 = vmatprep.subr.bf16.mxu0 0
  %1188 = vmatpush1.bf16.msra.mxu0 0
  %1189 = vmatprep.subr.bf16.mxu0 0
  %1190 = vmatpush1.bf16.msra.mxu0 0
  %1191 = vmatprep.subr.bf16.mxu0 0
  %1192 = vmatpush1.bf16.msra.mxu0 0
  %1193 = vmatprep.subr.bf16.mxu0 0
  %1194 = vmatpush1.bf16.msra.mxu0 0
  %1195 = vmatprep.subr.bf16.mxu0 0
  %1196 = vmatpush1.bf16.msra.mxu0 %v1179
  %1197 = vmatprep.subr.bf16.mxu0 0
  %1198 = vmatpush2.bf16.msra.mxu0 0
  %1199 = vmatprep.subr.bf16.mxu0 0
  %1200 = vmatpush2.bf16.msra.mxu0 0
  %1201 = vmatprep.subr.bf16.mxu0 0
  %1202 = vmatpush2.bf16.msra.mxu0 0
  %1203 = vmatprep.subr.bf16.mxu0 0
  %1204 = vmatpush2.bf16.msra.mxu0 0
  %1205 = vmatprep.subr.bf16.mxu0 0
  %1206 = vmatpush2.bf16.msra.mxu0 0
  %1207 = vmatprep.subr.bf16.mxu0 0
  %1208 = vmatpush2.bf16.msra.mxu0 0
  %1209 = vmatprep.subr.bf16.mxu0 0
  %1210 = vmatpush2.bf16.msra.mxu0 0
  %1211 = vmatprep.subr.bf16.mxu0 0
  %1212 = vmatpush2.bf16.msra.mxu0 0
  %1213 = vmatprep.mubr.bf16.mxu0 0
  %1214 = vmatmul.mubr.bf16.gmra.mxu0 %v1176
  %v1215 = vpop.f32.mrf.mxu0
  %v1216 = vadd.f32 0.0, %v1215
  %v1217 = vpop.f32.mrf.mxu0
  %v1218 = vpop.f32.mrf.mxu0
  %v1219 = vadd.f32 0.0, %v1218
  %v1220 = vpop.f32.mrf.mxu0
  %1221 = vdwg.mxu0
  %v1222 = vadd.f32 %v1170, %v1216
  %v1223 = vadd.f32 %v1171, %v1219
  %v1224 = vpack.c.bf16 %v1104, %v1101
  %s1225 = scalar_lea.vmem %s5, 8
  %v1226 = vld [vmem:[%s1225] sm:$0xf]
  %v1228 = vsel %vm851, %v1224, 0
  %v1231 = vsel %vm1121, %v1226, 0
  %1233 = vmatprep.subr.bf16.mxu0 0
  %1234 = vmatpush1.bf16.msra.mxu0 0
  %1235 = vmatprep.subr.bf16.mxu0 0
  %1236 = vmatpush1.bf16.msra.mxu0 0
  %1237 = vmatprep.subr.bf16.mxu0 0
  %1238 = vmatpush1.bf16.msra.mxu0 0
  %1239 = vmatprep.subr.bf16.mxu0 0
  %1240 = vmatpush1.bf16.msra.mxu0 0
  %1241 = vmatprep.subr.bf16.mxu0 0
  %1242 = vmatpush1.bf16.msra.mxu0 0
  %1243 = vmatprep.subr.bf16.mxu0 0
  %1244 = vmatpush1.bf16.msra.mxu0 0
  %1245 = vmatprep.subr.bf16.mxu0 0
  %1246 = vmatpush1.bf16.msra.mxu0 0
  %1247 = vmatprep.subr.bf16.mxu0 0
  %1248 = vmatpush1.bf16.msra.mxu0 %v1231
  %1249 = vmatprep.subr.bf16.mxu0 0
  %1250 = vmatpush2.bf16.msra.mxu0 0
  %1251 = vmatprep.subr.bf16.mxu0 0
  %1252 = vmatpush2.bf16.msra.mxu0 0
  %1253 = vmatprep.subr.bf16.mxu0 0
  %1254 = vmatpush2.bf16.msra.mxu0 0
  %1255 = vmatprep.subr.bf16.mxu0 0
  %1256 = vmatpush2.bf16.msra.mxu0 0
  %1257 = vmatprep.subr.bf16.mxu0 0
  %1258 = vmatpush2.bf16.msra.mxu0 0
  %1259 = vmatprep.subr.bf16.mxu0 0
  %1260 = vmatpush2.bf16.msra.mxu0 0
  %1261 = vmatprep.subr.bf16.mxu0 0
  %1262 = vmatpush2.bf16.msra.mxu0 0
  %1263 = vmatprep.subr.bf16.mxu0 0
  %1264 = vmatpush2.bf16.msra.mxu0 0
  %1265 = vmatprep.mubr.bf16.mxu0 0
  %1266 = vmatmul.mubr.bf16.gmra.mxu0 %v1228
  %v1267 = vpop.f32.mrf.mxu0
  %v1268 = vadd.f32 0.0, %v1267
  %v1269 = vpop.f32.mrf.mxu0
  %v1270 = vpop.f32.mrf.mxu0
  %v1271 = vadd.f32 0.0, %v1270
  %v1272 = vpop.f32.mrf.mxu0
  %1273 = vdwg.mxu0
  %v1274 = vadd.f32 %v1222, %v1268
  %v1275 = vadd.f32 %v1223, %v1271
  %v1276 = vpack.c.bf16 %v1112, %v1109
  %s1277 = scalar_lea.vmem %s5, 12
  %v1278 = vld [vmem:[%s1277] sm:$0xf]
  %v1280 = vsel %vm851, %v1276, 0
  %v1283 = vsel %vm1121, %v1278, 0
  %1285 = vmatprep.subr.bf16.mxu0 0
  %1286 = vmatpush1.bf16.msra.mxu0 0
  %1287 = vmatprep.subr.bf16.mxu0 0
  %1288 = vmatpush1.bf16.msra.mxu0 0
  %1289 = vmatprep.subr.bf16.mxu0 0
  %1290 = vmatpush1.bf16.msra.mxu0 0
  %1291 = vmatprep.subr.bf16.mxu0 0
  %1292 = vmatpush1.bf16.msra.mxu0 0
  %1293 = vmatprep.subr.bf16.mxu0 0
  %1294 = vmatpush1.bf16.msra.mxu0 0
  %1295 = vmatprep.subr.bf16.mxu0 0
  %1296 = vmatpush1.bf16.msra.mxu0 0
  %1297 = vmatprep.subr.bf16.mxu0 0
  %1298 = vmatpush1.bf16.msra.mxu0 0
  %1299 = vmatprep.subr.bf16.mxu0 0
  %1300 = vmatpush1.bf16.msra.mxu0 %v1283
  %1301 = vmatprep.subr.bf16.mxu0 0
  %1302 = vmatpush2.bf16.msra.mxu0 0
  %1303 = vmatprep.subr.bf16.mxu0 0
  %1304 = vmatpush2.bf16.msra.mxu0 0
  %1305 = vmatprep.subr.bf16.mxu0 0
  %1306 = vmatpush2.bf16.msra.mxu0 0
  %1307 = vmatprep.subr.bf16.mxu0 0
  %1308 = vmatpush2.bf16.msra.mxu0 0
  %1309 = vmatprep.subr.bf16.mxu0 0
  %1310 = vmatpush2.bf16.msra.mxu0 0
  %1311 = vmatprep.subr.bf16.mxu0 0
  %1312 = vmatpush2.bf16.msra.mxu0 0
  %1313 = vmatprep.subr.bf16.mxu0 0
  %1314 = vmatpush2.bf16.msra.mxu0 0
  %1315 = vmatprep.subr.bf16.mxu0 0
  %1316 = vmatpush2.bf16.msra.mxu0 0
  %1317 = vmatprep.mubr.bf16.mxu0 0
  %1318 = vmatmul.mubr.bf16.gmra.mxu0 %v1280
  %v1319 = vpop.f32.mrf.mxu0
  %v1320 = vadd.f32 0.0, %v1319
  %v1321 = vpop.f32.mrf.mxu0
  %v1322 = vpop.f32.mrf.mxu0
  %v1323 = vadd.f32 0.0, %v1322
  %v1324 = vpop.f32.mrf.mxu0
  %1325 = vdwg.mxu0
  %v1326 = vadd.f32 %v1274, %v1320
  %v1327 = vadd.f32 %v1275, %v1323
  %v1328 = vadd.f32 %v1326, %v84
  %v1329 = vadd.f32 %v1327, %v85
  %v1330 = vld [vmem:[%s9 + $0x3] sm:$0x1]
  %v1331 = vld [vmem:[%s9 + $0x4] sm:$0x1]
  %v1332 = vsel %vm46, %v1328, 0.0
  %1333 = vadd.xlane.f32.xlu0 %v1332
  %v1334 = vpop.xlane.xlu0 %1333
  %v1335 = vsel %vm46, %v1329, 0.0
  %1336 = vadd.xlane.f32.xlu0 %v1335
  %v1337 = vpop.xlane.xlu0 %1336
  %v1338 = vmul.f32 %v1334, %v53
  %v1339 = vmul.f32 %v1337, %v53
  %v1340 = vsub.f32 %v1328, %v1338
  %v1341 = vsub.f32 %v1329, %v1339
  %v1342 = vmul.f32 %v1340, %v1340
  %v1343 = vmul.f32 %v1341, %v1341
  %v1344 = vsel %vm46, %v1342, 0.0
  %1345 = vadd.xlane.f32.xlu0 %v1344
  %v1346 = vpop.xlane.xlu0 %1345
  %v1347 = vsel %vm46, %v1343, 0.0
  %1348 = vadd.xlane.f32.xlu0 %v1347
  %v1349 = vpop.xlane.xlu0 %1348
  %v1350 = vmul.f32 %v1346, %v53
  %v1351 = vmul.f32 %v1349, %v53
  %v1352 = vadd.f32 %v1350, 1e-05
  %v1353 = vadd.f32 %v1351, 1e-05
  %v1354 = vrsqrt.pop %v1352
  %v1355 = vrsqrt.pop %v1353
  %v1356 = vmul.f32 %v1340, %v1354
  %v1357 = vmul.f32 %v1341, %v1355
  %v1358 = vlaneseq
  %v1359 = vshrl.u32 %v1358, 7
  %v1360 = vsub.s32 0, %v1359
  %v1361 = vrot.slane %v1330, %v1360
  %v1362 = vmul.f32 %v1356, %v1361
  %v1363 = vmul.f32 %v1357, %v1361
  %v1364 = vlaneseq
  %v1365 = vshrl.u32 %v1364, 7
  %v1366 = vsub.s32 0, %v1365
  %v1367 = vrot.slane %v1331, %v1366
  %v1368 = vadd.f32 %v1362, %v1367
  %v1369 = vadd.f32 %v1363, %v1367
  %v1370 = vpack.c.bf16 %v1369, %v1368
  %v1371 = vld [vmem:[%s6] sm:$0xf]
  %v1372 = vld [vmem:[%s6 + $0x4] sm:$0xf]
  %v1373 = vld [vmem:[%s6 + $0x8] sm:$0xf]
  %v1374 = vld [vmem:[%s6 + $0xc] sm:$0xf]
  %v1375 = vld [vmem:[%s7] sm:$0x1]
  %v1377 = vlaneseq
  %v1378 = vshrl.u32 %v1377, 7
  %v1379 = vsub.s32 0, %v1378
  %v1380 = vrot.slane %v1375, %v1379
  %v1386 = vunpack.c.l.b16 %v1371
  %v1387 = vunpack.c.l.b16 %v1372
  %v1388 = vunpack.c.l.b16 %v1373
  %v1389 = vunpack.c.l.b16 %v1374
  %v1390 = vpack.c.b16 %v1387, %v1386
  %v1391 = vpack.c.b16 %v1389, %v1388
  %v1395 = vsel %vm46, %v1370, 0
  %1397 = vmatprep.subr.bf16.mxu0 0
  %1398 = vmatpush1.bf16.msra.mxu0 0
  %1399 = vmatprep.subr.bf16.mxu0 0
  %1400 = vmatpush1.bf16.msra.mxu0 0
  %1401 = vmatprep.subr.bf16.mxu0 0
  %1402 = vmatpush1.bf16.msra.mxu0 0
  %1403 = vmatprep.subr.bf16.mxu0 0
  %1404 = vmatpush1.bf16.msra.mxu0 0
  %1405 = vmatprep.subr.bf16.mxu0 0
  %1406 = vmatpush1.bf16.msra.mxu0 0
  %1407 = vmatprep.subr.bf16.mxu0 0
  %1408 = vmatpush1.bf16.msra.mxu0 0
  %1409 = vmatprep.subr.bf16.mxu0 0
  %1410 = vmatpush1.bf16.msra.mxu0 %v1391
  %1411 = vmatprep.subr.bf16.mxu0 0
  %1412 = vmatpush1.bf16.msra.mxu0 %v1390
  %1413 = vmatprep.subr.bf16.mxu0 0
  %1414 = vmatpush2.bf16.msra.mxu0 0
  %1415 = vmatprep.subr.bf16.mxu0 0
  %1416 = vmatpush2.bf16.msra.mxu0 0
  %1417 = vmatprep.subr.bf16.mxu0 0
  %1418 = vmatpush2.bf16.msra.mxu0 0
  %1419 = vmatprep.subr.bf16.mxu0 0
  %1420 = vmatpush2.bf16.msra.mxu0 0
  %1421 = vmatprep.subr.bf16.mxu0 0
  %1422 = vmatpush2.bf16.msra.mxu0 0
  %1423 = vmatprep.subr.bf16.mxu0 0
  %1424 = vmatpush2.bf16.msra.mxu0 0
  %1425 = vmatprep.subr.bf16.mxu0 0
  %1426 = vmatpush2.bf16.msra.mxu0 0
  %1427 = vmatprep.subr.bf16.mxu0 0
  %1428 = vmatpush2.bf16.msra.mxu0 0
  %1429 = vmatprep.mubr.bf16.mxu0 0
  %1430 = vmatmul.mubr.bf16.gmra.mxu0 %v1395
  %v1431 = vpop.f32.mrf.mxu0
  %v1432 = vadd.f32 %v1380, %v1431
  %v1433 = vpop.f32.mrf.mxu0
  %v1434 = vpop.f32.mrf.mxu0
  %v1435 = vadd.f32 %v1380, %v1434
  %v1436 = vpop.f32.mrf.mxu0
  %1437 = vdwg.mxu0
  %v1438 = vmul.f32 %v1432, 0.5
  %v1439 = vmul.f32 %v1435, 0.5
  %v1440 = vmul.f32 %v1432, 0.044715
  %v1441 = vmul.f32 %v1435, 0.044715
  %v1442 = vmul.f32 %v1440, %v1432
  %v1443 = vmul.f32 %v1441, %v1435
  %v1444 = vmul.f32 %v1442, %v1432
  %v1445 = vmul.f32 %v1443, %v1435
  %v1446 = vadd.f32 %v1432, %v1444
  %v1447 = vadd.f32 %v1435, %v1445
  %v1448 = vmul.f32 %v1446, 0.7978846
  %v1449 = vmul.f32 %v1447, 0.7978846
  %v1450 = vtanh.pop %v1448
  %v1451 = vtanh.pop %v1449
  %v1452 = vadd.f32 %v1450, 1.0
  %v1453 = vadd.f32 %v1451, 1.0
  %v1454 = vmul.f32 %v1438, %v1452
  %v1455 = vmul.f32 %v1439, %v1453
  %v1456 = vpack.c.bf16 %v1455, %v1454
  %v1457 = vld [vmem:[%s8] sm:$0xf]
  %v1458 = vld [vmem:[%s8 + $0x4] sm:$0xf]
  %v1459 = vld [vmem:[%s8 + $0x8] sm:$0xf]
  %v1460 = vld [vmem:[%s8 + $0xc] sm:$0xf]
  %v1461 = vld [vmem:[%s8 + $0x10] sm:$0xf]
  %v1462 = vld [vmem:[%s8 + $0x14] sm:$0xf]
  %v1463 = vld [vmem:[%s8 + $0x18] sm:$0xf]
  %v1464 = vld [vmem:[%s8 + $0x1c] sm:$0xf]
  %v1465 = vld [vmem:[%s9 + $0x5] sm:$0x1]
  %v1466 = vlaneseq
  %v1467 = vshrl.u32 %v1466, 7
  %v1468 = vsub.s32 0, %v1467
  %v1469 = vrot.slane %v1465, %v1468
  %v1478 = vunpack.c.l.b16 %v1457
  %v1479 = vunpack.c.l.b16 %v1458
  %v1480 = vunpack.c.l.b16 %v1459
  %v1481 = vunpack.c.l.b16 %v1460
  %v1482 = vunpack.c.l.b16 %v1461
  %v1483 = vunpack.c.l.b16 %v1462
  %v1484 = vunpack.c.l.b16 %v1463
  %v1485 = vunpack.c.l.b16 %v1464
  %v1486 = vpack.c.b16 %v1479, %v1478
  %v1487 = vpack.c.b16 %v1481, %v1480
  %v1488 = vpack.c.b16 %v1483, %v1482
  %v1489 = vpack.c.b16 %v1485, %v1484
  %v1495 = vsel %vm941, %v1456, 0
  %1497 = vmatprep.subr.bf16.mxu0 0
  %1498 = vmatpush1.bf16.msra.mxu0 0
  %1499 = vmatprep.subr.bf16.mxu0 0
  %1500 = vmatpush1.bf16.msra.mxu0 0
  %1501 = vmatprep.subr.bf16.mxu0 0
  %1502 = vmatpush1.bf16.msra.mxu0 0
  %1503 = vmatprep.subr.bf16.mxu0 0
  %1504 = vmatpush1.bf16.msra.mxu0 0
  %1505 = vmatprep.subr.bf16.mxu0 0
  %1506 = vmatpush1.bf16.msra.mxu0 %v1489
  %1507 = vmatprep.subr.bf16.mxu0 0
  %1508 = vmatpush1.bf16.msra.mxu0 %v1488
  %1509 = vmatprep.subr.bf16.mxu0 0
  %1510 = vmatpush1.bf16.msra.mxu0 %v1487
  %1511 = vmatprep.subr.bf16.mxu0 0
  %1512 = vmatpush1.bf16.msra.mxu0 %v1486
  %1513 = vmatprep.subr.bf16.mxu0 0
  %1514 = vmatpush2.bf16.msra.mxu0 0
  %1515 = vmatprep.subr.bf16.mxu0 0
  %1516 = vmatpush2.bf16.msra.mxu0 0
  %1517 = vmatprep.subr.bf16.mxu0 0
  %1518 = vmatpush2.bf16.msra.mxu0 0
  %1519 = vmatprep.subr.bf16.mxu0 0
  %1520 = vmatpush2.bf16.msra.mxu0 0
  %1521 = vmatprep.subr.bf16.mxu0 0
  %1522 = vmatpush2.bf16.msra.mxu0 0
  %1523 = vmatprep.subr.bf16.mxu0 0
  %1524 = vmatpush2.bf16.msra.mxu0 0
  %1525 = vmatprep.subr.bf16.mxu0 0
  %1526 = vmatpush2.bf16.msra.mxu0 0
  %1527 = vmatprep.subr.bf16.mxu0 0
  %1528 = vmatpush2.bf16.msra.mxu0 0
  %1529 = vmatprep.mubr.bf16.mxu0 0
  %1530 = vmatmul.mubr.bf16.gmra.mxu0 %v1495
  %v1531 = vpop.f32.mrf.mxu0
  %v1532 = vadd.f32 %v1469, %v1531
  %v1533 = vpop.f32.mrf.mxu0
  %v1534 = vpop.f32.mrf.mxu0
  %v1535 = vadd.f32 %v1469, %v1534
  %v1536 = vpop.f32.mrf.mxu0
  %1537 = vdwg.mxu0
  %v1538 = vadd.f32 %v1532, %v1368
  %v1539 = vadd.f32 %v1535, %v1369
  %v1540 = vld [vmem:[%s9 + $0x6] sm:$0x1]
  %v1541 = vld [vmem:[%s9 + $0x7] sm:$0x1]
  %v1542 = vsel %vm46, %v1538, 0.0
  %1543 = vadd.xlane.f32.xlu0 %v1542
  %v1544 = vpop.xlane.xlu0 %1543
  %v1545 = vsel %vm46, %v1539, 0.0
  %1546 = vadd.xlane.f32.xlu0 %v1545
  %v1547 = vpop.xlane.xlu0 %1546
  %v1548 = vmul.f32 %v1544, %v53
  %v1549 = vmul.f32 %v1547, %v53
  %v1550 = vsub.f32 %v1538, %v1548
  %v1551 = vsub.f32 %v1539, %v1549
  %v1552 = vmul.f32 %v1550, %v1550
  %v1553 = vmul.f32 %v1551, %v1551
  %v1554 = vsel %vm46, %v1552, 0.0
  %1555 = vadd.xlane.f32.xlu0 %v1554
  %v1556 = vpop.xlane.xlu0 %1555
  %v1557 = vsel %vm46, %v1553, 0.0
  %1558 = vadd.xlane.f32.xlu0 %v1557
  %v1559 = vpop.xlane.xlu0 %1558
  %v1560 = vmul.f32 %v1556, %v53
  %v1561 = vmul.f32 %v1559, %v53
  %v1562 = vadd.f32 %v1560, 1e-05
  %v1563 = vadd.f32 %v1561, 1e-05
  %v1564 = vrsqrt.pop %v1562
  %v1565 = vrsqrt.pop %v1563
  %v1566 = vmul.f32 %v1550, %v1564
  %v1567 = vmul.f32 %v1551, %v1565
  %v1568 = vlaneseq
  %v1569 = vshrl.u32 %v1568, 7
  %v1570 = vsub.s32 0, %v1569
  %v1571 = vrot.slane %v1540, %v1570
  %v1572 = vmul.f32 %v1566, %v1571
  %v1573 = vmul.f32 %v1567, %v1571
  %v1574 = vlaneseq
  %v1575 = vshrl.u32 %v1574, 7
  %v1576 = vsub.s32 0, %v1575
  %v1577 = vrot.slane %v1541, %v1576
  %v1578 = vadd.f32 %v1572, %v1577
  %v1579 = vadd.f32 %v1573, %v1577
  %v1580 = vpack.c.bf16 %v1579, %v1578
  %s1581 = scalar_lea.vmem %s3, 192
  %v1582 = vld [vmem:[%s1581] sm:$0xf]
  %v1583 = vld [vmem:[%s1581 + $0x4] sm:$0xf]
  %v1584 = vld [vmem:[%s1581 + $0x8] sm:$0xf]
  %v1585 = vld [vmem:[%s1581 + $0xc] sm:$0xf]
  %v1590 = vunpack.c.l.b16 %v1582
  %v1591 = vunpack.c.l.b16 %v1583
  %v1592 = vunpack.c.l.b16 %v1584
  %v1593 = vunpack.c.l.b16 %v1585
  %v1594 = vpack.c.b16 %v1591, %v1590
  %v1595 = vpack.c.b16 %v1593, %v1592
  %v1599 = vsel %vm46, %v1580, 0
  %1601 = vmatprep.subr.bf16.mxu0 0
  %1602 = vmatpush1.bf16.msra.mxu0 0
  %1603 = vmatprep.subr.bf16.mxu0 0
  %1604 = vmatpush1.bf16.msra.mxu0 0
  %1605 = vmatprep.subr.bf16.mxu0 0
  %1606 = vmatpush1.bf16.msra.mxu0 0
  %1607 = vmatprep.subr.bf16.mxu0 0
  %1608 = vmatpush1.bf16.msra.mxu0 0
  %1609 = vmatprep.subr.bf16.mxu0 0
  %1610 = vmatpush1.bf16.msra.mxu0 0
  %1611 = vmatprep.subr.bf16.mxu0 0
  %1612 = vmatpush1.bf16.msra.mxu0 0
  %1613 = vmatprep.subr.bf16.mxu0 0
  %1614 = vmatpush1.bf16.msra.mxu0 %v1595
  %1615 = vmatprep.subr.bf16.mxu0 0
  %1616 = vmatpush1.bf16.msra.mxu0 %v1594
  %1617 = vmatprep.subr.bf16.mxu0 0
  %1618 = vmatpush2.bf16.msra.mxu0 0
  %1619 = vmatprep.subr.bf16.mxu0 0
  %1620 = vmatpush2.bf16.msra.mxu0 0
  %1621 = vmatprep.subr.bf16.mxu0 0
  %1622 = vmatpush2.bf16.msra.mxu0 0
  %1623 = vmatprep.subr.bf16.mxu0 0
  %1624 = vmatpush2.bf16.msra.mxu0 0
  %1625 = vmatprep.subr.bf16.mxu0 0
  %1626 = vmatpush2.bf16.msra.mxu0 0
  %1627 = vmatprep.subr.bf16.mxu0 0
  %1628 = vmatpush2.bf16.msra.mxu0 0
  %1629 = vmatprep.subr.bf16.mxu0 0
  %1630 = vmatpush2.bf16.msra.mxu0 0
  %1631 = vmatprep.subr.bf16.mxu0 0
  %1632 = vmatpush2.bf16.msra.mxu0 0
  %1633 = vmatprep.mubr.bf16.mxu0 0
  %1634 = vmatmul.mubr.bf16.gmra.mxu0 %v1599
  %v1635 = vpop.f32.mrf.mxu0
  %v1636 = vadd.f32 0.0, %v1635
  %v1637 = vpop.f32.mrf.mxu0
  %v1638 = vpop.f32.mrf.mxu0
  %v1639 = vadd.f32 0.0, %v1638
  %v1640 = vpop.f32.mrf.mxu0
  %1641 = vdwg.mxu0
  %s1642 = scalar_lea.vmem %s3, 256
  %v1643 = vld [vmem:[%s1642] sm:$0xf]
  %v1644 = vld [vmem:[%s1642 + $0x4] sm:$0xf]
  %v1645 = vld [vmem:[%s1642 + $0x8] sm:$0xf]
  %v1646 = vld [vmem:[%s1642 + $0xc] sm:$0xf]
  %v1651 = vunpack.c.l.b16 %v1643
  %v1652 = vunpack.c.l.b16 %v1644
  %v1653 = vunpack.c.l.b16 %v1645
  %v1654 = vunpack.c.l.b16 %v1646
  %v1655 = vpack.c.b16 %v1652, %v1651
  %v1656 = vpack.c.b16 %v1654, %v1653
  %1659 = vmatprep.subr.bf16.mxu0 0
  %1660 = vmatpush1.bf16.msra.mxu0 0
  %1661 = vmatprep.subr.bf16.mxu0 0
  %1662 = vmatpush1.bf16.msra.mxu0 0
  %1663 = vmatprep.subr.bf16.mxu0 0
  %1664 = vmatpush1.bf16.msra.mxu0 0
  %1665 = vmatprep.subr.bf16.mxu0 0
  %1666 = vmatpush1.bf16.msra.mxu0 0
  %1667 = vmatprep.subr.bf16.mxu0 0
  %1668 = vmatpush1.bf16.msra.mxu0 0
  %1669 = vmatprep.subr.bf16.mxu0 0
  %1670 = vmatpush1.bf16.msra.mxu0 0
  %1671 = vmatprep.subr.bf16.mxu0 0
  %1672 = vmatpush1.bf16.msra.mxu0 %v1656
  %1673 = vmatprep.subr.bf16.mxu0 0
  %1674 = vmatpush1.bf16.msra.mxu0 %v1655
  %1675 = vmatprep.subr.bf16.mxu0 0
  %1676 = vmatpush2.bf16.msra.mxu0 0
  %1677 = vmatprep.subr.bf16.mxu0 0
  %1678 = vmatpush2.bf16.msra.mxu0 0
  %1679 = vmatprep.subr.bf16.mxu0 0
  %1680 = vmatpush2.bf16.msra.mxu0 0
  %1681 = vmatprep.subr.bf16.mxu0 0
  %1682 = vmatpush2.bf16.msra.mxu0 0
  %1683 = vmatprep.subr.bf16.mxu0 0
  %1684 = vmatpush2.bf16.msra.mxu0 0
  %1685 = vmatprep.subr.bf16.mxu0 0
  %1686 = vmatpush2.bf16.msra.mxu0 0
  %1687 = vmatprep.subr.bf16.mxu0 0
  %1688 = vmatpush2.bf16.msra.mxu0 0
  %1689 = vmatprep.subr.bf16.mxu0 0
  %1690 = vmatpush2.bf16.msra.mxu0 0
  %1691 = vmatprep.mubr.bf16.mxu0 0
  %1692 = vmatmul.mubr.bf16.gmra.mxu0 %v1599
  %v1693 = vpop.f32.mrf.mxu0
  %v1694 = vadd.f32 0.0, %v1693
  %v1695 = vpop.f32.mrf.mxu0
  %v1696 = vpop.f32.mrf.mxu0
  %v1697 = vadd.f32 0.0, %v1696
  %v1698 = vpop.f32.mrf.mxu0
  %1699 = vdwg.mxu0
  %s1700 = scalar_lea.vmem %s3, 320
  %v1701 = vld [vmem:[%s1700] sm:$0xf]
  %v1702 = vld [vmem:[%s1700 + $0x4] sm:$0xf]
  %v1703 = vld [vmem:[%s1700 + $0x8] sm:$0xf]
  %v1704 = vld [vmem:[%s1700 + $0xc] sm:$0xf]
  %v1709 = vunpack.c.l.b16 %v1701
  %v1710 = vunpack.c.l.b16 %v1702
  %v1711 = vunpack.c.l.b16 %v1703
  %v1712 = vunpack.c.l.b16 %v1704
  %v1713 = vpack.c.b16 %v1710, %v1709
  %v1714 = vpack.c.b16 %v1712, %v1711
  %1717 = vmatprep.subr.bf16.mxu0 0
  %1718 = vmatpush1.bf16.msra.mxu0 0
  %1719 = vmatprep.subr.bf16.mxu0 0
  %1720 = vmatpush1.bf16.msra.mxu0 0
  %1721 = vmatprep.subr.bf16.mxu0 0
  %1722 = vmatpush1.bf16.msra.mxu0 0
  %1723 = vmatprep.subr.bf16.mxu0 0
  %1724 = vmatpush1.bf16.msra.mxu0 0
  %1725 = vmatprep.subr.bf16.mxu0 0
  %1726 = vmatpush1.bf16.msra.mxu0 0
  %1727 = vmatprep.subr.bf16.mxu0 0
  %1728 = vmatpush1.bf16.msra.mxu0 0
  %1729 = vmatprep.subr.bf16.mxu0 0
  %1730 = vmatpush1.bf16.msra.mxu0 %v1714
  %1731 = vmatprep.subr.bf16.mxu0 0
  %1732 = vmatpush1.bf16.msra.mxu0 %v1713
  %1733 = vmatprep.subr.bf16.mxu0 0
  %1734 = vmatpush2.bf16.msra.mxu0 0
  %1735 = vmatprep.subr.bf16.mxu0 0
  %1736 = vmatpush2.bf16.msra.mxu0 0
  %1737 = vmatprep.subr.bf16.mxu0 0
  %1738 = vmatpush2.bf16.msra.mxu0 0
  %1739 = vmatprep.subr.bf16.mxu0 0
  %1740 = vmatpush2.bf16.msra.mxu0 0
  %1741 = vmatprep.subr.bf16.mxu0 0
  %1742 = vmatpush2.bf16.msra.mxu0 0
  %1743 = vmatprep.subr.bf16.mxu0 0
  %1744 = vmatpush2.bf16.msra.mxu0 0
  %1745 = vmatprep.subr.bf16.mxu0 0
  %1746 = vmatpush2.bf16.msra.mxu0 0
  %1747 = vmatprep.subr.bf16.mxu0 0
  %1748 = vmatpush2.bf16.msra.mxu0 0
  %1749 = vmatprep.mubr.bf16.mxu0 0
  %1750 = vmatmul.mubr.bf16.gmra.mxu0 %v1599
  %v1751 = vpop.f32.mrf.mxu0
  %v1752 = vadd.f32 0.0, %v1751
  %v1753 = vpop.f32.mrf.mxu0
  %v1754 = vpop.f32.mrf.mxu0
  %v1755 = vadd.f32 0.0, %v1754
  %v1756 = vpop.f32.mrf.mxu0
  %1757 = vdwg.mxu0
  %s1758 = scalar_lea.vmem %s3, 208
  %v1759 = vld [vmem:[%s1758] sm:$0xf]
  %v1760 = vld [vmem:[%s1758 + $0x4] sm:$0xf]
  %v1761 = vld [vmem:[%s1758 + $0x8] sm:$0xf]
  %v1762 = vld [vmem:[%s1758 + $0xc] sm:$0xf]
  %v1767 = vunpack.c.l.b16 %v1759
  %v1768 = vunpack.c.l.b16 %v1760
  %v1769 = vunpack.c.l.b16 %v1761
  %v1770 = vunpack.c.l.b16 %v1762
  %v1771 = vpack.c.b16 %v1768, %v1767
  %v1772 = vpack.c.b16 %v1770, %v1769
  %1775 = vmatprep.subr.bf16.mxu0 0
  %1776 = vmatpush1.bf16.msra.mxu0 0
  %1777 = vmatprep.subr.bf16.mxu0 0
  %1778 = vmatpush1.bf16.msra.mxu0 0
  %1779 = vmatprep.subr.bf16.mxu0 0
  %1780 = vmatpush1.bf16.msra.mxu0 0
  %1781 = vmatprep.subr.bf16.mxu0 0
  %1782 = vmatpush1.bf16.msra.mxu0 0
  %1783 = vmatprep.subr.bf16.mxu0 0
  %1784 = vmatpush1.bf16.msra.mxu0 0
  %1785 = vmatprep.subr.bf16.mxu0 0
  %1786 = vmatpush1.bf16.msra.mxu0 0
  %1787 = vmatprep.subr.bf16.mxu0 0
  %1788 = vmatpush1.bf16.msra.mxu0 %v1772
  %1789 = vmatprep.subr.bf16.mxu0 0
  %1790 = vmatpush1.bf16.msra.mxu0 %v1771
  %1791 = vmatprep.subr.bf16.mxu0 0
  %1792 = vmatpush2.bf16.msra.mxu0 0
  %1793 = vmatprep.subr.bf16.mxu0 0
  %1794 = vmatpush2.bf16.msra.mxu0 0
  %1795 = vmatprep.subr.bf16.mxu0 0
  %1796 = vmatpush2.bf16.msra.mxu0 0
  %1797 = vmatprep.subr.bf16.mxu0 0
  %1798 = vmatpush2.bf16.msra.mxu0 0
  %1799 = vmatprep.subr.bf16.mxu0 0
  %1800 = vmatpush2.bf16.msra.mxu0 0
  %1801 = vmatprep.subr.bf16.mxu0 0
  %1802 = vmatpush2.bf16.msra.mxu0 0
  %1803 = vmatprep.subr.bf16.mxu0 0
  %1804 = vmatpush2.bf16.msra.mxu0 0
  %1805 = vmatprep.subr.bf16.mxu0 0
  %1806 = vmatpush2.bf16.msra.mxu0 0
  %1807 = vmatprep.mubr.bf16.mxu0 0
  %1808 = vmatmul.mubr.bf16.gmra.mxu0 %v1599
  %v1809 = vpop.f32.mrf.mxu0
  %v1810 = vadd.f32 0.0, %v1809
  %v1811 = vpop.f32.mrf.mxu0
  %v1812 = vpop.f32.mrf.mxu0
  %v1813 = vadd.f32 0.0, %v1812
  %v1814 = vpop.f32.mrf.mxu0
  %1815 = vdwg.mxu0
  %s1816 = scalar_lea.vmem %s3, 272
  %v1817 = vld [vmem:[%s1816] sm:$0xf]
  %v1818 = vld [vmem:[%s1816 + $0x4] sm:$0xf]
  %v1819 = vld [vmem:[%s1816 + $0x8] sm:$0xf]
  %v1820 = vld [vmem:[%s1816 + $0xc] sm:$0xf]
  %v1825 = vunpack.c.l.b16 %v1817
  %v1826 = vunpack.c.l.b16 %v1818
  %v1827 = vunpack.c.l.b16 %v1819
  %v1828 = vunpack.c.l.b16 %v1820
  %v1829 = vpack.c.b16 %v1826, %v1825
  %v1830 = vpack.c.b16 %v1828, %v1827
  %1833 = vmatprep.subr.bf16.mxu0 0
  %1834 = vmatpush1.bf16.msra.mxu0 0
  %1835 = vmatprep.subr.bf16.mxu0 0
  %1836 = vmatpush1.bf16.msra.mxu0 0
  %1837 = vmatprep.subr.bf16.mxu0 0
  %1838 = vmatpush1.bf16.msra.mxu0 0
  %1839 = vmatprep.subr.bf16.mxu0 0
  %1840 = vmatpush1.bf16.msra.mxu0 0
  %1841 = vmatprep.subr.bf16.mxu0 0
  %1842 = vmatpush1.bf16.msra.mxu0 0
  %1843 = vmatprep.subr.bf16.mxu0 0
  %1844 = vmatpush1.bf16.msra.mxu0 0
  %1845 = vmatprep.subr.bf16.mxu0 0
  %1846 = vmatpush1.bf16.msra.mxu0 %v1830
  %1847 = vmatprep.subr.bf16.mxu0 0
  %1848 = vmatpush1.bf16.msra.mxu0 %v1829
  %1849 = vmatprep.subr.bf16.mxu0 0
  %1850 = vmatpush2.bf16.msra.mxu0 0
  %1851 = vmatprep.subr.bf16.mxu0 0
  %1852 = vmatpush2.bf16.msra.mxu0 0
  %1853 = vmatprep.subr.bf16.mxu0 0
  %1854 = vmatpush2.bf16.msra.mxu0 0
  %1855 = vmatprep.subr.bf16.mxu0 0
  %1856 = vmatpush2.bf16.msra.mxu0 0
  %1857 = vmatprep.subr.bf16.mxu0 0
  %1858 = vmatpush2.bf16.msra.mxu0 0
  %1859 = vmatprep.subr.bf16.mxu0 0
  %1860 = vmatpush2.bf16.msra.mxu0 0
  %1861 = vmatprep.subr.bf16.mxu0 0
  %1862 = vmatpush2.bf16.msra.mxu0 0
  %1863 = vmatprep.subr.bf16.mxu0 0
  %1864 = vmatpush2.bf16.msra.mxu0 0
  %1865 = vmatprep.mubr.bf16.mxu0 0
  %1866 = vmatmul.mubr.bf16.gmra.mxu0 %v1599
  %v1867 = vpop.f32.mrf.mxu0
  %v1868 = vadd.f32 0.0, %v1867
  %v1869 = vpop.f32.mrf.mxu0
  %v1870 = vpop.f32.mrf.mxu0
  %v1871 = vadd.f32 0.0, %v1870
  %v1872 = vpop.f32.mrf.mxu0
  %1873 = vdwg.mxu0
  %s1874 = scalar_lea.vmem %s3, 336
  %v1875 = vld [vmem:[%s1874] sm:$0xf]
  %v1876 = vld [vmem:[%s1874 + $0x4] sm:$0xf]
  %v1877 = vld [vmem:[%s1874 + $0x8] sm:$0xf]
  %v1878 = vld [vmem:[%s1874 + $0xc] sm:$0xf]
  %v1883 = vunpack.c.l.b16 %v1875
  %v1884 = vunpack.c.l.b16 %v1876
  %v1885 = vunpack.c.l.b16 %v1877
  %v1886 = vunpack.c.l.b16 %v1878
  %v1887 = vpack.c.b16 %v1884, %v1883
  %v1888 = vpack.c.b16 %v1886, %v1885
  %1891 = vmatprep.subr.bf16.mxu0 0
  %1892 = vmatpush1.bf16.msra.mxu0 0
  %1893 = vmatprep.subr.bf16.mxu0 0
  %1894 = vmatpush1.bf16.msra.mxu0 0
  %1895 = vmatprep.subr.bf16.mxu0 0
  %1896 = vmatpush1.bf16.msra.mxu0 0
  %1897 = vmatprep.subr.bf16.mxu0 0
  %1898 = vmatpush1.bf16.msra.mxu0 0
  %1899 = vmatprep.subr.bf16.mxu0 0
  %1900 = vmatpush1.bf16.msra.mxu0 0
  %1901 = vmatprep.subr.bf16.mxu0 0
  %1902 = vmatpush1.bf16.msra.mxu0 0
  %1903 = vmatprep.subr.bf16.mxu0 0
  %1904 = vmatpush1.bf16.msra.mxu0 %v1888
  %1905 = vmatprep.subr.bf16.mxu0 0
  %1906 = vmatpush1.bf16.msra.mxu0 %v1887
  %1907 = vmatprep.subr.bf16.mxu0 0
  %1908 = vmatpush2.bf16.msra.mxu0 0
  %1909 = vmatprep.subr.bf16.mxu0 0
  %1910 = vmatpush2.bf16.msra.mxu0 0
  %1911 = vmatprep.subr.bf16.mxu0 0
  %1912 = vmatpush2.bf16.msra.mxu0 0
  %1913 = vmatprep.subr.bf16.mxu0 0
  %1914 = vmatpush2.bf16.msra.mxu0 0
  %1915 = vmatprep.subr.bf16.mxu0 0
  %1916 = vmatpush2.bf16.msra.mxu0 0
  %1917 = vmatprep.subr.bf16.mxu0 0
  %1918 = vmatpush2.bf16.msra.mxu0 0
  %1919 = vmatprep.subr.bf16.mxu0 0
  %1920 = vmatpush2.bf16.msra.mxu0 0
  %1921 = vmatprep.subr.bf16.mxu0 0
  %1922 = vmatpush2.bf16.msra.mxu0 0
  %1923 = vmatprep.mubr.bf16.mxu0 0
  %1924 = vmatmul.mubr.bf16.gmra.mxu0 %v1599
  %v1925 = vpop.f32.mrf.mxu0
  %v1926 = vadd.f32 0.0, %v1925
  %v1927 = vpop.f32.mrf.mxu0
  %v1928 = vpop.f32.mrf.mxu0
  %v1929 = vadd.f32 0.0, %v1928
  %v1930 = vpop.f32.mrf.mxu0
  %1931 = vdwg.mxu0
  %s1932 = scalar_lea.vmem %s3, 224
  %v1933 = vld [vmem:[%s1932] sm:$0xf]
  %v1934 = vld [vmem:[%s1932 + $0x4] sm:$0xf]
  %v1935 = vld [vmem:[%s1932 + $0x8] sm:$0xf]
  %v1936 = vld [vmem:[%s1932 + $0xc] sm:$0xf]
  %v1941 = vunpack.c.l.b16 %v1933
  %v1942 = vunpack.c.l.b16 %v1934
  %v1943 = vunpack.c.l.b16 %v1935
  %v1944 = vunpack.c.l.b16 %v1936
  %v1945 = vpack.c.b16 %v1942, %v1941
  %v1946 = vpack.c.b16 %v1944, %v1943
  %1949 = vmatprep.subr.bf16.mxu0 0
  %1950 = vmatpush1.bf16.msra.mxu0 0
  %1951 = vmatprep.subr.bf16.mxu0 0
  %1952 = vmatpush1.bf16.msra.mxu0 0
  %1953 = vmatprep.subr.bf16.mxu0 0
  %1954 = vmatpush1.bf16.msra.mxu0 0
  %1955 = vmatprep.subr.bf16.mxu0 0
  %1956 = vmatpush1.bf16.msra.mxu0 0
  %1957 = vmatprep.subr.bf16.mxu0 0
  %1958 = vmatpush1.bf16.msra.mxu0 0
  %1959 = vmatprep.subr.bf16.mxu0 0
  %1960 = vmatpush1.bf16.msra.mxu0 0
  %1961 = vmatprep.subr.bf16.mxu0 0
  %1962 = vmatpush1.bf16.msra.mxu0 %v1946
  %1963 = vmatprep.subr.bf16.mxu0 0
  %1964 = vmatpush1.bf16.msra.mxu0 %v1945
  %1965 = vmatprep.subr.bf16.mxu0 0
  %1966 = vmatpush2.bf16.msra.mxu0 0
  %1967 = vmatprep.subr.bf16.mxu0 0
  %1968 = vmatpush2.bf16.msra.mxu0 0
  %1969 = vmatprep.subr.bf16.mxu0 0
  %1970 = vmatpush2.bf16.msra.mxu0 0
  %1971 = vmatprep.subr.bf16.mxu0 0
  %1972 = vmatpush2.bf16.msra.mxu0 0
  %1973 = vmatprep.subr.bf16.mxu0 0
  %1974 = vmatpush2.bf16.msra.mxu0 0
  %1975 = vmatprep.subr.bf16.mxu0 0
  %1976 = vmatpush2.bf16.msra.mxu0 0
  %1977 = vmatprep.subr.bf16.mxu0 0
  %1978 = vmatpush2.bf16.msra.mxu0 0
  %1979 = vmatprep.subr.bf16.mxu0 0
  %1980 = vmatpush2.bf16.msra.mxu0 0
  %1981 = vmatprep.mubr.bf16.mxu0 0
  %1982 = vmatmul.mubr.bf16.gmra.mxu0 %v1599
  %v1983 = vpop.f32.mrf.mxu0
  %v1984 = vadd.f32 0.0, %v1983
  %v1985 = vpop.f32.mrf.mxu0
  %v1986 = vpop.f32.mrf.mxu0
  %v1987 = vadd.f32 0.0, %v1986
  %v1988 = vpop.f32.mrf.mxu0
  %1989 = vdwg.mxu0
  %s1990 = scalar_lea.vmem %s3, 288
  %v1991 = vld [vmem:[%s1990] sm:$0xf]
  %v1992 = vld [vmem:[%s1990 + $0x4] sm:$0xf]
  %v1993 = vld [vmem:[%s1990 + $0x8] sm:$0xf]
  %v1994 = vld [vmem:[%s1990 + $0xc] sm:$0xf]
  %v1999 = vunpack.c.l.b16 %v1991
  %v2000 = vunpack.c.l.b16 %v1992
  %v2001 = vunpack.c.l.b16 %v1993
  %v2002 = vunpack.c.l.b16 %v1994
  %v2003 = vpack.c.b16 %v2000, %v1999
  %v2004 = vpack.c.b16 %v2002, %v2001
  %2007 = vmatprep.subr.bf16.mxu0 0
  %2008 = vmatpush1.bf16.msra.mxu0 0
  %2009 = vmatprep.subr.bf16.mxu0 0
  %2010 = vmatpush1.bf16.msra.mxu0 0
  %2011 = vmatprep.subr.bf16.mxu0 0
  %2012 = vmatpush1.bf16.msra.mxu0 0
  %2013 = vmatprep.subr.bf16.mxu0 0
  %2014 = vmatpush1.bf16.msra.mxu0 0
  %2015 = vmatprep.subr.bf16.mxu0 0
  %2016 = vmatpush1.bf16.msra.mxu0 0
  %2017 = vmatprep.subr.bf16.mxu0 0
  %2018 = vmatpush1.bf16.msra.mxu0 0
  %2019 = vmatprep.subr.bf16.mxu0 0
  %2020 = vmatpush1.bf16.msra.mxu0 %v2004
  %2021 = vmatprep.subr.bf16.mxu0 0
  %2022 = vmatpush1.bf16.msra.mxu0 %v2003
  %2023 = vmatprep.subr.bf16.mxu0 0
  %2024 = vmatpush2.bf16.msra.mxu0 0
  %2025 = vmatprep.subr.bf16.mxu0 0
  %2026 = vmatpush2.bf16.msra.mxu0 0
  %2027 = vmatprep.subr.bf16.mxu0 0
  %2028 = vmatpush2.bf16.msra.mxu0 0
  %2029 = vmatprep.subr.bf16.mxu0 0
  %2030 = vmatpush2.bf16.msra.mxu0 0
  %2031 = vmatprep.subr.bf16.mxu0 0
  %2032 = vmatpush2.bf16.msra.mxu0 0
  %2033 = vmatprep.subr.bf16.mxu0 0
  %2034 = vmatpush2.bf16.msra.mxu0 0
  %2035 = vmatprep.subr.bf16.mxu0 0
  %2036 = vmatpush2.bf16.msra.mxu0 0
  %2037 = vmatprep.subr.bf16.mxu0 0
  %2038 = vmatpush2.bf16.msra.mxu0 0
  %2039 = vmatprep.mubr.bf16.mxu0 0
  %2040 = vmatmul.mubr.bf16.gmra.mxu0 %v1599
  %v2041 = vpop.f32.mrf.mxu0
  %v2042 = vadd.f32 0.0, %v2041
  %v2043 = vpop.f32.mrf.mxu0
  %v2044 = vpop.f32.mrf.mxu0
  %v2045 = vadd.f32 0.0, %v2044
  %v2046 = vpop.f32.mrf.mxu0
  %2047 = vdwg.mxu0
  %s2048 = scalar_lea.vmem %s3, 352
  %v2049 = vld [vmem:[%s2048] sm:$0xf]
  %v2050 = vld [vmem:[%s2048 + $0x4] sm:$0xf]
  %v2051 = vld [vmem:[%s2048 + $0x8] sm:$0xf]
  %v2052 = vld [vmem:[%s2048 + $0xc] sm:$0xf]
  %v2057 = vunpack.c.l.b16 %v2049
  %v2058 = vunpack.c.l.b16 %v2050
  %v2059 = vunpack.c.l.b16 %v2051
  %v2060 = vunpack.c.l.b16 %v2052
  %v2061 = vpack.c.b16 %v2058, %v2057
  %v2062 = vpack.c.b16 %v2060, %v2059
  %2065 = vmatprep.subr.bf16.mxu0 0
  %2066 = vmatpush1.bf16.msra.mxu0 0
  %2067 = vmatprep.subr.bf16.mxu0 0
  %2068 = vmatpush1.bf16.msra.mxu0 0
  %2069 = vmatprep.subr.bf16.mxu0 0
  %2070 = vmatpush1.bf16.msra.mxu0 0
  %2071 = vmatprep.subr.bf16.mxu0 0
  %2072 = vmatpush1.bf16.msra.mxu0 0
  %2073 = vmatprep.subr.bf16.mxu0 0
  %2074 = vmatpush1.bf16.msra.mxu0 0
  %2075 = vmatprep.subr.bf16.mxu0 0
  %2076 = vmatpush1.bf16.msra.mxu0 0
  %2077 = vmatprep.subr.bf16.mxu0 0
  %2078 = vmatpush1.bf16.msra.mxu0 %v2062
  %2079 = vmatprep.subr.bf16.mxu0 0
  %2080 = vmatpush1.bf16.msra.mxu0 %v2061
  %2081 = vmatprep.subr.bf16.mxu0 0
  %2082 = vmatpush2.bf16.msra.mxu0 0
  %2083 = vmatprep.subr.bf16.mxu0 0
  %2084 = vmatpush2.bf16.msra.mxu0 0
  %2085 = vmatprep.subr.bf16.mxu0 0
  %2086 = vmatpush2.bf16.msra.mxu0 0
  %2087 = vmatprep.subr.bf16.mxu0 0
  %2088 = vmatpush2.bf16.msra.mxu0 0
  %2089 = vmatprep.subr.bf16.mxu0 0
  %2090 = vmatpush2.bf16.msra.mxu0 0
  %2091 = vmatprep.subr.bf16.mxu0 0
  %2092 = vmatpush2.bf16.msra.mxu0 0
  %2093 = vmatprep.subr.bf16.mxu0 0
  %2094 = vmatpush2.bf16.msra.mxu0 0
  %2095 = vmatprep.subr.bf16.mxu0 0
  %2096 = vmatpush2.bf16.msra.mxu0 0
  %2097 = vmatprep.mubr.bf16.mxu0 0
  %2098 = vmatmul.mubr.bf16.gmra.mxu0 %v1599
  %v2099 = vpop.f32.mrf.mxu0
  %v2100 = vadd.f32 0.0, %v2099
  %v2101 = vpop.f32.mrf.mxu0
  %v2102 = vpop.f32.mrf.mxu0
  %v2103 = vadd.f32 0.0, %v2102
  %v2104 = vpop.f32.mrf.mxu0
  %2105 = vdwg.mxu0
  %s2106 = scalar_lea.vmem %s3, 240
  %v2107 = vld [vmem:[%s2106] sm:$0xf]
  %v2108 = vld [vmem:[%s2106 + $0x4] sm:$0xf]
  %v2109 = vld [vmem:[%s2106 + $0x8] sm:$0xf]
  %v2110 = vld [vmem:[%s2106 + $0xc] sm:$0xf]
  %v2115 = vunpack.c.l.b16 %v2107
  %v2116 = vunpack.c.l.b16 %v2108
  %v2117 = vunpack.c.l.b16 %v2109
  %v2118 = vunpack.c.l.b16 %v2110
  %v2119 = vpack.c.b16 %v2116, %v2115
  %v2120 = vpack.c.b16 %v2118, %v2117
  %2123 = vmatprep.subr.bf16.mxu0 0
  %2124 = vmatpush1.bf16.msra.mxu0 0
  %2125 = vmatprep.subr.bf16.mxu0 0
  %2126 = vmatpush1.bf16.msra.mxu0 0
  %2127 = vmatprep.subr.bf16.mxu0 0
  %2128 = vmatpush1.bf16.msra.mxu0 0
  %2129 = vmatprep.subr.bf16.mxu0 0
  %2130 = vmatpush1.bf16.msra.mxu0 0
  %2131 = vmatprep.subr.bf16.mxu0 0
  %2132 = vmatpush1.bf16.msra.mxu0 0
  %2133 = vmatprep.subr.bf16.mxu0 0
  %2134 = vmatpush1.bf16.msra.mxu0 0
  %2135 = vmatprep.subr.bf16.mxu0 0
  %2136 = vmatpush1.bf16.msra.mxu0 %v2120
  %2137 = vmatprep.subr.bf16.mxu0 0
  %2138 = vmatpush1.bf16.msra.mxu0 %v2119
  %2139 = vmatprep.subr.bf16.mxu0 0
  %2140 = vmatpush2.bf16.msra.mxu0 0
  %2141 = vmatprep.subr.bf16.mxu0 0
  %2142 = vmatpush2.bf16.msra.mxu0 0
  %2143 = vmatprep.subr.bf16.mxu0 0
  %2144 = vmatpush2.bf16.msra.mxu0 0
  %2145 = vmatprep.subr.bf16.mxu0 0
  %2146 = vmatpush2.bf16.msra.mxu0 0
  %2147 = vmatprep.subr.bf16.mxu0 0
  %2148 = vmatpush2.bf16.msra.mxu0 0
  %2149 = vmatprep.subr.bf16.mxu0 0
  %2150 = vmatpush2.bf16.msra.mxu0 0
  %2151 = vmatprep.subr.bf16.mxu0 0
  %2152 = vmatpush2.bf16.msra.mxu0 0
  %2153 = vmatprep.subr.bf16.mxu0 0
  %2154 = vmatpush2.bf16.msra.mxu0 0
  %2155 = vmatprep.mubr.bf16.mxu0 0
  %2156 = vmatmul.mubr.bf16.gmra.mxu0 %v1599
  %v2157 = vpop.f32.mrf.mxu0
  %v2158 = vadd.f32 0.0, %v2157
  %v2159 = vpop.f32.mrf.mxu0
  %v2160 = vpop.f32.mrf.mxu0
  %v2161 = vadd.f32 0.0, %v2160
  %v2162 = vpop.f32.mrf.mxu0
  %2163 = vdwg.mxu0
  %s2164 = scalar_lea.vmem %s3, 304
  %v2165 = vld [vmem:[%s2164] sm:$0xf]
  %v2166 = vld [vmem:[%s2164 + $0x4] sm:$0xf]
  %v2167 = vld [vmem:[%s2164 + $0x8] sm:$0xf]
  %v2168 = vld [vmem:[%s2164 + $0xc] sm:$0xf]
  %v2173 = vunpack.c.l.b16 %v2165
  %v2174 = vunpack.c.l.b16 %v2166
  %v2175 = vunpack.c.l.b16 %v2167
  %v2176 = vunpack.c.l.b16 %v2168
  %v2177 = vpack.c.b16 %v2174, %v2173
  %v2178 = vpack.c.b16 %v2176, %v2175
  %2181 = vmatprep.subr.bf16.mxu0 0
  %2182 = vmatpush1.bf16.msra.mxu0 0
  %2183 = vmatprep.subr.bf16.mxu0 0
  %2184 = vmatpush1.bf16.msra.mxu0 0
  %2185 = vmatprep.subr.bf16.mxu0 0
  %2186 = vmatpush1.bf16.msra.mxu0 0
  %2187 = vmatprep.subr.bf16.mxu0 0
  %2188 = vmatpush1.bf16.msra.mxu0 0
  %2189 = vmatprep.subr.bf16.mxu0 0
  %2190 = vmatpush1.bf16.msra.mxu0 0
  %2191 = vmatprep.subr.bf16.mxu0 0
  %2192 = vmatpush1.bf16.msra.mxu0 0
  %2193 = vmatprep.subr.bf16.mxu0 0
  %2194 = vmatpush1.bf16.msra.mxu0 %v2178
  %2195 = vmatprep.subr.bf16.mxu0 0
  %2196 = vmatpush1.bf16.msra.mxu0 %v2177
  %2197 = vmatprep.subr.bf16.mxu0 0
  %2198 = vmatpush2.bf16.msra.mxu0 0
  %2199 = vmatprep.subr.bf16.mxu0 0
  %2200 = vmatpush2.bf16.msra.mxu0 0
  %2201 = vmatprep.subr.bf16.mxu0 0
  %2202 = vmatpush2.bf16.msra.mxu0 0
  %2203 = vmatprep.subr.bf16.mxu0 0
  %2204 = vmatpush2.bf16.msra.mxu0 0
  %2205 = vmatprep.subr.bf16.mxu0 0
  %2206 = vmatpush2.bf16.msra.mxu0 0
  %2207 = vmatprep.subr.bf16.mxu0 0
  %2208 = vmatpush2.bf16.msra.mxu0 0
  %2209 = vmatprep.subr.bf16.mxu0 0
  %2210 = vmatpush2.bf16.msra.mxu0 0
  %2211 = vmatprep.subr.bf16.mxu0 0
  %2212 = vmatpush2.bf16.msra.mxu0 0
  %2213 = vmatprep.mubr.bf16.mxu0 0
  %2214 = vmatmul.mubr.bf16.gmra.mxu0 %v1599
  %v2215 = vpop.f32.mrf.mxu0
  %v2216 = vadd.f32 0.0, %v2215
  %v2217 = vpop.f32.mrf.mxu0
  %v2218 = vpop.f32.mrf.mxu0
  %v2219 = vadd.f32 0.0, %v2218
  %v2220 = vpop.f32.mrf.mxu0
  %2221 = vdwg.mxu0
  %s2222 = scalar_lea.vmem %s3, 368
  %v2223 = vld [vmem:[%s2222] sm:$0xf]
  %v2224 = vld [vmem:[%s2222 + $0x4] sm:$0xf]
  %v2225 = vld [vmem:[%s2222 + $0x8] sm:$0xf]
  %v2226 = vld [vmem:[%s2222 + $0xc] sm:$0xf]
  %v2231 = vunpack.c.l.b16 %v2223
  %v2232 = vunpack.c.l.b16 %v2224
  %v2233 = vunpack.c.l.b16 %v2225
  %v2234 = vunpack.c.l.b16 %v2226
  %v2235 = vpack.c.b16 %v2232, %v2231
  %v2236 = vpack.c.b16 %v2234, %v2233
  %2239 = vmatprep.subr.bf16.mxu0 0
  %2240 = vmatpush1.bf16.msra.mxu0 0
  %2241 = vmatprep.subr.bf16.mxu0 0
  %2242 = vmatpush1.bf16.msra.mxu0 0
  %2243 = vmatprep.subr.bf16.mxu0 0
  %2244 = vmatpush1.bf16.msra.mxu0 0
  %2245 = vmatprep.subr.bf16.mxu0 0
  %2246 = vmatpush1.bf16.msra.mxu0 0
  %2247 = vmatprep.subr.bf16.mxu0 0
  %2248 = vmatpush1.bf16.msra.mxu0 0
  %2249 = vmatprep.subr.bf16.mxu0 0
  %2250 = vmatpush1.bf16.msra.mxu0 0
  %2251 = vmatprep.subr.bf16.mxu0 0
  %2252 = vmatpush1.bf16.msra.mxu0 %v2236
  %2253 = vmatprep.subr.bf16.mxu0 0
  %2254 = vmatpush1.bf16.msra.mxu0 %v2235
  %2255 = vmatprep.subr.bf16.mxu0 0
  %2256 = vmatpush2.bf16.msra.mxu0 0
  %2257 = vmatprep.subr.bf16.mxu0 0
  %2258 = vmatpush2.bf16.msra.mxu0 0
  %2259 = vmatprep.subr.bf16.mxu0 0
  %2260 = vmatpush2.bf16.msra.mxu0 0
  %2261 = vmatprep.subr.bf16.mxu0 0
  %2262 = vmatpush2.bf16.msra.mxu0 0
  %2263 = vmatprep.subr.bf16.mxu0 0
  %2264 = vmatpush2.bf16.msra.mxu0 0
  %2265 = vmatprep.subr.bf16.mxu0 0
  %2266 = vmatpush2.bf16.msra.mxu0 0
  %2267 = vmatprep.subr.bf16.mxu0 0
  %2268 = vmatpush2.bf16.msra.mxu0 0
  %2269 = vmatprep.subr.bf16.mxu0 0
  %2270 = vmatpush2.bf16.msra.mxu0 0
  %2271 = vmatprep.mubr.bf16.mxu0 0
  %2272 = vmatmul.mubr.bf16.gmra.mxu0 %v1599
  %v2273 = vpop.f32.mrf.mxu0
  %v2274 = vadd.f32 0.0, %v2273
  %v2275 = vpop.f32.mrf.mxu0
  %v2276 = vpop.f32.mrf.mxu0
  %v2277 = vadd.f32 0.0, %v2276
  %v2278 = vpop.f32.mrf.mxu0
  %2279 = vdwg.mxu0
  %s2280 = scalar_lea.vmem %s4, 192
  %v2281 = vld [vmem:[%s2280] sm:$0xff]
  %v2282 = vld [vmem:[%s2280 + $0x8] sm:$0xff]
  %v2283 = vld [vmem:[%s2280 + $0x10] sm:$0xff]
  %v2284 = vld [vmem:[%s2280 + $0x18] sm:$0xff]
  %v2285 = vld [vmem:[%s2280 + $0x20] sm:$0xff]
  %v2286 = vld [vmem:[%s2280 + $0x28] sm:$0xff]
  %v2287 = vld [vmem:[%s2280 + $0x30] sm:$0xff]
  %v2288 = vld [vmem:[%s2280 + $0x38] sm:$0xff]
  %v2289 = vadd.f32 %v1636, %v2281
  %v2290 = vadd.f32 %v1639, %v2282
  %v2291 = vadd.f32 %v1810, %v2283
  %v2292 = vadd.f32 %v1813, %v2284
  %v2293 = vadd.f32 %v1984, %v2285
  %v2294 = vadd.f32 %v1987, %v2286
  %v2295 = vadd.f32 %v2158, %v2287
  %v2296 = vadd.f32 %v2161, %v2288
  %s2297 = scalar_lea.vmem %s4, 256
  %v2298 = vld [vmem:[%s2297] sm:$0xff]
  %v2299 = vld [vmem:[%s2297 + $0x8] sm:$0xff]
  %v2300 = vld [vmem:[%s2297 + $0x10] sm:$0xff]
  %v2301 = vld [vmem:[%s2297 + $0x18] sm:$0xff]
  %v2302 = vld [vmem:[%s2297 + $0x20] sm:$0xff]
  %v2303 = vld [vmem:[%s2297 + $0x28] sm:$0xff]
  %v2304 = vld [vmem:[%s2297 + $0x30] sm:$0xff]
  %v2305 = vld [vmem:[%s2297 + $0x38] sm:$0xff]
  %v2306 = vadd.f32 %v1694, %v2298
  %v2307 = vadd.f32 %v1697, %v2299
  %v2308 = vadd.f32 %v1868, %v2300
  %v2309 = vadd.f32 %v1871, %v2301
  %v2310 = vadd.f32 %v2042, %v2302
  %v2311 = vadd.f32 %v2045, %v2303
  %v2312 = vadd.f32 %v2216, %v2304
  %v2313 = vadd.f32 %v2219, %v2305
  %s2314 = scalar_lea.vmem %s4, 320
  %v2315 = vld [vmem:[%s2314] sm:$0xff]
  %v2316 = vld [vmem:[%s2314 + $0x8] sm:$0xff]
  %v2317 = vld [vmem:[%s2314 + $0x10] sm:$0xff]
  %v2318 = vld [vmem:[%s2314 + $0x18] sm:$0xff]
  %v2319 = vld [vmem:[%s2314 + $0x20] sm:$0xff]
  %v2320 = vld [vmem:[%s2314 + $0x28] sm:$0xff]
  %v2321 = vld [vmem:[%s2314 + $0x30] sm:$0xff]
  %v2322 = vld [vmem:[%s2314 + $0x38] sm:$0xff]
  %v2323 = vadd.f32 %v1752, %v2315
  %v2324 = vadd.f32 %v1755, %v2316
  %v2325 = vadd.f32 %v1926, %v2317
  %v2326 = vadd.f32 %v1929, %v2318
  %v2327 = vadd.f32 %v2100, %v2319
  %v2328 = vadd.f32 %v2103, %v2320
  %v2329 = vadd.f32 %v2274, %v2321
  %v2330 = vadd.f32 %v2277, %v2322
  %v2331 = vpack.c.bf16 %v2290, %v2289
  %v2332 = vpack.c.bf16 %v2292, %v2291
  %v2333 = vpack.c.bf16 %v2294, %v2293
  %v2334 = vpack.c.bf16 %v2296, %v2295
  %v2335 = vpack.c.bf16 %v2307, %v2306
  %v2336 = vpack.c.bf16 %v2309, %v2308
  %v2337 = vpack.c.bf16 %v2311, %v2310
  %v2338 = vpack.c.bf16 %v2313, %v2312
  %v2340 = vsel %vm851, %v2331, 0
  %v2343 = vsel %vm851, %v2332, 0
  %v2346 = vsel %vm851, %v2333, 0
  %v2349 = vsel %vm851, %v2334, 0
  %v2352 = vsel %vm851, %v2335, 0
  %v2355 = vsel %vm851, %v2336, 0
  %v2358 = vsel %vm851, %v2337, 0
  %v2361 = vsel %vm851, %v2338, 0
  %2363 = vmatprep.subr.bf16.mxu0 0
  %2364 = vmatpush1.bf16.xpose.msra.mxu0 0
  %2365 = vmatprep.subr.bf16.mxu0 0
  %2366 = vmatpush1.bf16.xpose.msra.mxu0 0
  %2367 = vmatprep.subr.bf16.mxu0 0
  %2368 = vmatpush1.bf16.xpose.msra.mxu0 0
  %2369 = vmatprep.subr.bf16.mxu0 0
  %2370 = vmatpush1.bf16.xpose.msra.mxu0 0
  %2371 = vmatprep.subr.bf16.mxu0 0
  %2372 = vmatpush1.bf16.xpose.msra.mxu0 %v2361
  %2373 = vmatprep.subr.bf16.mxu0 0
  %2374 = vmatpush1.bf16.xpose.msra.mxu0 %v2358
  %2375 = vmatprep.subr.bf16.mxu0 0
  %2376 = vmatpush1.bf16.xpose.msra.mxu0 %v2355
  %2377 = vmatprep.subr.bf16.mxu0 0
  %2378 = vmatpush1.bf16.xpose.msra.mxu0 %v2352
  %2379 = vmatprep.subr.bf16.mxu0 0
  %2380 = vmatpush2.bf16.xpose.msra.mxu0 0
  %2381 = vmatprep.subr.bf16.mxu0 0
  %2382 = vmatpush2.bf16.xpose.msra.mxu0 0
  %2383 = vmatprep.subr.bf16.mxu0 0
  %2384 = vmatpush2.bf16.xpose.msra.mxu0 0
  %2385 = vmatprep.subr.bf16.mxu0 0
  %2386 = vmatpush2.bf16.xpose.msra.mxu0 0
  %2387 = vmatprep.subr.bf16.mxu0 0
  %2388 = vmatpush2.bf16.xpose.msra.mxu0 0
  %2389 = vmatprep.subr.bf16.mxu0 0
  %2390 = vmatpush2.bf16.xpose.msra.mxu0 0
  %2391 = vmatprep.subr.bf16.mxu0 0
  %2392 = vmatpush2.bf16.xpose.msra.mxu0 0
  %2393 = vmatprep.subr.bf16.mxu0 0
  %2394 = vmatpush2.bf16.xpose.msra.mxu0 0
  %2395 = vmatprep.mubr.bf16.mxu0 0
  %2396 = vmatmul.mubr.bf16.gmra.mxu0 %v2340
  %v2397 = vpop.f32.mrf.mxu0
  %v2398 = vadd.f32 %v843, %v2397
  %v2399 = vpop.f32.mrf.mxu0
  %v2400 = vpop.f32.mrf.mxu0
  %v2401 = vadd.f32 %v844, %v2400
  %v2402 = vpop.f32.mrf.mxu0
  %2403 = vmatprep.mubr.bf16.mxu0 0
  %2404 = vmatmul.mubr.bf16.gmra.mxu0 %v2343
  %v2405 = vpop.f32.mrf.mxu0
  %v2406 = vadd.f32 %v845, %v2405
  %v2407 = vpop.f32.mrf.mxu0
  %v2408 = vpop.f32.mrf.mxu0
  %v2409 = vadd.f32 %v846, %v2408
  %v2410 = vpop.f32.mrf.mxu0
  %2411 = vmatprep.mubr.bf16.mxu0 0
  %2412 = vmatmul.mubr.bf16.gmra.mxu0 %v2346
  %v2413 = vpop.f32.mrf.mxu0
  %v2414 = vadd.f32 %v847, %v2413
  %v2415 = vpop.f32.mrf.mxu0
  %v2416 = vpop.f32.mrf.mxu0
  %v2417 = vadd.f32 %v848, %v2416
  %v2418 = vpop.f32.mrf.mxu0
  %2419 = vmatprep.mubr.bf16.mxu0 0
  %2420 = vmatmul.mubr.bf16.gmra.mxu0 %v2349
  %v2421 = vpop.f32.mrf.mxu0
  %v2422 = vadd.f32 %v849, %v2421
  %v2423 = vpop.f32.mrf.mxu0
  %v2424 = vpop.f32.mrf.mxu0
  %v2425 = vadd.f32 %v850, %v2424
  %v2426 = vpop.f32.mrf.mxu0
  %2427 = vdwg.mxu0
  %v2428 = vsel %vm941, %v2398, -inf
  %2429 = vmax.xlane.f32.xlu0 %v2428
  %v2430 = vpop.xlane.xlu0 %2429
  %v2431 = vsel %vm941, %v2401, -inf
  %2432 = vmax.xlane.f32.xlu0 %v2431
  %v2433 = vpop.xlane.xlu0 %2432
  %v2434 = vsel %vm941, %v2406, -inf
  %2435 = vmax.xlane.f32.xlu0 %v2434
  %v2436 = vpop.xlane.xlu0 %2435
  %v2437 = vsel %vm941, %v2409, -inf
  %2438 = vmax.xlane.f32.xlu0 %v2437
  %v2439 = vpop.xlane.xlu0 %2438
  %v2440 = vsel %vm941, %v2414, -inf
  %2441 = vmax.xlane.f32.xlu0 %v2440
  %v2442 = vpop.xlane.xlu0 %2441
  %v2443 = vsel %vm941, %v2417, -inf
  %2444 = vmax.xlane.f32.xlu0 %v2443
  %v2445 = vpop.xlane.xlu0 %2444
  %v2446 = vsel %vm941, %v2422, -inf
  %2447 = vmax.xlane.f32.xlu0 %v2446
  %v2448 = vpop.xlane.xlu0 %2447
  %v2449 = vsel %vm941, %v2425, -inf
  %2450 = vmax.xlane.f32.xlu0 %v2449
  %v2451 = vpop.xlane.xlu0 %2450
  %v2452 = vsub.f32 %v2398, %v2430
  %v2453 = vsub.f32 %v2401, %v2433
  %v2454 = vsub.f32 %v2406, %v2436
  %v2455 = vsub.f32 %v2409, %v2439
  %v2456 = vsub.f32 %v2414, %v2442
  %v2457 = vsub.f32 %v2417, %v2445
  %v2458 = vsub.f32 %v2422, %v2448
  %v2459 = vsub.f32 %v2425, %v2451
  %v2460 = vmul.f32 %v2452, 1.442695
  %v2461 = vpow.pop %v2460
  %v2462 = vmul.f32 %v2453, 1.442695
  %v2463 = vpow.pop %v2462
  %v2464 = vmul.f32 %v2454, 1.442695
  %v2465 = vpow.pop %v2464
  %v2466 = vmul.f32 %v2455, 1.442695
  %v2467 = vpow.pop %v2466
  %v2468 = vmul.f32 %v2456, 1.442695
  %v2469 = vpow.pop %v2468
  %v2470 = vmul.f32 %v2457, 1.442695
  %v2471 = vpow.pop %v2470
  %v2472 = vmul.f32 %v2458, 1.442695
  %v2473 = vpow.pop %v2472
  %v2474 = vmul.f32 %v2459, 1.442695
  %v2475 = vpow.pop %v2474
  %v2476 = vsel %vm941, %v2461, 0.0
  %2477 = vadd.xlane.f32.xlu0 %v2476
  %v2478 = vpop.xlane.xlu0 %2477
  %v2479 = vsel %vm941, %v2463, 0.0
  %2480 = vadd.xlane.f32.xlu0 %v2479
  %v2481 = vpop.xlane.xlu0 %2480
  %v2482 = vsel %vm941, %v2465, 0.0
  %2483 = vadd.xlane.f32.xlu0 %v2482
  %v2484 = vpop.xlane.xlu0 %2483
  %v2485 = vsel %vm941, %v2467, 0.0
  %2486 = vadd.xlane.f32.xlu0 %v2485
  %v2487 = vpop.xlane.xlu0 %2486
  %v2488 = vsel %vm941, %v2469, 0.0
  %2489 = vadd.xlane.f32.xlu0 %v2488
  %v2490 = vpop.xlane.xlu0 %2489
  %v2491 = vsel %vm941, %v2471, 0.0
  %2492 = vadd.xlane.f32.xlu0 %v2491
  %v2493 = vpop.xlane.xlu0 %2492
  %v2494 = vsel %vm941, %v2473, 0.0
  %2495 = vadd.xlane.f32.xlu0 %v2494
  %v2496 = vpop.xlane.xlu0 %2495
  %v2497 = vsel %vm941, %v2475, 0.0
  %2498 = vadd.xlane.f32.xlu0 %v2497
  %v2499 = vpop.xlane.xlu0 %2498
  %v2500 = vrcp.pop %v2478
  %v2501 = vmul.f32 %v2461, %v2500
  %v2502 = vrcp.pop %v2481
  %v2503 = vmul.f32 %v2463, %v2502
  %v2504 = vrcp.pop %v2484
  %v2505 = vmul.f32 %v2465, %v2504
  %v2506 = vrcp.pop %v2487
  %v2507 = vmul.f32 %v2467, %v2506
  %v2508 = vrcp.pop %v2490
  %v2509 = vmul.f32 %v2469, %v2508
  %v2510 = vrcp.pop %v2493
  %v2511 = vmul.f32 %v2471, %v2510
  %v2512 = vrcp.pop %v2496
  %v2513 = vmul.f32 %v2473, %v2512
  %v2514 = vrcp.pop %v2499
  %v2515 = vmul.f32 %v2475, %v2514
  %v2516 = vpack.c.bf16 %v2503, %v2501
  %v2517 = vpack.c.bf16 %v2507, %v2505
  %v2518 = vpack.c.bf16 %v2511, %v2509
  %v2519 = vpack.c.bf16 %v2515, %v2513
  %v2520 = vpack.c.bf16 %v2324, %v2323
  %v2521 = vpack.c.bf16 %v2326, %v2325
  %v2522 = vpack.c.bf16 %v2328, %v2327
  %v2523 = vpack.c.bf16 %v2330, %v2329
  %v2525 = vsel %vm941, %v2516, 0
  %v2528 = vsel %vm941, %v2517, 0
  %v2531 = vsel %vm941, %v2518, 0
  %v2534 = vsel %vm941, %v2519, 0
  %2536 = vmatprep.subr.bf16.mxu0 0
  %2537 = vmatpush1.bf16.msra.mxu0 0
  %2538 = vmatprep.subr.bf16.mxu0 0
  %2539 = vmatpush1.bf16.msra.mxu0 0
  %2540 = vmatprep.subr.bf16.mxu0 0
  %2541 = vmatpush1.bf16.msra.mxu0 0
  %2542 = vmatprep.subr.bf16.mxu0 0
  %2543 = vmatpush1.bf16.msra.mxu0 0
  %2544 = vmatprep.subr.bf16.mxu0 0
  %2545 = vmatpush1.bf16.msra.mxu0 %v2523
  %2546 = vmatprep.subr.bf16.mxu0 0
  %2547 = vmatpush1.bf16.msra.mxu0 %v2522
  %2548 = vmatprep.subr.bf16.mxu0 0
  %2549 = vmatpush1.bf16.msra.mxu0 %v2521
  %2550 = vmatprep.subr.bf16.mxu0 0
  %2551 = vmatpush1.bf16.msra.mxu0 %v2520
  %2552 = vmatprep.subr.bf16.mxu0 0
  %2553 = vmatpush2.bf16.msra.mxu0 0
  %2554 = vmatprep.subr.bf16.mxu0 0
  %2555 = vmatpush2.bf16.msra.mxu0 0
  %2556 = vmatprep.subr.bf16.mxu0 0
  %2557 = vmatpush2.bf16.msra.mxu0 0
  %2558 = vmatprep.subr.bf16.mxu0 0
  %2559 = vmatpush2.bf16.msra.mxu0 0
  %2560 = vmatprep.subr.bf16.mxu0 0
  %2561 = vmatpush2.bf16.msra.mxu0 0
  %2562 = vmatprep.subr.bf16.mxu0 0
  %2563 = vmatpush2.bf16.msra.mxu0 0
  %2564 = vmatprep.subr.bf16.mxu0 0
  %2565 = vmatpush2.bf16.msra.mxu0 0
  %2566 = vmatprep.subr.bf16.mxu0 0
  %2567 = vmatpush2.bf16.msra.mxu0 0
  %2568 = vmatprep.mubr.bf16.mxu0 0
  %2569 = vmatmul.mubr.bf16.gmra.mxu0 %v2525
  %v2570 = vpop.f32.mrf.mxu0
  %v2571 = vadd.f32 0.0, %v2570
  %v2572 = vpop.f32.mrf.mxu0
  %v2573 = vpop.f32.mrf.mxu0
  %v2574 = vadd.f32 0.0, %v2573
  %v2575 = vpop.f32.mrf.mxu0
  %2576 = vmatprep.mubr.bf16.mxu0 0
  %2577 = vmatmul.mubr.bf16.gmra.mxu0 %v2528
  %v2578 = vpop.f32.mrf.mxu0
  %v2579 = vadd.f32 0.0, %v2578
  %v2580 = vpop.f32.mrf.mxu0
  %v2581 = vpop.f32.mrf.mxu0
  %v2582 = vadd.f32 0.0, %v2581
  %v2583 = vpop.f32.mrf.mxu0
  %2584 = vmatprep.mubr.bf16.mxu0 0
  %2585 = vmatmul.mubr.bf16.gmra.mxu0 %v2531
  %v2586 = vpop.f32.mrf.mxu0
  %v2587 = vadd.f32 0.0, %v2586
  %v2588 = vpop.f32.mrf.mxu0
  %v2589 = vpop.f32.mrf.mxu0
  %v2590 = vadd.f32 0.0, %v2589
  %v2591 = vpop.f32.mrf.mxu0
  %2592 = vmatprep.mubr.bf16.mxu0 0
  %2593 = vmatmul.mubr.bf16.gmra.mxu0 %v2534
  %v2594 = vpop.f32.mrf.mxu0
  %v2595 = vadd.f32 0.0, %v2594
  %v2596 = vpop.f32.mrf.mxu0
  %v2597 = vpop.f32.mrf.mxu0
  %v2598 = vadd.f32 0.0, %v2597
  %v2599 = vpop.f32.mrf.mxu0
  %2600 = vdwg.mxu0
  %v2601 = vld [vmem:[%s9 + $0x8] sm:$0x1]
  %v2602 = vpack.c.bf16 %v2574, %v2571
  %s2603 = scalar_lea.vmem %s5, 16
  %v2604 = vld [vmem:[%s2603] sm:$0xf]
  %v2606 = vsel %vm851, %v2602, 0
  %v2609 = vsel %vm1121, %v2604, 0
  %2611 = vmatprep.subr.bf16.mxu0 0
  %2612 = vmatpush1.bf16.msra.mxu0 0
  %2613 = vmatprep.subr.bf16.mxu0 0
  %2614 = vmatpush1.bf16.msra.mxu0 0
  %2615 = vmatprep.subr.bf16.mxu0 0
  %2616 = vmatpush1.bf16.msra.mxu0 0
  %2617 = vmatprep.subr.bf16.mxu0 0
  %2618 = vmatpush1.bf16.msra.mxu0 0
  %2619 = vmatprep.subr.bf16.mxu0 0
  %2620 = vmatpush1.bf16.msra.mxu0 0
  %2621 = vmatprep.subr.bf16.mxu0 0
  %2622 = vmatpush1.bf16.msra.mxu0 0
  %2623 = vmatprep.subr.bf16.mxu0 0
  %2624 = vmatpush1.bf16.msra.mxu0 0
  %2625 = vmatprep.subr.bf16.mxu0 0
  %2626 = vmatpush1.bf16.msra.mxu0 %v2609
  %2627 = vmatprep.subr.bf16.mxu0 0
  %2628 = vmatpush2.bf16.msra.mxu0 0
  %2629 = vmatprep.subr.bf16.mxu0 0
  %2630 = vmatpush2.bf16.msra.mxu0 0
  %2631 = vmatprep.subr.bf16.mxu0 0
  %2632 = vmatpush2.bf16.msra.mxu0 0
  %2633 = vmatprep.subr.bf16.mxu0 0
  %2634 = vmatpush2.bf16.msra.mxu0 0
  %2635 = vmatprep.subr.bf16.mxu0 0
  %2636 = vmatpush2.bf16.msra.mxu0 0
  %2637 = vmatprep.subr.bf16.mxu0 0
  %2638 = vmatpush2.bf16.msra.mxu0 0
  %2639 = vmatprep.subr.bf16.mxu0 0
  %2640 = vmatpush2.bf16.msra.mxu0 0
  %2641 = vmatprep.subr.bf16.mxu0 0
  %2642 = vmatpush2.bf16.msra.mxu0 0
  %2643 = vmatprep.mubr.bf16.mxu0 0
  %2644 = vmatmul.mubr.bf16.gmra.mxu0 %v2606
  %v2645 = vpop.f32.mrf.mxu0
  %v2646 = vadd.f32 0.0, %v2645
  %v2647 = vpop.f32.mrf.mxu0
  %v2648 = vpop.f32.mrf.mxu0
  %v2649 = vadd.f32 0.0, %v2648
  %v2650 = vpop.f32.mrf.mxu0
  %2651 = vdwg.mxu0
  %v2652 = vlaneseq
  %v2653 = vshrl.u32 %v2652, 7
  %v2654 = vsub.s32 0, %v2653
  %v2655 = vrot.slane %v2601, %v2654
  %v2656 = vadd.f32 %v2655, %v2646
  %v2657 = vadd.f32 %v2655, %v2649
  %v2658 = vpack.c.bf16 %v2582, %v2579
  %s2659 = scalar_lea.vmem %s5, 20
  %v2660 = vld [vmem:[%s2659] sm:$0xf]
  %v2662 = vsel %vm851, %v2658, 0
  %v2665 = vsel %vm1121, %v2660, 0
  %2667 = vmatprep.subr.bf16.mxu0 0
  %2668 = vmatpush1.bf16.msra.mxu0 0
  %2669 = vmatprep.subr.bf16.mxu0 0
  %2670 = vmatpush1.bf16.msra.mxu0 0
  %2671 = vmatprep.subr.bf16.mxu0 0
  %2672 = vmatpush1.bf16.msra.mxu0 0
  %2673 = vmatprep.subr.bf16.mxu0 0
  %2674 = vmatpush1.bf16.msra.mxu0 0
  %2675 = vmatprep.subr.bf16.mxu0 0
  %2676 = vmatpush1.bf16.msra.mxu0 0
  %2677 = vmatprep.subr.bf16.mxu0 0
  %2678 = vmatpush1.bf16.msra.mxu0 0
  %2679 = vmatprep.subr.bf16.mxu0 0
  %2680 = vmatpush1.bf16.msra.mxu0 0
  %2681 = vmatprep.subr.bf16.mxu0 0
  %2682 = vmatpush1.bf16.msra.mxu0 %v2665
  %2683 = vmatprep.subr.bf16.mxu0 0
  %2684 = vmatpush2.bf16.msra.mxu0 0
  %2685 = vmatprep.subr.bf16.mxu0 0
  %2686 = vmatpush2.bf16.msra.mxu0 0
  %2687 = vmatprep.subr.bf16.mxu0 0
  %2688 = vmatpush2.bf16.msra.mxu0 0
  %2689 = vmatprep.subr.bf16.mxu0 0
  %2690 = vmatpush2.bf16.msra.mxu0 0
  %2691 = vmatprep.subr.bf16.mxu0 0
  %2692 = vmatpush2.bf16.msra.mxu0 0
  %2693 = vmatprep.subr.bf16.mxu0 0
  %2694 = vmatpush2.bf16.msra.mxu0 0
  %2695 = vmatprep.subr.bf16.mxu0 0
  %2696 = vmatpush2.bf16.msra.mxu0 0
  %2697 = vmatprep.subr.bf16.mxu0 0
  %2698 = vmatpush2.bf16.msra.mxu0 0
  %2699 = vmatprep.mubr.bf16.mxu0 0
  %2700 = vmatmul.mubr.bf16.gmra.mxu0 %v2662
  %v2701 = vpop.f32.mrf.mxu0
  %v2702 = vadd.f32 0.0, %v2701
  %v2703 = vpop.f32.mrf.mxu0
  %v2704 = vpop.f32.mrf.mxu0
  %v2705 = vadd.f32 0.0, %v2704
  %v2706 = vpop.f32.mrf.mxu0
  %2707 = vdwg.mxu0
  %v2708 = vadd.f32 %v2656, %v2702
  %v2709 = vadd.f32 %v2657, %v2705
  %v2710 = vpack.c.bf16 %v2590, %v2587
  %s2711 = scalar_lea.vmem %s5, 24
  %v2712 = vld [vmem:[%s2711] sm:$0xf]
  %v2714 = vsel %vm851, %v2710, 0
  %v2717 = vsel %vm1121, %v2712, 0
  %2719 = vmatprep.subr.bf16.mxu0 0
  %2720 = vmatpush1.bf16.msra.mxu0 0
  %2721 = vmatprep.subr.bf16.mxu0 0
  %2722 = vmatpush1.bf16.msra.mxu0 0
  %2723 = vmatprep.subr.bf16.mxu0 0
  %2724 = vmatpush1.bf16.msra.mxu0 0
  %2725 = vmatprep.subr.bf16.mxu0 0
  %2726 = vmatpush1.bf16.msra.mxu0 0
  %2727 = vmatprep.subr.bf16.mxu0 0
  %2728 = vmatpush1.bf16.msra.mxu0 0
  %2729 = vmatprep.subr.bf16.mxu0 0
  %2730 = vmatpush1.bf16.msra.mxu0 0
  %2731 = vmatprep.subr.bf16.mxu0 0
  %2732 = vmatpush1.bf16.msra.mxu0 0
  %2733 = vmatprep.subr.bf16.mxu0 0
  %2734 = vmatpush1.bf16.msra.mxu0 %v2717
  %2735 = vmatprep.subr.bf16.mxu0 0
  %2736 = vmatpush2.bf16.msra.mxu0 0
  %2737 = vmatprep.subr.bf16.mxu0 0
  %2738 = vmatpush2.bf16.msra.mxu0 0
  %2739 = vmatprep.subr.bf16.mxu0 0
  %2740 = vmatpush2.bf16.msra.mxu0 0
  %2741 = vmatprep.subr.bf16.mxu0 0
  %2742 = vmatpush2.bf16.msra.mxu0 0
  %2743 = vmatprep.subr.bf16.mxu0 0
  %2744 = vmatpush2.bf16.msra.mxu0 0
  %2745 = vmatprep.subr.bf16.mxu0 0
  %2746 = vmatpush2.bf16.msra.mxu0 0
  %2747 = vmatprep.subr.bf16.mxu0 0
  %2748 = vmatpush2.bf16.msra.mxu0 0
  %2749 = vmatprep.subr.bf16.mxu0 0
  %2750 = vmatpush2.bf16.msra.mxu0 0
  %2751 = vmatprep.mubr.bf16.mxu0 0
  %2752 = vmatmul.mubr.bf16.gmra.mxu0 %v2714
  %v2753 = vpop.f32.mrf.mxu0
  %v2754 = vadd.f32 0.0, %v2753
  %v2755 = vpop.f32.mrf.mxu0
  %v2756 = vpop.f32.mrf.mxu0
  %v2757 = vadd.f32 0.0, %v2756
  %v2758 = vpop.f32.mrf.mxu0
  %2759 = vdwg.mxu0
  %v2760 = vadd.f32 %v2708, %v2754
  %v2761 = vadd.f32 %v2709, %v2757
  %v2762 = vpack.c.bf16 %v2598, %v2595
  %s2763 = scalar_lea.vmem %s5, 28
  %v2764 = vld [vmem:[%s2763] sm:$0xf]
  %v2766 = vsel %vm851, %v2762, 0
  %v2769 = vsel %vm1121, %v2764, 0
  %2771 = vmatprep.subr.bf16.mxu0 0
  %2772 = vmatpush1.bf16.msra.mxu0 0
  %2773 = vmatprep.subr.bf16.mxu0 0
  %2774 = vmatpush1.bf16.msra.mxu0 0
  %2775 = vmatprep.subr.bf16.mxu0 0
  %2776 = vmatpush1.bf16.msra.mxu0 0
  %2777 = vmatprep.subr.bf16.mxu0 0
  %2778 = vmatpush1.bf16.msra.mxu0 0
  %2779 = vmatprep.subr.bf16.mxu0 0
  %2780 = vmatpush1.bf16.msra.mxu0 0
  %2781 = vmatprep.subr.bf16.mxu0 0
  %2782 = vmatpush1.bf16.msra.mxu0 0
  %2783 = vmatprep.subr.bf16.mxu0 0
  %2784 = vmatpush1.bf16.msra.mxu0 0
  %2785 = vmatprep.subr.bf16.mxu0 0
  %2786 = vmatpush1.bf16.msra.mxu0 %v2769
  %2787 = vmatprep.subr.bf16.mxu0 0
  %2788 = vmatpush2.bf16.msra.mxu0 0
  %2789 = vmatprep.subr.bf16.mxu0 0
  %2790 = vmatpush2.bf16.msra.mxu0 0
  %2791 = vmatprep.subr.bf16.mxu0 0
  %2792 = vmatpush2.bf16.msra.mxu0 0
  %2793 = vmatprep.subr.bf16.mxu0 0
  %2794 = vmatpush2.bf16.msra.mxu0 0
  %2795 = vmatprep.subr.bf16.mxu0 0
  %2796 = vmatpush2.bf16.msra.mxu0 0
  %2797 = vmatprep.subr.bf16.mxu0 0
  %2798 = vmatpush2.bf16.msra.mxu0 0
  %2799 = vmatprep.subr.bf16.mxu0 0
  %2800 = vmatpush2.bf16.msra.mxu0 0
  %2801 = vmatprep.subr.bf16.mxu0 0
  %2802 = vmatpush2.bf16.msra.mxu0 0
  %2803 = vmatprep.mubr.bf16.mxu0 0
  %2804 = vmatmul.mubr.bf16.gmra.mxu0 %v2766
  %v2805 = vpop.f32.mrf.mxu0
  %v2806 = vadd.f32 0.0, %v2805
  %v2807 = vpop.f32.mrf.mxu0
  %v2808 = vpop.f32.mrf.mxu0
  %v2809 = vadd.f32 0.0, %v2808
  %v2810 = vpop.f32.mrf.mxu0
  %2811 = vdwg.mxu0
  %v2812 = vadd.f32 %v2760, %v2806
  %v2813 = vadd.f32 %v2761, %v2809
  %v2814 = vadd.f32 %v2812, %v1578
  %v2815 = vadd.f32 %v2813, %v1579
  %v2816 = vld [vmem:[%s9 + $0x9] sm:$0x1]
  %v2817 = vld [vmem:[%s9 + $0xa] sm:$0x1]
  %v2818 = vsel %vm46, %v2814, 0.0
  %2819 = vadd.xlane.f32.xlu0 %v2818
  %v2820 = vpop.xlane.xlu0 %2819
  %v2821 = vsel %vm46, %v2815, 0.0
  %2822 = vadd.xlane.f32.xlu0 %v2821
  %v2823 = vpop.xlane.xlu0 %2822
  %v2824 = vmul.f32 %v2820, %v53
  %v2825 = vmul.f32 %v2823, %v53
  %v2826 = vsub.f32 %v2814, %v2824
  %v2827 = vsub.f32 %v2815, %v2825
  %v2828 = vmul.f32 %v2826, %v2826
  %v2829 = vmul.f32 %v2827, %v2827
  %v2830 = vsel %vm46, %v2828, 0.0
  %2831 = vadd.xlane.f32.xlu0 %v2830
  %v2832 = vpop.xlane.xlu0 %2831
  %v2833 = vsel %vm46, %v2829, 0.0
  %2834 = vadd.xlane.f32.xlu0 %v2833
  %v2835 = vpop.xlane.xlu0 %2834
  %v2836 = vmul.f32 %v2832, %v53
  %v2837 = vmul.f32 %v2835, %v53
  %v2838 = vadd.f32 %v2836, 1e-05
  %v2839 = vadd.f32 %v2837, 1e-05
  %v2840 = vrsqrt.pop %v2838
  %v2841 = vrsqrt.pop %v2839
  %v2842 = vmul.f32 %v2826, %v2840
  %v2843 = vmul.f32 %v2827, %v2841
  %v2844 = vlaneseq
  %v2845 = vshrl.u32 %v2844, 7
  %v2846 = vsub.s32 0, %v2845
  %v2847 = vrot.slane %v2816, %v2846
  %v2848 = vmul.f32 %v2842, %v2847
  %v2849 = vmul.f32 %v2843, %v2847
  %v2850 = vlaneseq
  %v2851 = vshrl.u32 %v2850, 7
  %v2852 = vsub.s32 0, %v2851
  %v2853 = vrot.slane %v2817, %v2852
  %v2854 = vadd.f32 %v2848, %v2853
  %v2855 = vadd.f32 %v2849, %v2853
  %v2856 = vpack.c.bf16 %v2855, %v2854
  %s2857 = scalar_lea.vmem %s6, 16
  %v2858 = vld [vmem:[%s2857] sm:$0xf]
  %v2859 = vld [vmem:[%s2857 + $0x4] sm:$0xf]
  %v2860 = vld [vmem:[%s2857 + $0x8] sm:$0xf]
  %v2861 = vld [vmem:[%s2857 + $0xc] sm:$0xf]
  %s2862 = scalar_lea.vmem %s7, 1
  %v2863 = vld [vmem:[%s2862] sm:$0x1]
  %v2865 = vlaneseq
  %v2866 = vshrl.u32 %v2865, 7
  %v2867 = vsub.s32 0, %v2866
  %v2868 = vrot.slane %v2863, %v2867
  %v2874 = vunpack.c.l.b16 %v2858
  %v2875 = vunpack.c.l.b16 %v2859
  %v2876 = vunpack.c.l.b16 %v2860
  %v2877 = vunpack.c.l.b16 %v2861
  %v2878 = vpack.c.b16 %v2875, %v2874
  %v2879 = vpack.c.b16 %v2877, %v2876
  %v2883 = vsel %vm46, %v2856, 0
  %2885 = vmatprep.subr.bf16.mxu0 0
  %2886 = vmatpush1.bf16.msra.mxu0 0
  %2887 = vmatprep.subr.bf16.mxu0 0
  %2888 = vmatpush1.bf16.msra.mxu0 0
  %2889 = vmatprep.subr.bf16.mxu0 0
  %2890 = vmatpush1.bf16.msra.mxu0 0
  %2891 = vmatprep.subr.bf16.mxu0 0
  %2892 = vmatpush1.bf16.msra.mxu0 0
  %2893 = vmatprep.subr.bf16.mxu0 0
  %2894 = vmatpush1.bf16.msra.mxu0 0
  %2895 = vmatprep.subr.bf16.mxu0 0
  %2896 = vmatpush1.bf16.msra.mxu0 0
  %2897 = vmatprep.subr.bf16.mxu0 0
  %2898 = vmatpush1.bf16.msra.mxu0 %v2879
  %2899 = vmatprep.subr.bf16.mxu0 0
  %2900 = vmatpush1.bf16.msra.mxu0 %v2878
  %2901 = vmatprep.subr.bf16.mxu0 0
  %2902 = vmatpush2.bf16.msra.mxu0 0
  %2903 = vmatprep.subr.bf16.mxu0 0
  %2904 = vmatpush2.bf16.msra.mxu0 0
  %2905 = vmatprep.subr.bf16.mxu0 0
  %2906 = vmatpush2.bf16.msra.mxu0 0
  %2907 = vmatprep.subr.bf16.mxu0 0
  %2908 = vmatpush2.bf16.msra.mxu0 0
  %2909 = vmatprep.subr.bf16.mxu0 0
  %2910 = vmatpush2.bf16.msra.mxu0 0
  %2911 = vmatprep.subr.bf16.mxu0 0
  %2912 = vmatpush2.bf16.msra.mxu0 0
  %2913 = vmatprep.subr.bf16.mxu0 0
  %2914 = vmatpush2.bf16.msra.mxu0 0
  %2915 = vmatprep.subr.bf16.mxu0 0
  %2916 = vmatpush2.bf16.msra.mxu0 0
  %2917 = vmatprep.mubr.bf16.mxu0 0
  %2918 = vmatmul.mubr.bf16.gmra.mxu0 %v2883
  %v2919 = vpop.f32.mrf.mxu0
  %v2920 = vadd.f32 %v2868, %v2919
  %v2921 = vpop.f32.mrf.mxu0
  %v2922 = vpop.f32.mrf.mxu0
  %v2923 = vadd.f32 %v2868, %v2922
  %v2924 = vpop.f32.mrf.mxu0
  %2925 = vdwg.mxu0
  %v2926 = vmul.f32 %v2920, 0.5
  %v2927 = vmul.f32 %v2923, 0.5
  %v2928 = vmul.f32 %v2920, 0.044715
  %v2929 = vmul.f32 %v2923, 0.044715
  %v2930 = vmul.f32 %v2928, %v2920
  %v2931 = vmul.f32 %v2929, %v2923
  %v2932 = vmul.f32 %v2930, %v2920
  %v2933 = vmul.f32 %v2931, %v2923
  %v2934 = vadd.f32 %v2920, %v2932
  %v2935 = vadd.f32 %v2923, %v2933
  %v2936 = vmul.f32 %v2934, 0.7978846
  %v2937 = vmul.f32 %v2935, 0.7978846
  %v2938 = vtanh.pop %v2936
  %v2939 = vtanh.pop %v2937
  %v2940 = vadd.f32 %v2938, 1.0
  %v2941 = vadd.f32 %v2939, 1.0
  %v2942 = vmul.f32 %v2926, %v2940
  %v2943 = vmul.f32 %v2927, %v2941
  %v2944 = vpack.c.bf16 %v2943, %v2942
  %s2945 = scalar_lea.vmem %s8, 32
  %v2946 = vld [vmem:[%s2945] sm:$0xf]
  %v2947 = vld [vmem:[%s2945 + $0x4] sm:$0xf]
  %v2948 = vld [vmem:[%s2945 + $0x8] sm:$0xf]
  %v2949 = vld [vmem:[%s2945 + $0xc] sm:$0xf]
  %v2950 = vld [vmem:[%s2945 + $0x10] sm:$0xf]
  %v2951 = vld [vmem:[%s2945 + $0x14] sm:$0xf]
  %v2952 = vld [vmem:[%s2945 + $0x18] sm:$0xf]
  %v2953 = vld [vmem:[%s2945 + $0x1c] sm:$0xf]
  %v2954 = vld [vmem:[%s9 + $0xb] sm:$0x1]
  %v2955 = vlaneseq
  %v2956 = vshrl.u32 %v2955, 7
  %v2957 = vsub.s32 0, %v2956
  %v2958 = vrot.slane %v2954, %v2957
  %v2967 = vunpack.c.l.b16 %v2946
  %v2968 = vunpack.c.l.b16 %v2947
  %v2969 = vunpack.c.l.b16 %v2948
  %v2970 = vunpack.c.l.b16 %v2949
  %v2971 = vunpack.c.l.b16 %v2950
  %v2972 = vunpack.c.l.b16 %v2951
  %v2973 = vunpack.c.l.b16 %v2952
  %v2974 = vunpack.c.l.b16 %v2953
  %v2975 = vpack.c.b16 %v2968, %v2967
  %v2976 = vpack.c.b16 %v2970, %v2969
  %v2977 = vpack.c.b16 %v2972, %v2971
  %v2978 = vpack.c.b16 %v2974, %v2973
  %v2984 = vsel %vm941, %v2944, 0
  %2986 = vmatprep.subr.bf16.mxu0 0
  %2987 = vmatpush1.bf16.msra.mxu0 0
  %2988 = vmatprep.subr.bf16.mxu0 0
  %2989 = vmatpush1.bf16.msra.mxu0 0
  %2990 = vmatprep.subr.bf16.mxu0 0
  %2991 = vmatpush1.bf16.msra.mxu0 0
  %2992 = vmatprep.subr.bf16.mxu0 0
  %2993 = vmatpush1.bf16.msra.mxu0 0
  %2994 = vmatprep.subr.bf16.mxu0 0
  %2995 = vmatpush1.bf16.msra.mxu0 %v2978
  %2996 = vmatprep.subr.bf16.mxu0 0
  %2997 = vmatpush1.bf16.msra.mxu0 %v2977
  %2998 = vmatprep.subr.bf16.mxu0 0
  %2999 = vmatpush1.bf16.msra.mxu0 %v2976
  %3000 = vmatprep.subr.bf16.mxu0 0
  %3001 = vmatpush1.bf16.msra.mxu0 %v2975
  %3002 = vmatprep.subr.bf16.mxu0 0
  %3003 = vmatpush2.bf16.msra.mxu0 0
  %3004 = vmatprep.subr.bf16.mxu0 0
  %3005 = vmatpush2.bf16.msra.mxu0 0
  %3006 = vmatprep.subr.bf16.mxu0 0
  %3007 = vmatpush2.bf16.msra.mxu0 0
  %3008 = vmatprep.subr.bf16.mxu0 0
  %3009 = vmatpush2.bf16.msra.mxu0 0
  %3010 = vmatprep.subr.bf16.mxu0 0
  %3011 = vmatpush2.bf16.msra.mxu0 0
  %3012 = vmatprep.subr.bf16.mxu0 0
  %3013 = vmatpush2.bf16.msra.mxu0 0
  %3014 = vmatprep.subr.bf16.mxu0 0
  %3015 = vmatpush2.bf16.msra.mxu0 0
  %3016 = vmatprep.subr.bf16.mxu0 0
  %3017 = vmatpush2.bf16.msra.mxu0 0
  %3018 = vmatprep.mubr.bf16.mxu0 0
  %3019 = vmatmul.mubr.bf16.gmra.mxu0 %v2984
  %v3020 = vpop.f32.mrf.mxu0
  %v3021 = vadd.f32 %v2958, %v3020
  %v3022 = vpop.f32.mrf.mxu0
  %v3023 = vpop.f32.mrf.mxu0
  %v3024 = vadd.f32 %v2958, %v3023
  %v3025 = vpop.f32.mrf.mxu0
  %3026 = vdwg.mxu0
  %v3027 = vadd.f32 %v3021, %v2854
  %v3028 = vadd.f32 %v3024, %v2855
  %v3029 = vld [vmem:[%s9 + $0xc] sm:$0x1]
  %v3030 = vld [vmem:[%s9 + $0xd] sm:$0x1]
  %v3031 = vsel %vm46, %v3027, 0.0
  %3032 = vadd.xlane.f32.xlu0 %v3031
  %v3033 = vpop.xlane.xlu0 %3032
  %v3034 = vsel %vm46, %v3028, 0.0
  %3035 = vadd.xlane.f32.xlu0 %v3034
  %v3036 = vpop.xlane.xlu0 %3035
  %v3037 = vmul.f32 %v3033, %v53
  %v3038 = vmul.f32 %v3036, %v53
  %v3039 = vsub.f32 %v3027, %v3037
  %v3040 = vsub.f32 %v3028, %v3038
  %v3041 = vmul.f32 %v3039, %v3039
  %v3042 = vmul.f32 %v3040, %v3040
  %v3043 = vsel %vm46, %v3041, 0.0
  %3044 = vadd.xlane.f32.xlu0 %v3043
  %v3045 = vpop.xlane.xlu0 %3044
  %v3046 = vsel %vm46, %v3042, 0.0
  %3047 = vadd.xlane.f32.xlu0 %v3046
  %v3048 = vpop.xlane.xlu0 %3047
  %v3049 = vmul.f32 %v3045, %v53
  %v3050 = vmul.f32 %v3048, %v53
  %v3051 = vadd.f32 %v3049, 1e-05
  %v3052 = vadd.f32 %v3050, 1e-05
  %v3053 = vrsqrt.pop %v3051
  %v3054 = vrsqrt.pop %v3052
  %v3055 = vmul.f32 %v3039, %v3053
  %v3056 = vmul.f32 %v3040, %v3054
  %v3057 = vlaneseq
  %v3058 = vshrl.u32 %v3057, 7
  %v3059 = vsub.s32 0, %v3058
  %v3060 = vrot.slane %v3029, %v3059
  %v3061 = vmul.f32 %v3055, %v3060
  %v3062 = vmul.f32 %v3056, %v3060
  %v3063 = vlaneseq
  %v3064 = vshrl.u32 %v3063, 7
  %v3065 = vsub.s32 0, %v3064
  %v3066 = vrot.slane %v3030, %v3065
  %v3067 = vadd.f32 %v3061, %v3066
  %v3068 = vadd.f32 %v3062, %v3066
  %v3069 = vld [vmem:[%s2] sm:$0xff]
  %vm3070 = vcmask 130048
  %v3072 = vsel %vm3070, %v3069, 0
  %3074 = vmatprep.subr.mxu0 0.0
  %3075 = vmatpush1.msra.mxu0 0.0
  %3076 = vmatprep.subr.mxu0 0.0
  %3077 = vmatpush1.msra.mxu0 0.0
  %3078 = vmatprep.subr.mxu0 0.0
  %3079 = vmatpush1.msra.mxu0 0.0
  %3080 = vmatprep.subr.mxu0 0.0
  %3081 = vmatpush1.msra.mxu0 0.0
  %3082 = vmatprep.subr.mxu0 0.0
  %3083 = vmatpush1.msra.mxu0 0.0
  %3084 = vmatprep.subr.mxu0 0.0
  %3085 = vmatpush1.msra.mxu0 0.0
  %3086 = vmatprep.subr.mxu0 0.0
  %3087 = vmatpush1.msra.mxu0 0.0
  %3088 = vmatprep.subr.mxu0 0.0
  %3089 = vmatpush1.msra.mxu0 0.0
  %3090 = vmatprep.subr.mxu0 0.0
  %3091 = vmatpush1.msra.mxu0 0.0
  %3092 = vmatprep.subr.mxu0 0.0
  %3093 = vmatpush1.msra.mxu0 0.0
  %3094 = vmatprep.subr.mxu0 0.0
  %3095 = vmatpush1.msra.mxu0 0.0
  %3096 = vmatprep.subr.mxu0 0.0
  %3097 = vmatpush1.msra.mxu0 0.0
  %3098 = vmatprep.subr.mxu0 0.0
  %3099 = vmatpush1.msra.mxu0 0.0
  %3100 = vmatprep.subr.mxu0 0.0
  %3101 = vmatpush1.msra.mxu0 0.0
  %3102 = vmatprep.subr.mxu0 0.0
  %3103 = vmatpush1.msra.mxu0 %v3068
  %3104 = vmatprep.subr.mxu0 0.0
  %3105 = vmatpush1.msra.mxu0 %v3067
  %3106 = vmatprep.subr.mxu0 0.0
  %3107 = vmatpush2.msra.mxu0 0.0
  %3108 = vmatprep.subr.mxu0 0.0
  %3109 = vmatpush2.msra.mxu0 0.0
  %3110 = vmatprep.subr.mxu0 0.0
  %3111 = vmatpush2.msra.mxu0 0.0
  %3112 = vmatprep.subr.mxu0 0.0
  %3113 = vmatpush2.msra.mxu0 0.0
  %3114 = vmatprep.subr.mxu0 0.0
  %3115 = vmatpush2.msra.mxu0 0.0
  %3116 = vmatprep.subr.mxu0 0.0
  %3117 = vmatpush2.msra.mxu0 0.0
  %3118 = vmatprep.subr.mxu0 0.0
  %3119 = vmatpush2.msra.mxu0 0.0
  %3120 = vmatprep.subr.mxu0 0.0
  %3121 = vmatpush2.msra.mxu0 0.0
  %3122 = vmatprep.subr.mxu0 0.0
  %3123 = vmatpush2.msra.mxu0 0.0
  %3124 = vmatprep.subr.mxu0 0.0
  %3125 = vmatpush2.msra.mxu0 0.0
  %3126 = vmatprep.subr.mxu0 0.0
  %3127 = vmatpush2.msra.mxu0 0.0
  %3128 = vmatprep.subr.mxu0 0.0
  %3129 = vmatpush2.msra.mxu0 0.0
  %3130 = vmatprep.subr.mxu0 0.0
  %3131 = vmatpush2.msra.mxu0 0.0
  %3132 = vmatprep.subr.mxu0 0.0
  %3133 = vmatpush2.msra.mxu0 0.0
  %3134 = vmatprep.subr.mxu0 0.0
  %3135 = vmatpush2.msra.mxu0 0.0
  %3136 = vmatprep.subr.mxu0 0.0
  %3137 = vmatpush2.msra.mxu0 0.0
  %3138 = vmatprep.mubr.f32.mxu0 0.0
  %3139 = vmatmul.mubr.f32.gmra.mxu0 %v3072
  %v3140 = vpop.f32.mrf.mxu0
  %v3141 = vadd.f32 0.0, %v3140
  %v3142 = vpop.f32.mrf.mxu0
  %3143 = vdwg.mxu0
  %v3144 = vpack.c.bf16 %v3141, %v3141
  %v3145 = vld [vmem:[%s10] sm:$0xf]
  %v3146 = vld [vmem:[%s10 + $0x4] sm:$0xf]
  %v3147 = vld [vmem:[%s10 + $0x8] sm:$0xf]
  %v3148 = vld [vmem:[%s10 + $0xc] sm:$0xf]
  %v3149 = vld [vmem:[%s9 + $0xe] sm:$0x1]
  %v3150 = vlaneseq
  %v3151 = vshrl.u32 %v3150, 7
  %v3152 = vsub.s32 0, %v3151
  %v3153 = vrot.slane %v3149, %v3152
  %v3158 = vunpack.c.l.b16 %v3145
  %v3159 = vunpack.c.l.b16 %v3146
  %v3160 = vunpack.c.l.b16 %v3147
  %v3161 = vunpack.c.l.b16 %v3148
  %v3162 = vpack.c.b16 %v3159, %v3158
  %v3163 = vpack.c.b16 %v3161, %v3160
  %v3167 = vsel %vm46, %v3144, 0
  %3169 = vmatprep.subr.bf16.mxu0 0
  %3170 = vmatpush1.bf16.msra.mxu0 0
  %3171 = vmatprep.subr.bf16.mxu0 0
  %3172 = vmatpush1.bf16.msra.mxu0 0
  %3173 = vmatprep.subr.bf16.mxu0 0
  %3174 = vmatpush1.bf16.msra.mxu0 0
  %3175 = vmatprep.subr.bf16.mxu0 0
  %3176 = vmatpush1.bf16.msra.mxu0 0
  %3177 = vmatprep.subr.bf16.mxu0 0
  %3178 = vmatpush1.bf16.msra.mxu0 0
  %3179 = vmatprep.subr.bf16.mxu0 0
  %3180 = vmatpush1.bf16.msra.mxu0 0
  %3181 = vmatprep.subr.bf16.mxu0 0
  %3182 = vmatpush1.bf16.msra.mxu0 %v3163
  %3183 = vmatprep.subr.bf16.mxu0 0
  %3184 = vmatpush1.bf16.msra.mxu0 %v3162
  %3185 = vmatprep.subr.bf16.mxu0 0
  %3186 = vmatpush2.bf16.msra.mxu0 0
  %3187 = vmatprep.subr.bf16.mxu0 0
  %3188 = vmatpush2.bf16.msra.mxu0 0
  %3189 = vmatprep.subr.bf16.mxu0 0
  %3190 = vmatpush2.bf16.msra.mxu0 0
  %3191 = vmatprep.subr.bf16.mxu0 0
  %3192 = vmatpush2.bf16.msra.mxu0 0
  %3193 = vmatprep.subr.bf16.mxu0 0
  %3194 = vmatpush2.bf16.msra.mxu0 0
  %3195 = vmatprep.subr.bf16.mxu0 0
  %3196 = vmatpush2.bf16.msra.mxu0 0
  %3197 = vmatprep.subr.bf16.mxu0 0
  %3198 = vmatpush2.bf16.msra.mxu0 0
  %3199 = vmatprep.subr.bf16.mxu0 0
  %3200 = vmatpush2.bf16.msra.mxu0 0
  %3201 = vmatprep.mubr.bf16.mxu0 0
  %3202 = vmatmul.mubr.bf16.gmra.mxu0 %v3167
  %v3203 = vpop.f32.mrf.mxu0
  %v3204 = vadd.f32 %v3153, %v3203
  %v3205 = vpop.f32.mrf.mxu0
  %v3206 = vpop.f32.mrf.mxu0
  %v3207 = vpop.f32.mrf.mxu0
  %3208 = vdwg.mxu0
  %v3209 = vtanh.pop %v3204
  %v3210 = vpack.c.bf16 %v3209, %v3209
  %v3211 = vld [vmem:[%s11] sm:$0xf]
  %v3212 = vld [vmem:[%s11 + $0x4] sm:$0xf]
  %v3213 = vld [vmem:[%s11 + $0x8] sm:$0xf]
  %v3214 = vld [vmem:[%s11 + $0xc] sm:$0xf]
  %v3215 = vld [vmem:[%s9 + $0xf] sm:$0x1]
  %s3217 = vtos %v3215
  %v3218 = vstv %s3217
  %v3224 = vunpack.c.l.b16 %v3211
  %v3225 = vunpack.c.l.b16 %v3212
  %v3226 = vunpack.c.l.b16 %v3213
  %v3227 = vunpack.c.l.b16 %v3214
  %v3228 = vpack.c.b16 %v3225, %v3224
  %v3229 = vpack.c.b16 %v3227, %v3226
  %v3233 = vsel %vm46, %v3210, 0
  %3235 = vmatprep.subr.bf16.mxu0 0
  %3236 = vmatpush1.bf16.msra.mxu0 0
  %3237 = vmatprep.subr.bf16.mxu0 0
  %3238 = vmatpush1.bf16.msra.mxu0 0
  %3239 = vmatprep.subr.bf16.mxu0 0
  %3240 = vmatpush1.bf16.msra.mxu0 0
  %3241 = vmatprep.subr.bf16.mxu0 0
  %3242 = vmatpush1.bf16.msra.mxu0 0
  %3243 = vmatprep.subr.bf16.mxu0 0
  %3244 = vmatpush1.bf16.msra.mxu0 0
  %3245 = vmatprep.subr.bf16.mxu0 0
  %3246 = vmatpush1.bf16.msra.mxu0 0
  %3247 = vmatprep.subr.bf16.mxu0 0
  %3248 = vmatpush1.bf16.msra.mxu0 %v3229
  %3249 = vmatprep.subr.bf16.mxu0 0
  %3250 = vmatpush1.bf16.msra.mxu0 %v3228
  %3251 = vmatprep.subr.bf16.mxu0 0
  %3252 = vmatpush2.bf16.msra.mxu0 0
  %3253 = vmatprep.subr.bf16.mxu0 0
  %3254 = vmatpush2.bf16.msra.mxu0 0
  %3255 = vmatprep.subr.bf16.mxu0 0
  %3256 = vmatpush2.bf16.msra.mxu0 0
  %3257 = vmatprep.subr.bf16.mxu0 0
  %3258 = vmatpush2.bf16.msra.mxu0 0
  %3259 = vmatprep.subr.bf16.mxu0 0
  %3260 = vmatpush2.bf16.msra.mxu0 0
  %3261 = vmatprep.subr.bf16.mxu0 0
  %3262 = vmatpush2.bf16.msra.mxu0 0
  %3263 = vmatprep.subr.bf16.mxu0 0
  %3264 = vmatpush2.bf16.msra.mxu0 0
  %3265 = vmatprep.subr.bf16.mxu0 0
  %3266 = vmatpush2.bf16.msra.mxu0 0
  %3267 = vmatprep.mubr.bf16.mxu0 0
  %3268 = vmatmul.mubr.bf16.gmra.mxu0 %v3233
  %v3269 = vpop.f32.mrf.mxu0
  %v3270 = vadd.f32 %v3218, %v3269
  %v3271 = vpop.f32.mrf.mxu0
  %v3272 = vpop.f32.mrf.mxu0
  %v3273 = vpop.f32.mrf.mxu0
  %3274 = vdwg.mxu0
  %3275 = vst [vmem:[%s12] sm:$0xff] %v3270
  // Predicated region
  $region50: #{custom_lf_forward.1} parent=0 // pred_check
    _
  $region51: #{custom_lf_forward.1} parent=0 // pred_check_branch
    %3277 = sbr.rel (0) target = $region53
  $region52: #{custom_lf_forward.1} parent=0 // pred_region
    _
  $region53: #{custom_lf_forward.1} parent=0 // pred_fallthru
    _
  // Predicated region
  $region54: #{custom_lf_forward.1} parent=0 // pred_check
    _
  $region55: #{custom_lf_forward.1} parent=0 // pred_check_branch
    %3279 = sbr.rel (0) target = $region57
  $region56: #{custom_lf_forward.1} parent=0 // pred_region
    _
  $region57: #{custom_lf_forward.1} parent=0 // pred_fallthru
    _

</llo_original>
